<compile_context>
chip_gen: v7x
topology: tpu7x:2x2x1
jax: 0.10.0
libtpu: 0.0.40
codegen_flags: <defaults>
</compile_context>

<pallas_src>
import functools

import jax
import jax.numpy as jnp
from jax import lax
from jax.experimental import pallas as pl
from jax.experimental.pallas import tpu as pltpu

EPS = 1e-5
LANE = 128


def _round_up(x, m):
    return (x + m - 1) // m * m


def _chip_vmem_bytes():
    """Physical VMEM per core; conservative 64 MiB (v7x) if the query fails."""
    try:
        info = pltpu.get_tpu_info()
        for name in ("vmem_capacity_bytes", "vmem_bytes"):
            v = getattr(info, name, None)
            if isinstance(v, int) and v > 0:
                return v
    except Exception:
        pass
    return 64 * 1024 * 1024


_VMEM_CAP = _chip_vmem_bytes()
if _VMEM_CAP >= 128 * 1024 * 1024:        # v5e / v6e: 128 MiB VMEM
    _VMEM_LIMIT = 100 * 1024 * 1024
    _WS_CAP = 64 * 1024 * 1024
else:                                      # v7x: 64 MiB per TensorCore
    _VMEM_LIMIT = 44 * 1024 * 1024
    _WS_CAP = 20 * 1024 * 1024


def _row_block(h, w, cp):
    """Largest row block (a divisor of h) whose pass-1 working set fits the budget."""
    def ws_bytes(th):
        xpad = (th + 2) * (w + 2) * cp * 2          # bf16 padded-tile scratch
        io = 2 * th * w * cp * (2 + 2)              # double-buffered bf16 x in + bf16 y out
        wgt = 9 * cp * cp * 2 + 16 * cp * 4         # resident weight + bias / stats blocks
        acc = 3 * th * w * cp * 4                   # f32 accumulator + temporaries
        return xpad + io + wgt + acc + (2 << 20)
    for th in range(h, 0, -1):
        if h % th == 0 and ws_bytes(th) <= _WS_CAP:
            return th
    return 1


def _pass2_rows(total, cp):
    """Row block for the flat affine+ReLU stream: big, lane-dense, divides total."""
    for tr in (8192, 4096, 2048, 1024, 512, 256, 128, 64, 32, 16, 8):
        if total % tr == 0 and 2 * tr * cp * (2 + 4) + (2 << 20) <= _WS_CAP:
            return tr
    return total


# --------------------------------------------------------------------------- #
# Pass 1: 3x3 conv + bias + per-tile BatchNorm partial statistics.
# --------------------------------------------------------------------------- #
def _conv_stats_kernel(xc_ref, xu_ref, xd_ref, w_ref, b_ref,   # inputs
                       y_ref, stats_ref,                        # outputs
                       xpad_ref,                                # VMEM scratch
                       *, th, ww, cp):
    r = pl.program_id(1)
    nr = pl.num_programs(1)
    cdt = xc_ref.dtype

    # ---- assemble the zero-padded (th+2, ww+2, cp) input tile in VMEM ------ #
    zcol = jnp.zeros((th + 2, 1, cp), cdt)
    xpad_ref[:, 0:1, :] = zcol                       # left conv padding
    xpad_ref[:, ww + 1:ww + 2, :] = zcol             # right conv padding
    xpad_ref[1:th + 1, 1:ww + 1, :] = xc_ref[0]      # body rows

    zrow = jnp.zeros((ww, cp), cdt)
    top = jnp.where(r > 0, xu_ref[0, 0], zrow)       # zero at the image border
    bot = jnp.where(r < nr - 1, xd_ref[0, 0], zrow)
    xpad_ref[0, 1:ww + 1, :] = top                   # top halo row
    xpad_ref[th + 1, 1:ww + 1, :] = bot              # bottom halo row

    # ---- 9 accumulating MXU matmuls straight from shifted views (no im2col) - #
    acc = None
    for k in range(9):
        dh, dw = divmod(k, 3)
        lhs = xpad_ref[dh:dh + th, dw:dw + ww, :].reshape(th * ww, cp)
        part = jnp.dot(lhs, w_ref[k], preferred_element_type=jnp.float32)
        acc = part if acc is None else acc + part    # chained f32 acc (MRB on v7x)

    # ---- partial BN statistics on the pre-bias activation (no cancellation) - #
    stats_ref[0, 0, 0:1, :] = jnp.sum(acc, axis=0, keepdims=True)
    stats_ref[0, 0, 1:2, :] = jnp.sum(acc * acc, axis=0, keepdims=True)

    # conv bias added in f32; intermediate stored as bf16 to halve HBM traffic
    y_ref[...] = (acc + b_ref[...]).reshape(1, th, ww, cp).astype(y_ref.dtype)


# --------------------------------------------------------------------------- #
# Pass 2: streaming per-channel affine (folded BN) + ReLU over a flat 2-D view.
# --------------------------------------------------------------------------- #
def _scale_shift_relu_kernel(y_ref, scale_ref, shift_ref, o_ref):
    y = y_ref[...].astype(jnp.float32)
    o_ref[...] = jnp.maximum(y * scale_ref[...] + shift_ref[...], 0.0
                             ).astype(o_ref.dtype)


# --------------------------------------------------------------------------- #
# Wrapper (matches the PyTorch module's NCHW interface).
# --------------------------------------------------------------------------- #
def identity_block(x, weight_oihw, bias, gamma, beta, *,
                   eps=EPS, compute_dtype=jnp.bfloat16, channels_last=False,
                   row_block=None):
    """conv3x3(pad=1) -> BatchNorm (training batch stats) -> ReLU.

    x           : (N, C, H, W) float32 (or NHWC when channels_last=True, which
                  skips the two wrapper transposes entirely)
    weight_oihw : (C, C, 3, 3)   PyTorch Conv2d weight layout
    bias/gamma/beta : (C,)
    """
    assert weight_oihw.shape[-2:] == (3, 3), "only kernel_size=3 (module default)"
    x_nhwc = x if channels_last else jnp.transpose(x, (0, 2, 3, 1))
    x_nhwc = x_nhwc.astype(jnp.float32)
    n, h, w, c = x_nhwc.shape
    apply_bn = (h > 1) or (w > 1)            # static, mirrors the PyTorch condition

    # Lane-dense channel padding (multiple of 128; module default C=128 is a no-op).
    cp = _round_up(c, LANE)
    padc = cp - c
    w_hwio = jnp.transpose(weight_oihw, (2, 3, 1, 0)).astype(jnp.float32)
    if padc:
        # TODO(synk): for tiny C (e.g. 8) the pad-to-128-lanes + NCHW<->NHWC
        # transposes dominate total HBM traffic; keep channels_last / C=128
        # end-to-end across blocks to avoid paying it per block.
        x_nhwc = jnp.pad(x_nhwc, ((0, 0), (0, 0), (0, 0), (0, padc)))
        w_hwio = jnp.pad(w_hwio, ((0, 0), (0, 0), (0, padc), (0, padc)))
        bias_p = jnp.pad(bias, (0, padc))
        gamma_p = jnp.pad(gamma, (0, padc))
        beta_p = jnp.pad(beta, (0, padc))
    else:
        bias_p, gamma_p, beta_p = bias, gamma, beta

    x_c = x_nhwc.astype(compute_dtype)                          # bf16 MXU inputs
    w3 = w_hwio.reshape(9, cp, cp).astype(compute_dtype)        # tap-major weight
    b2d = bias_p.reshape(1, cp).astype(jnp.float32)

    th = row_block if row_block is not None else _row_block(h, w, cp)
    assert h % th == 0, "row_block must divide H"
    nrb = h // th

    cparams2 = pltpu.CompilerParams(
        dimension_semantics=("parallel", "parallel"),           # megacore on v7x
        vmem_limit_bytes=_VMEM_LIMIT)

    kernel_a = functools.partial(_conv_stats_kernel, th=th, ww=w, cp=cp)
    y, stats = pl.pallas_call(
        kernel_a,
        out_shape=(jax.ShapeDtypeStruct((n, h, w, cp), compute_dtype),
                   jax.ShapeDtypeStruct((n, nrb, 2, cp), jnp.float32)),
        grid_spec=pltpu.PrefetchScalarGridSpec(
            num_scalar_prefetch=0,
            grid=(n, nrb),
            in_specs=[
                # body rows of the current row block
                pl.BlockSpec((1, th, w, cp), lambda i, r: (i, r, 0, 0)),
                # 1-row top halo (clamped at the border, masked in-kernel)
                pl.BlockSpec((1, 1, w, cp),
                             lambda i, r: (i, jnp.maximum(r * th - 1, 0), 0, 0)),
                # 1-row bottom halo
                pl.BlockSpec((1, 1, w, cp),
                             lambda i, r: (i, jnp.minimum((r + 1) * th, h - 1), 0, 0)),
                # conv weight / bias, resident across the whole grid
                pl.BlockSpec((9, cp, cp), lambda i, r: (0, 0, 0)),
                pl.BlockSpec((1, cp), lambda i, r: (0, 0)),
            ],
            out_specs=[
                pl.BlockSpec((1, th, w, cp), lambda i, r: (i, r, 0, 0)),
                pl.BlockSpec((1, 1, 2, cp), lambda i, r: (i, r, 0, 0)),
            ],
            scratch_shapes=[
                pltpu.VMEM((th + 2, w + 2, cp), compute_dtype),  # padded input tile
            ],
        ),
        compiler_params=cparams2,
    )(x_c, x_c, x_c, w3, b2d)

    # Tiny per-channel reduction of the tile partials -> exact batch statistics.
    totals = jnp.sum(stats, axis=(0, 1))                # (2, cp) f32
    if apply_bn:
        cnt = jnp.float32(n * h * w)
        mean0 = totals[0] / cnt                         # mean of the pre-bias conv
        var = jnp.maximum(totals[1] / cnt - mean0 * mean0, 0.0)  # biased, like BN training
        mean = mean0 + bias_p.astype(jnp.float32)
        inv = lax.rsqrt(var + eps)
        scale = gamma_p.astype(jnp.float32) * inv
        shift = beta_p.astype(jnp.float32) - mean * scale
    else:
        scale = jnp.ones((cp,), jnp.float32)
        shift = jnp.zeros((cp,), jnp.float32)

    # Pass 2: flat (N*H*W, C) stream with large lane-dense row blocks.
    total = n * h * w
    tr = _pass2_rows(total, cp)
    cparams1 = pltpu.CompilerParams(
        dimension_semantics=("parallel",), vmem_limit_bytes=_VMEM_LIMIT)
    out_flat = pl.pallas_call(
        _scale_shift_relu_kernel,
        out_shape=jax.ShapeDtypeStruct((total, cp), jnp.float32),
        grid_spec=pltpu.PrefetchScalarGridSpec(
            num_scalar_prefetch=0,
            grid=(total // tr,),
            in_specs=[
                pl.BlockSpec((tr, cp), lambda i: (i, 0)),
                pl.BlockSpec((1, cp), lambda i: (0, 0)),
                pl.BlockSpec((1, cp), lambda i: (0, 0)),
            ],
            out_specs=pl.BlockSpec((tr, cp), lambda i: (i, 0)),
        ),
        compiler_params=cparams1,
    )(y.reshape(total, cp), scale.reshape(1, cp), shift.reshape(1, cp))

    out_nhwc = out_flat.reshape(n, h, w, cp)
    if padc:
        out_nhwc = out_nhwc[..., :c]
    return out_nhwc if channels_last else jnp.transpose(out_nhwc, (0, 3, 1, 2))


# --------------------------------------------------------------------------- #
# Plain-JAX reference matching the PyTorch forward (training-mode BN).
# --------------------------------------------------------------------------- #
def identity_block_reference(x, weight_oihw, bias, gamma, beta, *,
                             eps=EPS, cast_inputs_to=None):
    xf = x.astype(jnp.float32)
    wf = jnp.transpose(weight_oihw, (2, 3, 1, 0)).astype(jnp.float32)
    if cast_inputs_to is not None:    # mimic the kernel's MXU-input rounding
        xf = xf.astype(cast_inputs_to).astype(jnp.float32)
        wf = wf.astype(cast_inputs_to).astype(jnp.float32)
    x_nhwc = jnp.transpose(xf, (0, 2, 3, 1))
    out = lax.conv_general_dilated(
        x_nhwc, wf, window_strides=(1, 1), padding=((1, 1), (1, 1)),
        dimension_numbers=("NHWC", "HWIO", "NHWC"),
        precision=lax.Precision.HIGHEST)
    out = out + bias.reshape(1, 1, 1, -1).astype(jnp.float32)
    _, hh, ww, _ = out.shape
    if hh > 1 or ww > 1:
        mean = jnp.mean(out, axis=(0, 1, 2), keepdims=True)
        var = jnp.mean((out - mean) ** 2, axis=(0, 1, 2), keepdims=True)
        out = (out - mean) * lax.rsqrt(var + eps) * gamma.reshape(1, 1, 1, -1) \
              + beta.reshape(1, 1, 1, -1)
    out = jnp.maximum(out, 0.0)
    return jnp.transpose(out, (0, 3, 1, 2))


def _check(n, c, h, w, key, row_block=None):
    kx, kw, kb, kg, kbt = jax.random.split(key, 5)
    x = jax.random.normal(kx, (n, c, h, w), jnp.float32)
    weight = jax.random.normal(kw, (c, c, 3, 3), jnp.float32) * 0.05
    bias = jax.random.normal(kb, (c,), jnp.float32) * 0.1
    gamma = 1.0 + 0.1 * jax.random.normal(kg, (c,), jnp.float32)
    beta = 0.1 * jax.random.normal(kbt, (c,), jnp.float32)

    out = jax.block_until_ready(
        identity_block(x, weight, bias, gamma, beta, row_block=row_block))
    assert out.shape == (n, c, h, w) and out.dtype == jnp.float32

    # (1) vs a bf16-input-consistent reference: the remaining delta is the bf16
    # rounding of the stored conv intermediate (<= ~1 bf16 ulp of y, ~1e-2 after
    # normalization at these scales) plus f32 summation-order noise.
    ref_bf16 = identity_block_reference(x, weight, bias, gamma, beta,
                                        cast_inputs_to=jnp.bfloat16)
    assert jnp.allclose(out, ref_bf16, rtol=2e-2, atol=2e-2), \
        f"mismatch vs bf16-consistent reference (C={c})"
    # (2) end-to-end fidelity vs the full-f32 reference (bf16-in / f32-acc MXU,
    # bf16 intermediate): loose elementwise bound + tight mean-error bound.
    ref_f32 = identity_block_reference(x, weight, bias, gamma, beta)
    assert jnp.allclose(out, ref_f32, rtol=5e-2, atol=5e-2), \
        f"mismatch vs f32 reference (C={c})"
    assert jnp.mean(jnp.abs(out - ref_f32)) < 5e-3, \
        f"systematic error vs f32 reference (C={c})"


if __name__ == "__main__":
    key = jax.random.PRNGKey(0)
    k1, k2 = jax.random.split(key)
    # Module default channel count (lane-dense C=128); row_block=8 forces a
    # (N, H/8) grid so the halo + per-tile stats-reduction paths are exercised.
    _check(2, 128, 16, 16, k1, row_block=8)
    # Small-C case exercising the pad-to-128-lanes path with the default
    # (auto-sized, generation-aware) row tiling.
    _check(2, 8, 16, 16, k2)
    print("KERNEL_OK")
</pallas_src>

<mosaic_0001>
module attributes {stable_mosaic.version = 11 : i64} {
  func.func @_conv_stats_kernel(%arg0: i32, %arg1: i32, %arg2: memref<1x8x16x128xbf16, #tpu.memory_space<vmem>>, %arg3: memref<1x1x16x128xbf16, #tpu.memory_space<vmem>>, %arg4: memref<1x1x16x128xbf16, #tpu.memory_space<vmem>>, %arg5: memref<9x128x128xbf16, #tpu.memory_space<vmem>>, %arg6: memref<1x128xf32, #tpu.memory_space<vmem>>, %arg7: memref<1x8x16x128xbf16, #tpu.memory_space<vmem>>, %arg8: memref<1x1x2x128xf32, #tpu.memory_space<vmem>>, %arg9: memref<10x18x128xbf16, #tpu.memory_space<vmem>>) attributes {dimension_semantics = [#tpu.dimension_semantics<parallel>, #tpu.dimension_semantics<parallel>], iteration_bounds = array<i64: 2, 2>, scalar_prefetch = 0 : i64, scratch_operands = 1 : i64, tpu.core_type = #tpu.core_type<tc>, window_params = [{transform_indices = @transform_0, window_bounds = array<i64: 1, 8, 16, 128>}, {transform_indices = @transform_1, window_bounds = array<i64: 1, 1, 16, 128>}, {transform_indices = @transform_2, window_bounds = array<i64: 1, 1, 16, 128>}, {pipeline_mode = #tpu.pipeline_mode<synchronous>, transform_indices = @transform_3, window_bounds = array<i64: 9, 128, 128>}, {pipeline_mode = #tpu.pipeline_mode<synchronous>, transform_indices = @transform_4, window_bounds = array<i64: 1, 128>}, {transform_indices = @transform_5, window_bounds = array<i64: 1, 8, 16, 128>}, {transform_indices = @transform_6, window_bounds = array<i64: 1, 1, 2, 128>}]} {
    %cst = arith.constant 0.000000e+00 : bf16
    %0 = vector.broadcast %cst : bf16 to vector<10x1x128xbf16>
    %c0 = arith.constant 0 : index
    %c0_0 = arith.constant 0 : index
    %c0_1 = arith.constant 0 : index
    %1 = vector.load %arg9[%c0, %c0_0, %c0_1] : memref<10x18x128xbf16, #tpu.memory_space<vmem>>, vector<10x1x128xbf16>
    tpu.vector_store %arg9[%c0, %c0_0, %c0_1], %0 {strides = array<i32>} : memref<10x18x128xbf16, #tpu.memory_space<vmem>>, vector<10x1x128xbf16>,
    %c0_2 = arith.constant 0 : index
    %c17 = arith.constant 17 : index
    %c0_3 = arith.constant 0 : index
    %2 = vector.load %arg9[%c0_2, %c17, %c0_3] : memref<10x18x128xbf16, #tpu.memory_space<vmem>>, vector<10x1x128xbf16>
    tpu.vector_store %arg9[%c0_2, %c17, %c0_3], %0 {strides = array<i32>} : memref<10x18x128xbf16, #tpu.memory_space<vmem>>, vector<10x1x128xbf16>,
    %c0_4 = arith.constant 0 : index
    %c0_5 = arith.constant 0 : index
    %c0_6 = arith.constant 0 : index
    %c0_7 = arith.constant 0 : index
    %3 = vector.load %arg2[%c0_4, %c0_5, %c0_6, %c0_7] : memref<1x8x16x128xbf16, #tpu.memory_space<vmem>>, vector<1x8x16x128xbf16>
    %4 = vector.shape_cast %3 : vector<1x8x16x128xbf16> to vector<8x16x128xbf16>
    %c1 = arith.constant 1 : index
    %c1_8 = arith.constant 1 : index
    %c0_9 = arith.constant 0 : index
    %5 = vector.load %arg9[%c1, %c1_8, %c0_9] : memref<10x18x128xbf16, #tpu.memory_space<vmem>>, vector<8x16x128xbf16>
    tpu.vector_store %arg9[%c1, %c1_8, %c0_9], %4 {strides = array<i32>} : memref<10x18x128xbf16, #tpu.memory_space<vmem>>, vector<8x16x128xbf16>,
    %cst_10 = arith.constant 0.000000e+00 : bf16
    %6 = vector.broadcast %cst_10 : bf16 to vector<16x128xbf16>
    %c0_i32 = arith.constant 0 : i32
    %7 = arith.cmpi sgt, %arg1, %c0_i32 : i32
    %c0_11 = arith.constant 0 : index
    %c0_12 = arith.constant 0 : index
    %c0_13 = arith.constant 0 : index
    %c0_14 = arith.constant 0 : index
    %8 = vector.load %arg3[%c0_11, %c0_12, %c0_13, %c0_14] : memref<1x1x16x128xbf16, #tpu.memory_space<vmem>>, vector<1x1x16x128xbf16>
    %9 = vector.shape_cast %8 : vector<1x1x16x128xbf16> to vector<16x128xbf16>
    %10 = arith.select %7, %9, %6 : vector<16x128xbf16>
    %c1_i32 = arith.constant 1 : i32
    %11 = arith.cmpi slt, %arg1, %c1_i32 : i32
    %c0_15 = arith.constant 0 : index
    %c0_16 = arith.constant 0 : index
    %c0_17 = arith.constant 0 : index
    %c0_18 = arith.constant 0 : index
    %12 = vector.load %arg4[%c0_15, %c0_16, %c0_17, %c0_18] : memref<1x1x16x128xbf16, #tpu.memory_space<vmem>>, vector<1x1x16x128xbf16>
    %13 = vector.shape_cast %12 : vector<1x1x16x128xbf16> to vector<16x128xbf16>
    %14 = arith.select %11, %13, %6 : vector<16x128xbf16>
    %c0_19 = arith.constant 0 : index
    %c1_20 = arith.constant 1 : index
    %c0_21 = arith.constant 0 : index
    %15 = vector.load %arg9[%c0_19, %c1_20, %c0_21] : memref<10x18x128xbf16, #tpu.memory_space<vmem>>, vector<1x16x128xbf16>
    %16 = vector.shape_cast %15 : vector<1x16x128xbf16> to vector<16x128xbf16>
    %17 = vector.shape_cast %10 : vector<16x128xbf16> to vector<1x16x128xbf16>
    tpu.vector_store %arg9[%c0_19, %c1_20, %c0_21], %17 {strides = array<i32>} : memref<10x18x128xbf16, #tpu.memory_space<vmem>>, vector<1x16x128xbf16>,
    %c9 = arith.constant 9 : index
    %c1_22 = arith.constant 1 : index
    %c0_23 = arith.constant 0 : index
    %18 = vector.load %arg9[%c9, %c1_22, %c0_23] : memref<10x18x128xbf16, #tpu.memory_space<vmem>>, vector<1x16x128xbf16>
    %19 = vector.shape_cast %18 : vector<1x16x128xbf16> to vector<16x128xbf16>
    %20 = vector.shape_cast %14 : vector<16x128xbf16> to vector<1x16x128xbf16>
    tpu.vector_store %arg9[%c9, %c1_22, %c0_23], %20 {strides = array<i32>} : memref<10x18x128xbf16, #tpu.memory_space<vmem>>, vector<1x16x128xbf16>,
    %c0_24 = arith.constant 0 : index
    %c0_25 = arith.constant 0 : index
    %c0_26 = arith.constant 0 : index
    %21 = vector.load %arg9[%c0_24, %c0_25, %c0_26] : memref<10x18x128xbf16, #tpu.memory_space<vmem>>, vector<8x16x128xbf16>
    %22 = vector.shape_cast %21 : vector<8x16x128xbf16> to vector<128x128xbf16>
    %c0_27 = arith.constant 0 : index
    %c0_28 = arith.constant 0 : index
    %c0_29 = arith.constant 0 : index
    %23 = vector.load %arg5[%c0_27, %c0_28, %c0_29] : memref<9x128x128xbf16, #tpu.memory_space<vmem>>, vector<1x128x128xbf16>
    %24 = vector.shape_cast %23 : vector<1x128x128xbf16> to vector<128x128xbf16>
    %cst_30 = arith.constant dense<0.000000e+00> : vector<128x128xf32>
    %25 = tpu.matmul %22, %24, %cst_30 {dimension_numbers = #tpu.dot_dimension_numbers<[1], [0], [0], [1], [0, 0, 1, 1], [], []>} : vector<128x128xbf16>, vector<128x128xbf16>, vector<128x128xf32> -> vector<128x128xf32>
    %c0_31 = arith.constant 0 : index
    %c1_32 = arith.constant 1 : index
    %c0_33 = arith.constant 0 : index
    %26 = vector.load %arg9[%c0_31, %c1_32, %c0_33] : memref<10x18x128xbf16, #tpu.memory_space<vmem>>, vector<8x16x128xbf16>
    %27 = vector.shape_cast %26 : vector<8x16x128xbf16> to vector<128x128xbf16>
    %c1_34 = arith.constant 1 : index
    %c0_35 = arith.constant 0 : index
    %c0_36 = arith.constant 0 : index
    %28 = vector.load %arg5[%c1_34, %c0_35, %c0_36] : memref<9x128x128xbf16, #tpu.memory_space<vmem>>, vector<1x128x128xbf16>
    %29 = vector.shape_cast %28 : vector<1x128x128xbf16> to vector<128x128xbf16>
    %cst_37 = arith.constant dense<0.000000e+00> : vector<128x128xf32>
    %30 = tpu.matmul %27, %29, %cst_37 {dimension_numbers = #tpu.dot_dimension_numbers<[1], [0], [0], [1], [0, 0, 1, 1], [], []>} : vector<128x128xbf16>, vector<128x128xbf16>, vector<128x128xf32> -> vector<128x128xf32>
    %31 = arith.addf %25, %30 : vector<128x128xf32>
    %c0_38 = arith.constant 0 : index
    %c2 = arith.constant 2 : index
    %c0_39 = arith.constant 0 : index
    %32 = vector.load %arg9[%c0_38, %c2, %c0_39] : memref<10x18x128xbf16, #tpu.memory_space<vmem>>, vector<8x16x128xbf16>
    %33 = vector.shape_cast %32 : vector<8x16x128xbf16> to vector<128x128xbf16>
    %c2_40 = arith.constant 2 : index
    %c0_41 = arith.constant 0 : index
    %c0_42 = arith.constant 0 : index
    %34 = vector.load %arg5[%c2_40, %c0_41, %c0_42] : memref<9x128x128xbf16, #tpu.memory_space<vmem>>, vector<1x128x128xbf16>
    %35 = vector.shape_cast %34 : vector<1x128x128xbf16> to vector<128x128xbf16>
    %cst_43 = arith.constant dense<0.000000e+00> : vector<128x128xf32>
    %36 = tpu.matmul %33, %35, %cst_43 {dimension_numbers = #tpu.dot_dimension_numbers<[1], [0], [0], [1], [0, 0, 1, 1], [], []>} : vector<128x128xbf16>, vector<128x128xbf16>, vector<128x128xf32> -> vector<128x128xf32>
    %37 = arith.addf %31, %36 : vector<128x128xf32>
    %c1_44 = arith.constant 1 : index
    %c0_45 = arith.constant 0 : index
    %c0_46 = arith.constant 0 : index
    %38 = vector.load %arg9[%c1_44, %c0_45, %c0_46] : memref<10x18x128xbf16, #tpu.memory_space<vmem>>, vector<8x16x128xbf16>
    %39 = vector.shape_cast %38 : vector<8x16x128xbf16> to vector<128x128xbf16>
    %c3 = arith.constant 3 : index
    %c0_47 = arith.constant 0 : index
    %c0_48 = arith.constant 0 : index
    %40 = vector.load %arg5[%c3, %c0_47, %c0_48] : memref<9x128x128xbf16, #tpu.memory_space<vmem>>, vector<1x128x128xbf16>
    %41 = vector.shape_cast %40 : vector<1x128x128xbf16> to vector<128x128xbf16>
    %cst_49 = arith.constant dense<0.000000e+00> : vector<128x128xf32>
    %42 = tpu.matmul %39, %41, %cst_49 {dimension_numbers = #tpu.dot_dimension_numbers<[1], [0], [0], [1], [0, 0, 1, 1], [], []>} : vector<128x128xbf16>, vector<128x128xbf16>, vector<128x128xf32> -> vector<128x128xf32>
    %43 = arith.addf %37, %42 : vector<128x128xf32>
    %c1_50 = arith.constant 1 : index
    %c1_51 = arith.constant 1 : index
    %c0_52 = arith.constant 0 : index
    %44 = vector.load %arg9[%c1_50, %c1_51, %c0_52] : memref<10x18x128xbf16, #tpu.memory_space<vmem>>, vector<8x16x128xbf16>
    %45 = vector.shape_cast %44 : vector<8x16x128xbf16> to vector<128x128xbf16>
    %c4 = arith.constant 4 : index
    %c0_53 = arith.constant 0 : index
    %c0_54 = arith.constant 0 : index
    %46 = vector.load %arg5[%c4, %c0_53, %c0_54] : memref<9x128x128xbf16, #tpu.memory_space<vmem>>, vector<1x128x128xbf16>
    %47 = vector.shape_cast %46 : vector<1x128x128xbf16> to vector<128x128xbf16>
    %cst_55 = arith.constant dense<0.000000e+00> : vector<128x128xf32>
    %48 = tpu.matmul %45, %47, %cst_55 {dimension_numbers = #tpu.dot_dimension_numbers<[1], [0], [0], [1], [0, 0, 1, 1], [], []>} : vector<128x128xbf16>, vector<128x128xbf16>, vector<128x128xf32> -> vector<128x128xf32>
    %49 = arith.addf %43, %48 : vector<128x128xf32>
    %c1_56 = arith.constant 1 : index
    %c2_57 = arith.constant 2 : index
    %c0_58 = arith.constant 0 : index
    %50 = vector.load %arg9[%c1_56, %c2_57, %c0_58] : memref<10x18x128xbf16, #tpu.memory_space<vmem>>, vector<8x16x128xbf16>
    %51 = vector.shape_cast %50 : vector<8x16x128xbf16> to vector<128x128xbf16>
    %c5 = arith.constant 5 : index
    %c0_59 = arith.constant 0 : index
    %c0_60 = arith.constant 0 : index
    %52 = vector.load %arg5[%c5, %c0_59, %c0_60] : memref<9x128x128xbf16, #tpu.memory_space<vmem>>, vector<1x128x128xbf16>
    %53 = vector.shape_cast %52 : vector<1x128x128xbf16> to vector<128x128xbf16>
    %cst_61 = arith.constant dense<0.000000e+00> : vector<128x128xf32>
    %54 = tpu.matmul %51, %53, %cst_61 {dimension_numbers = #tpu.dot_dimension_numbers<[1], [0], [0], [1], [0, 0, 1, 1], [], []>} : vector<128x128xbf16>, vector<128x128xbf16>, vector<128x128xf32> -> vector<128x128xf32>
    %55 = arith.addf %49, %54 : vector<128x128xf32>
    %c2_62 = arith.constant 2 : index
    %c0_63 = arith.constant 0 : index
    %c0_64 = arith.constant 0 : index
    %56 = vector.load %arg9[%c2_62, %c0_63, %c0_64] : memref<10x18x128xbf16, #tpu.memory_space<vmem>>, vector<8x16x128xbf16>
    %57 = vector.shape_cast %56 : vector<8x16x128xbf16> to vector<128x128xbf16>
    %c6 = arith.constant 6 : index
    %c0_65 = arith.constant 0 : index
    %c0_66 = arith.constant 0 : index
    %58 = vector.load %arg5[%c6, %c0_65, %c0_66] : memref<9x128x128xbf16, #tpu.memory_space<vmem>>, vector<1x128x128xbf16>
    %59 = vector.shape_cast %58 : vector<1x128x128xbf16> to vector<128x128xbf16>
    %cst_67 = arith.constant dense<0.000000e+00> : vector<128x128xf32>
    %60 = tpu.matmul %57, %59, %cst_67 {dimension_numbers = #tpu.dot_dimension_numbers<[1], [0], [0], [1], [0, 0, 1, 1], [], []>} : vector<128x128xbf16>, vector<128x128xbf16>, vector<128x128xf32> -> vector<128x128xf32>
    %61 = arith.addf %55, %60 : vector<128x128xf32>
    %c2_68 = arith.constant 2 : index
    %c1_69 = arith.constant 1 : index
    %c0_70 = arith.constant 0 : index
    %62 = vector.load %arg9[%c2_68, %c1_69, %c0_70] : memref<10x18x128xbf16, #tpu.memory_space<vmem>>, vector<8x16x128xbf16>
    %63 = vector.shape_cast %62 : vector<8x16x128xbf16> to vector<128x128xbf16>
    %c7 = arith.constant 7 : index
    %c0_71 = arith.constant 0 : index
    %c0_72 = arith.constant 0 : index
    %64 = vector.load %arg5[%c7, %c0_71, %c0_72] : memref<9x128x128xbf16, #tpu.memory_space<vmem>>, vector<1x128x128xbf16>
    %65 = vector.shape_cast %64 : vector<1x128x128xbf16> to vector<128x128xbf16>
    %cst_73 = arith.constant dense<0.000000e+00> : vector<128x128xf32>
    %66 = tpu.matmul %63, %65, %cst_73 {dimension_numbers = #tpu.dot_dimension_numbers<[1], [0], [0], [1], [0, 0, 1, 1], [], []>} : vector<128x128xbf16>, vector<128x128xbf16>, vector<128x128xf32> -> vector<128x128xf32>
    %67 = arith.addf %61, %66 : vector<128x128xf32>
    %c2_74 = arith.constant 2 : index
    %c2_75 = arith.constant 2 : index
    %c0_76 = arith.constant 0 : index
    %68 = vector.load %arg9[%c2_74, %c2_75, %c0_76] : memref<10x18x128xbf16, #tpu.memory_space<vmem>>, vector<8x16x128xbf16>
    %69 = vector.shape_cast %68 : vector<8x16x128xbf16> to vector<128x128xbf16>
    %c8 = arith.constant 8 : index
    %c0_77 = arith.constant 0 : index
    %c0_78 = arith.constant 0 : index
    %70 = vector.load %arg5[%c8, %c0_77, %c0_78] : memref<9x128x128xbf16, #tpu.memory_space<vmem>>, vector<1x128x128xbf16>
    %71 = vector.shape_cast %70 : vector<1x128x128xbf16> to vector<128x128xbf16>
    %cst_79 = arith.constant dense<0.000000e+00> : vector<128x128xf32>
    %72 = tpu.matmul %69, %71, %cst_79 {dimension_numbers = #tpu.dot_dimension_numbers<[1], [0], [0], [1], [0, 0, 1, 1], [], []>} : vector<128x128xbf16>, vector<128x128xbf16>, vector<128x128xf32> -> vector<128x128xf32>
    %73 = arith.addf %67, %72 : vector<128x128xf32>
    %cst_80 = arith.constant dense<0.000000e+00> : vector<128xf32>
    %74 = vector.multi_reduction <add>, %73, %cst_80 [0] : vector<128x128xf32> to vector<128xf32>
    %75 = vector.shape_cast %74 : vector<128xf32> to vector<1x128xf32>
    %c0_81 = arith.constant 0 : index
    %c0_82 = arith.constant 0 : index
    %c0_83 = arith.constant 0 : index
    %c0_84 = arith.constant 0 : index
    %76 = vector.load %arg8[%c0_81, %c0_82, %c0_83, %c0_84] : memref<1x1x2x128xf32, #tpu.memory_space<vmem>>, vector<1x1x1x128xf32>
    %77 = vector.shape_cast %76 : vector<1x1x1x128xf32> to vector<1x128xf32>
    %78 = vector.shape_cast %75 : vector<1x128xf32> to vector<1x1x1x128xf32>
    tpu.vector_store %arg8[%c0_81, %c0_82, %c0_83, %c0_84], %78 {strides = array<i32>} : memref<1x1x2x128xf32, #tpu.memory_space<vmem>>, vector<1x1x1x128xf32>,
    %79 = arith.mulf %73, %73 : vector<128x128xf32>
    %cst_85 = arith.constant dense<0.000000e+00> : vector<128xf32>
    %80 = vector.multi_reduction <add>, %79, %cst_85 [0] : vector<128x128xf32> to vector<128xf32>
    %81 = vector.shape_cast %80 : vector<128xf32> to vector<1x128xf32>
    %c0_86 = arith.constant 0 : index
    %c0_87 = arith.constant 0 : index
    %c1_88 = arith.constant 1 : index
    %c0_89 = arith.constant 0 : index
    %82 = vector.load %arg8[%c0_86, %c0_87, %c1_88, %c0_89] : memref<1x1x2x128xf32, #tpu.memory_space<vmem>>, vector<1x1x1x128xf32>
    %83 = vector.shape_cast %82 : vector<1x1x1x128xf32> to vector<1x128xf32>
    %84 = vector.shape_cast %81 : vector<1x128xf32> to vector<1x1x1x128xf32>
    tpu.vector_store %arg8[%c0_86, %c0_87, %c1_88, %c0_89], %84 {strides = array<i32>} : memref<1x1x2x128xf32, #tpu.memory_space<vmem>>, vector<1x1x1x128xf32>,
    %c0_90 = arith.constant 0 : index
    %c0_91 = arith.constant 0 : index
    %85 = vector.load %arg6[%c0_90, %c0_91] : memref<1x128xf32, #tpu.memory_space<vmem>>, vector<1x128xf32>
    %86 = vector.broadcast %85 : vector<1x128xf32> to vector<128x128xf32>
    %87 = arith.addf %73, %86 : vector<128x128xf32>
    %88 = vector.shape_cast %87 : vector<128x128xf32> to vector<1x8x16x128xf32>
    %89 = arith.truncf %88 : vector<1x8x16x128xf32> to vector<1x8x16x128xbf16>
    %c0_92 = arith.constant 0 : index
    %c0_93 = arith.constant 0 : index
    %c0_94 = arith.constant 0 : index
    %c0_95 = arith.constant 0 : index
    %90 = vector.load %arg7[%c0_92, %c0_93, %c0_94, %c0_95] : memref<1x8x16x128xbf16, #tpu.memory_space<vmem>>, vector<1x8x16x128xbf16>
    tpu.vector_store %arg7[%c0_92, %c0_93, %c0_94, %c0_95], %89 {strides = array<i32>} : memref<1x8x16x128xbf16, #tpu.memory_space<vmem>>, vector<1x8x16x128xbf16>,
    return
  }
  func.func @transform_0(%arg0: i32, %arg1: i32) -> (i32, i32, i32, i32) {
    %c0_i32 = arith.constant 0 : i32
    %c0_i32_0 = arith.constant 0 : i32
    %c0_i32_1 = arith.constant 0 : i32
    return %arg0, %arg1, %c0_i32, %c0_i32_0 : i32, i32, i32, i32
  }
  func.func @transform_1(%arg0: i32, %arg1: i32) -> (i32, i32, i32, i32) {
    %c8_i32 = arith.constant 8 : i32
    %0 = arith.muli %arg1, %c8_i32 : i32
    %c1_i32 = arith.constant 1 : i32
    %1 = arith.subi %0, %c1_i32 : i32
    %c0_i32 = arith.constant 0 : i32
    %2 = arith.maxsi %1, %c0_i32 : i32
    %c0_i32_0 = arith.constant 0 : i32
    %c0_i32_1 = arith.constant 0 : i32
    %c0_i32_2 = arith.constant 0 : i32
    return %arg0, %2, %c0_i32_0, %c0_i32_1 : i32, i32, i32, i32
  }
  func.func @transform_2(%arg0: i32, %arg1: i32) -> (i32, i32, i32, i32) {
    %c1_i32 = arith.constant 1 : i32
    %0 = arith.addi %arg1, %c1_i32 : i32
    %c8_i32 = arith.constant 8 : i32
    %1 = arith.muli %0, %c8_i32 : i32
    %c15_i32 = arith.constant 15 : i32
    %2 = arith.minsi %1, %c15_i32 : i32
    %c0_i32 = arith.constant 0 : i32
    %c0_i32_0 = arith.constant 0 : i32
    %c0_i32_1 = arith.constant 0 : i32
    return %arg0, %2, %c0_i32, %c0_i32_0 : i32, i32, i32, i32
  }
  func.func @transform_3(%arg0: i32, %arg1: i32) -> (i32, i32, i32) {
    %c0_i32 = arith.constant 0 : i32
    %c0_i32_0 = arith.constant 0 : i32
    %c0_i32_1 = arith.constant 0 : i32
    %c0_i32_2 = arith.constant 0 : i32
    return %c0_i32, %c0_i32_0, %c0_i32_1 : i32, i32, i32
  }
  func.func @transform_4(%arg0: i32, %arg1: i32) -> (i32, i32) {
    %c0_i32 = arith.constant 0 : i32
    %c0_i32_0 = arith.constant 0 : i32
    %c0_i32_1 = arith.constant 0 : i32
    return %c0_i32, %c0_i32_0 : i32, i32
  }
  func.func @transform_5(%arg0: i32, %arg1: i32) -> (i32, i32, i32, i32) {
    %c0_i32 = arith.constant 0 : i32
    %c0_i32_0 = arith.constant 0 : i32
    %c0_i32_1 = arith.constant 0 : i32
    return %arg0, %arg1, %c0_i32, %c0_i32_0 : i32, i32, i32, i32
  }
  func.func @transform_6(%arg0: i32, %arg1: i32) -> (i32, i32, i32, i32) {
    %c0_i32 = arith.constant 0 : i32
    %c0_i32_0 = arith.constant 0 : i32
    %c0_i32_1 = arith.constant 0 : i32
    return %arg0, %arg1, %c0_i32, %c0_i32_0 : i32, i32, i32, i32
  }
}

</mosaic_0001>

<llo_original>
// kernel: tpu_custom_call.1
$region0: #{tpu_custom_call.1}
  #allocation0 [shape = 'u32[]', space=smem, size = 0x4, offset = 0x4, fixed_abs, tag = 'smem constant byte address 0x4 - core index']
  #allocation1 [shape = 'u32[144,128]{1,0:T(1,128)}', space=vmem, size = 0x12000, scoped, tag = 'internal scratch']
  #allocation2 [shape = 'bf16[10,18,128]{2,1,0:T(8,128)(2,1)}', space=vmem, size = 0xf000, scoped, tag = 'scratch operand']
  %s0 = inlined_call_operand.hbm [shape: bf16[2,16,16,128], index: 0, kind: input, shape index: {}]
  %s1 = inlined_call_operand.hbm [shape: bf16[2,16,16,128], index: 1, kind: input, shape index: {}]
  %s2 = inlined_call_operand.hbm [shape: bf16[2,16,16,128], index: 2, kind: input, shape index: {}]
  %s3 = inlined_call_operand.hbm [shape: bf16[9,128,128], index: 3, kind: input, shape index: {}]
  %s4 = inlined_call_operand.vmem [shape: f32[1,128], index: 4, kind: input, shape index: {}]
  %s5 = inlined_call_operand.hbm [shape: bf16[2,16,16,128], index: 5, kind: output, shape index: {0}]
  %s6 = inlined_call_operand.hbm [shape: f32[2,2,2,128], index: 6, kind: output, shape index: {1}]
  %7 = xla_tuple %s5, %s6
  %s8 = sld [smem:[#allocation0]]
  $region77: #{tpu_custom_call.1} parent=0
    _
  %s10 = ssub.s32 1, %s8
  %s11 = scalar_select 0, %s10, %s8
  $region1: #{tpu_custom_call.1} parent=0
    #allocation3 [shape = 'u8[65536]{0}', space=vmem, size = 0x10000, scoped, tag = 'input window, operand 0']
    #allocation4 [shape = 's32[2]{0}', space=sflag, size = 0x8, scoped, tag = 'scoped memory for tpu_custom_call.1']
    #allocation5 [shape = 's32[2]{0}', space=sflag, size = 0x8, scoped, tag = 'scoped memory for tpu_custom_call.1']
    #allocation6 [shape = 'u8[8192]{0}', space=vmem, size = 0x2000, scoped, tag = 'input window, operand 1']
    #allocation7 [shape = 's32[2]{0}', space=sflag, size = 0x8, scoped, tag = 'scoped memory for tpu_custom_call.1']
    #allocation8 [shape = 'u8[8192]{0}', space=vmem, size = 0x2000, scoped, tag = 'input window, operand 2']
    #allocation9 [shape = 'u8[294912]{0}', space=vmem, size = 0x48000, scoped, tag = 'input window, operand 3, single buffered']
    #allocation10 [shape = 's32[1]{0}', space=sflag, size = 0x4, scoped, tag = 'scoped memory for tpu_custom_call.1']
    #allocation11 [shape = 'u8[65536]{0}', space=vmem, size = 0x10000, scoped, tag = 'output window, operand 0']
    #allocation12 [shape = 'u8[2048]{0}', space=vmem, size = 0x800, scoped, tag = 'output window, operand 1']
    #allocation13 [shape = 's32[2]{0}', space=sflag, size = 0x8, scoped, tag = 'scoped memory for tpu_custom_call.1']
    %12 = vsyncpa [#allocation4], 0
    %s13 = scalar_lea.sflag [#allocation4], 1
    %14 = vsyncpa %s13, 0
    %15 = vsyncpa [#allocation7], 0
    %s16 = scalar_lea.sflag [#allocation7], 1
    %17 = vsyncpa %s16, 0
    %18 = vsyncpa [#allocation10], 0
    %19 = vsyncpa [#allocation5], 0
    %s20 = scalar_lea.sflag [#allocation5], 1
    %21 = vsyncpa %s20, 0
    %22 = vsyncpa [#allocation13], 0
    %s23 = scalar_lea.sflag [#allocation13], 1
    %24 = vsyncpa %s23, 0
    loop: start=0, step=1, limit=6
    $region2: #{tpu_custom_call.1} parent=1 // loop_pre_header
      _
    $region3: #{tpu_custom_call.1} parent=1 // loop_header
      %s26 = sphi 0, %s30
      %p27 = scmp.ge.s32.totalorder %s26, 6
      %s33 = sphi 0, %s45
      %s34 = sphi 0, %s41
      %s35 = sphi 0, %s33
      %s36 = sphi 0, %s34
      %s37 = sphi 0, %s35
      %s38 = sphi 0, %s36
      %s50 = sphi 0, %s52
      %s53 = sphi 0, %s50
      %s54 = sphi 0, %s53
      %s70 = sphi 0, %s54
      %s86 = sphi 0, %s88
      %s89 = sphi 0, %s86
      %s90 = sphi 0, %s89
      %s106 = sphi 0, %s90
      %s122 = sphi 0, %s124
      %s125 = sphi 0, %s122
      %s126 = sphi 0, %s125
      %s142 = sphi 0, %s126
      %s146 = sphi 0, %s146
      %s148 = sphi 0, %s146
      %s149 = sphi 0, %s148
      %s163 = sphi 0, %s149
      %s167 = sphi 0, %s167
      %s169 = sphi 0, %s167
      %s170 = sphi 0, %s169
      %s184 = sphi 0, %s170
      %s192 = sphi 0, %s194
      %s195 = sphi 0, %s192
      %s196 = sphi 0, %s195
      %s212 = sphi 0, %s196
      %s220 = sphi 0, %s222
      %s223 = sphi 0, %s220
      %s224 = sphi 0, %s223
      %s240 = sphi 0, %s224
    $region4: #{tpu_custom_call.1} parent=1 // loop_header_branch
      %29 = sbr.rel (%p27) target = $region8
    $region5: #{tpu_custom_call.1} parent=1 // loop_body
      %s31 = ssub.s32 %s26, 1
      %s32 = ssub.s32 %s26, 2
      %s39 = sadd.s32 1, %s34
      %p40 = scmp.ge.s32.totalorder %s39, 2
      %s41 = scalar_select %p40, 0, %s39
      %s42 = sadd.s32 1, %s33
      %s43 = scalar_select %p40, %s42, %s33
      %p44 = scmp.ge.s32.totalorder %s43, 2
      %s45 = scalar_select %p44, 0, %s43
      %s46 = ssub.s32 %s33, %s45
      %s47 = ssub.s32 %s34, %s41
      %s48 = sor.u32 %s46, %s47
      %p49 = scmp.eq.s32.totalorder %s48, 0
      %s51 = sadd.s32 %s50, 1
      %s52 = scalar_select %p49, %s50, %s51
      %p55 = pneg %p49
      %p56 = scmp.eq.s32.totalorder %s26, 3
      %p57 = por %p55, %p56
      %p58 = scmp.ne.s32.totalorder %s50, %s53
      %p59 = scmp.eq.s32.totalorder %s26, 0
      %p60 = por %p58, %p59
      %p61 = scmp.ne.s32.totalorder %s50, %s53
      %p62 = scmp.eq.s32.totalorder %s31, 3
      %p63 = por %p61, %p62
      %p64 = scmp.ne.s32.totalorder %s53, %s54
      %p65 = scmp.eq.s32.totalorder %s31, 0
      %p66 = por %p64, %p65
      %p67 = scmp.ne.s32.totalorder %s53, %s54
      %p68 = scmp.eq.s32.totalorder %s32, 3
      %p69 = por %p67, %p68
      %p71 = scmp.ne.s32.totalorder %s54, %s70
      %p72 = scmp.eq.s32.totalorder %s32, 0
      %p73 = por %p71, %p72
      %s74 = smul.u32 %s34, 8
      %s75 = ssub.s32 %s74, 1
      %p76 = scmp.gt.s32.totalorder %s75, 0
      %s77 = scalar_select %p76, %s75, 0
      %s78 = smul.u32 %s41, 8
      %s79 = ssub.s32 %s78, 1
      %p80 = scmp.gt.s32.totalorder %s79, 0
      %s81 = scalar_select %p80, %s79, 0
      %s82 = ssub.s32 %s33, %s45
      %s83 = ssub.s32 %s77, %s81
      %s84 = sor.u32 %s82, %s83
      %p85 = scmp.eq.s32.totalorder %s84, 0
      %s87 = sadd.s32 %s86, 1
      %s88 = scalar_select %p85, %s86, %s87
      %p91 = pneg %p85
      %p92 = scmp.eq.s32.totalorder %s26, 3
      %p93 = por %p91, %p92
      %p94 = scmp.ne.s32.totalorder %s86, %s89
      %p95 = scmp.eq.s32.totalorder %s26, 0
      %p96 = por %p94, %p95
      %p97 = scmp.ne.s32.totalorder %s86, %s89
      %p98 = scmp.eq.s32.totalorder %s31, 3
      %p99 = por %p97, %p98
      %p100 = scmp.ne.s32.totalorder %s89, %s90
      %p101 = scmp.eq.s32.totalorder %s31, 0
      %p102 = por %p100, %p101
      %p103 = scmp.ne.s32.totalorder %s89, %s90
      %p104 = scmp.eq.s32.totalorder %s32, 3
      %p105 = por %p103, %p104
      %p107 = scmp.ne.s32.totalorder %s90, %s106
      %p108 = scmp.eq.s32.totalorder %s32, 0
      %p109 = por %p107, %p108
      %s110 = sadd.s32 %s34, 1
      %s111 = smul.u32 %s110, 8
      %p112 = scmp.lt.s32.totalorder %s111, 15
      %s113 = scalar_select %p112, %s111, 15
      %s114 = sadd.s32 %s41, 1
      %s115 = smul.u32 %s114, 8
      %p116 = scmp.lt.s32.totalorder %s115, 15
      %s117 = scalar_select %p116, %s115, 15
      %s118 = ssub.s32 %s33, %s45
      %s119 = ssub.s32 %s113, %s117
      %s120 = sor.u32 %s118, %s119
      %p121 = scmp.eq.s32.totalorder %s120, 0
      %s123 = sadd.s32 %s122, 1
      %s124 = scalar_select %p121, %s122, %s123
      %p127 = pneg %p121
      %p128 = scmp.eq.s32.totalorder %s26, 3
      %p129 = por %p127, %p128
      %p130 = scmp.ne.s32.totalorder %s122, %s125
      %p131 = scmp.eq.s32.totalorder %s26, 0
      %p132 = por %p130, %p131
      %p133 = scmp.ne.s32.totalorder %s122, %s125
      %p134 = scmp.eq.s32.totalorder %s31, 3
      %p135 = por %p133, %p134
      %p136 = scmp.ne.s32.totalorder %s125, %s126
      %p137 = scmp.eq.s32.totalorder %s31, 0
      %p138 = por %p136, %p137
      %p139 = scmp.ne.s32.totalorder %s125, %s126
      %p140 = scmp.eq.s32.totalorder %s32, 3
      %p141 = por %p139, %p140
      %p143 = scmp.ne.s32.totalorder %s126, %s142
      %p144 = scmp.eq.s32.totalorder %s32, 0
      %p145 = por %p143, %p144
      %s147 = sadd.s32 %s146, 1
      %p150 = scmp.eq.s32.totalorder %s26, 3
      %p151 = scmp.ne.s32.totalorder %s146, %s148
      %p152 = scmp.eq.s32.totalorder %s26, 0
      %p153 = por %p151, %p152
      %p154 = scmp.ne.s32.totalorder %s146, %s148
      %p155 = scmp.eq.s32.totalorder %s31, 3
      %p156 = por %p154, %p155
      %p157 = scmp.ne.s32.totalorder %s148, %s149
      %p158 = scmp.eq.s32.totalorder %s31, 0
      %p159 = por %p157, %p158
      %p160 = scmp.ne.s32.totalorder %s148, %s149
      %p161 = scmp.eq.s32.totalorder %s32, 3
      %p162 = por %p160, %p161
      %p164 = scmp.ne.s32.totalorder %s149, %s163
      %p165 = scmp.eq.s32.totalorder %s32, 0
      %p166 = por %p164, %p165
      %s168 = sadd.s32 %s167, 1
      %p171 = scmp.eq.s32.totalorder %s26, 3
      %p172 = scmp.ne.s32.totalorder %s167, %s169
      %p173 = scmp.eq.s32.totalorder %s26, 0
      %p174 = por %p172, %p173
      %p175 = scmp.ne.s32.totalorder %s167, %s169
      %p176 = scmp.eq.s32.totalorder %s31, 3
      %p177 = por %p175, %p176
      %p178 = scmp.ne.s32.totalorder %s169, %s170
      %p179 = scmp.eq.s32.totalorder %s31, 0
      %p180 = por %p178, %p179
      %p181 = scmp.ne.s32.totalorder %s169, %s170
      %p182 = scmp.eq.s32.totalorder %s32, 3
      %p183 = por %p181, %p182
      %p185 = scmp.ne.s32.totalorder %s170, %s184
      %p186 = scmp.eq.s32.totalorder %s32, 0
      %p187 = por %p185, %p186
      %s188 = ssub.s32 %s33, %s45
      %s189 = ssub.s32 %s34, %s41
      %s190 = sor.u32 %s188, %s189
      %p191 = scmp.eq.s32.totalorder %s190, 0
      %s193 = sadd.s32 %s192, 1
      %s194 = scalar_select %p191, %s192, %s193
      %p197 = pneg %p191
      %p198 = scmp.eq.s32.totalorder %s26, 3
      %p199 = por %p197, %p198
      %p200 = scmp.ne.s32.totalorder %s192, %s195
      %p201 = scmp.eq.s32.totalorder %s26, 0
      %p202 = por %p200, %p201
      %p203 = scmp.ne.s32.totalorder %s192, %s195
      %p204 = scmp.eq.s32.totalorder %s31, 3
      %p205 = por %p203, %p204
      %p206 = scmp.ne.s32.totalorder %s195, %s196
      %p207 = scmp.eq.s32.totalorder %s31, 0
      %p208 = por %p206, %p207
      %p209 = scmp.ne.s32.totalorder %s195, %s196
      %p210 = scmp.eq.s32.totalorder %s32, 3
      %p211 = por %p209, %p210
      %p213 = scmp.ne.s32.totalorder %s196, %s212
      %p214 = scmp.eq.s32.totalorder %s32, 0
      %p215 = por %p213, %p214
      %s216 = ssub.s32 %s33, %s45
      %s217 = ssub.s32 %s34, %s41
      %s218 = sor.u32 %s216, %s217
      %p219 = scmp.eq.s32.totalorder %s218, 0
      %s221 = sadd.s32 %s220, 1
      %s222 = scalar_select %p219, %s220, %s221
      %p225 = pneg %p219
      %p226 = scmp.eq.s32.totalorder %s26, 3
      %p227 = por %p225, %p226
      %p228 = scmp.ne.s32.totalorder %s220, %s223
      %p229 = scmp.eq.s32.totalorder %s26, 0
      %p230 = por %p228, %p229
      %p231 = scmp.ne.s32.totalorder %s220, %s223
      %p232 = scmp.eq.s32.totalorder %s31, 3
      %p233 = por %p231, %p232
      %p234 = scmp.ne.s32.totalorder %s223, %s224
      %p235 = scmp.eq.s32.totalorder %s31, 0
      %p236 = por %p234, %p235
      %p237 = scmp.ne.s32.totalorder %s223, %s224
      %p238 = scmp.eq.s32.totalorder %s32, 3
      %p239 = por %p237, %p238
      %p241 = scmp.ne.s32.totalorder %s224, %s240
      %p242 = scmp.eq.s32.totalorder %s32, 0
      %p243 = por %p241, %p242
      %p244 = scmp.le.s32.totalorder 1, %s26
      %p245 = scmp.lt.s32.totalorder %s26, 5
      %p246 = pnand %p244, %p245
      %p247 = pneg %p246
      // Predicated region
      $region9: #{tpu_custom_call.1} parent=5 // pred_check
        _
      $region10: #{tpu_custom_call.1} parent=5 // pred_check_branch
        %249 = sbr.rel (%p246) target = $region12
      $region11: #{tpu_custom_call.1} parent=5 // pred_region
        %s250 = ssub.s32 %s26, 1
        // Predicated region
        $region13: #{tpu_custom_call.1} parent=11 // pred_check
          %p251 = pneg %p159
        $region14: #{tpu_custom_call.1} parent=11 // pred_check_branch
          %253 = sbr.rel (%p251) target = $region16
        $region15: #{tpu_custom_call.1} parent=11 // pred_region
          %s255 = ssub.s32 9216, 9216
          %256 = vsyncadd [#allocation10], %s255
          %s257 = sshll.u32 [#allocation9], 4
          %s258 = int_to_ptr.vmem [resolvable:$true] %s257
          %263 = dma.hbm_to_vmem [thread:$0]  %s3, 9216, %s258, [#allocation10], 64, 64, 4
        $region16: #{tpu_custom_call.1} parent=11 // pred_fallthru
          _
        // Predicated region
        $region17: #{tpu_custom_call.1} parent=11 // pred_check
          %p264 = pneg %p180
        $region18: #{tpu_custom_call.1} parent=11 // pred_check_branch
          %266 = sbr.rel (%p264) target = $region20
        $region19: #{tpu_custom_call.1} parent=11 // pred_region
          _
        $region20: #{tpu_custom_call.1} parent=11 // pred_fallthru
          _
      $region12: #{tpu_custom_call.1} parent=5 // pred_fallthru
        _
      %p267 = scmp.lt.s32.totalorder %s26, 4
      // Predicated region
      $region21: #{tpu_custom_call.1} parent=5 // pred_check
        %p268 = pneg %p267
      $region22: #{tpu_custom_call.1} parent=5 // pred_check_branch
        %270 = sbr.rel (%p268) target = $region24
      $region23: #{tpu_custom_call.1} parent=5 // pred_region
        // Predicated region
        $region25: #{tpu_custom_call.1} parent=23 // pred_check
          %p271 = pneg %p60
        $region26: #{tpu_custom_call.1} parent=23 // pred_check_branch
          %273 = sbr.rel (%p271) target = $region28
        $region27: #{tpu_custom_call.1} parent=23 // pred_region
          %s274 = sand.u32 %s50, 1
          %s275 = scalar_lea.sflag [#allocation4], %s274
          %s276 = sand.u32 %s50, 1
          %s277 = smul.addr %s276, 64
          %s278 = scalar_lea.vmem [#allocation3], %s277
          %s279 = smul.u32 8, %s34
          %s281 = ssub.s32 1024, 1024
          %282 = vsyncadd %s275, %s281
          %s283 = smul.addr %s279, 2
          %s284 = smul.addr %s33, 32
          %s285 = sadd.s32 %s283, %s284
          %s286 = smul.addr %s285, 64
          %s287 = scalar_lea.hbm %s0, %s286
          %s288 = sshll.u32 %s278, 4
          %s289 = int_to_ptr.vmem [resolvable:$true] %s288
          %294 = dma.hbm_to_vmem [thread:$0]  %s287, 1024, %s289, %s275, 64, 64, 4
        $region28: #{tpu_custom_call.1} parent=23 // pred_fallthru
          _
        // Predicated region
        $region29: #{tpu_custom_call.1} parent=23 // pred_check
          %p295 = pneg %p96
        $region30: #{tpu_custom_call.1} parent=23 // pred_check_branch
          %297 = sbr.rel (%p295) target = $region32
        $region31: #{tpu_custom_call.1} parent=23 // pred_region
          %s298 = sand.u32 %s26, 1
          %s299 = scalar_lea.sflag [#allocation7], %s298
          %s300 = sand.u32 %s86, 1
          %s301 = smul.addr %s300, 8
          %s302 = scalar_lea.vmem [#allocation6], %s301
          %s303 = smul.u32 %s34, 8
          %s304 = ssub.s32 %s303, 1
          %p305 = scmp.gt.s32.totalorder %s304, 0
          %s306 = scalar_select %p305, %s304, 0
          %s308 = ssub.s32 128, 128
          %309 = vsyncadd %s299, %s308
          %s310 = smul.addr %s306, 2
          %s311 = smul.addr %s33, 32
          %s312 = sadd.s32 %s310, %s311
          %s313 = smul.addr %s312, 64
          %s314 = scalar_lea.hbm %s1, %s313
          %s315 = sshll.u32 %s302, 4
          %s316 = int_to_ptr.vmem [resolvable:$true] %s315
          %321 = dma.hbm_to_vmem [thread:$0]  %s314, 128, %s316, %s299, 64, 64, 4
        $region32: #{tpu_custom_call.1} parent=23 // pred_fallthru
          _
        // Predicated region
        $region33: #{tpu_custom_call.1} parent=23 // pred_check
          %p322 = pneg %p132
        $region34: #{tpu_custom_call.1} parent=23 // pred_check_branch
          %324 = sbr.rel (%p322) target = $region36
        $region35: #{tpu_custom_call.1} parent=23 // pred_region
          %s325 = sand.u32 %s26, 1
          %s326 = scalar_lea.sflag [#allocation7], %s325
          %s327 = sand.u32 %s122, 1
          %s328 = smul.addr %s327, 8
          %s329 = scalar_lea.vmem [#allocation8], %s328
          %s330 = sadd.s32 %s34, 1
          %s331 = smul.u32 %s330, 8
          %p332 = scmp.lt.s32.totalorder %s331, 15
          %s333 = scalar_select %p332, %s331, 15
          %s335 = ssub.s32 128, 128
          %336 = vsyncadd %s326, %s335
          %s337 = smul.addr %s333, 2
          %s338 = smul.addr %s33, 32
          %s339 = sadd.s32 %s337, %s338
          %s340 = smul.addr %s339, 64
          %s341 = scalar_lea.hbm %s2, %s340
          %s342 = sshll.u32 %s329, 4
          %s343 = int_to_ptr.vmem [resolvable:$true] %s342
          %348 = dma.hbm_to_vmem [thread:$0]  %s341, 128, %s343, %s326, 64, 64, 4
        $region36: #{tpu_custom_call.1} parent=23 // pred_fallthru
          _
      $region24: #{tpu_custom_call.1} parent=5 // pred_fallthru
        _
      %p349 = scmp.le.s32.totalorder 1, %s26
      %p350 = scmp.lt.s32.totalorder %s26, 5
      %p351 = pnand %p349, %p350
      %p352 = pneg %p351
      // Predicated region
      $region37: #{tpu_custom_call.1} parent=5 // pred_check
        _
      $region38: #{tpu_custom_call.1} parent=5 // pred_check_branch
        %354 = sbr.rel (%p351) target = $region40
      $region39: #{tpu_custom_call.1} parent=5 // pred_region
        %s355 = ssub.s32 %s26, 1
        %s356 = sand.u32 %s53, 1
        %s357 = scalar_lea.sflag [#allocation4], %s356
        %s358 = sand.u32 %s53, 1
        %s359 = smul.addr %s358, 64
        %s360 = scalar_lea.vmem [#allocation3], %s359
        // Predicated region
        $region41: #{tpu_custom_call.1} parent=39 // pred_check
          %p361 = pneg %p66
        $region42: #{tpu_custom_call.1} parent=39 // pred_check_branch
          %363 = sbr.rel (%p361) target = $region44
        $region43: #{tpu_custom_call.1} parent=39 // pred_region
          %364 = dma.done %s357, 1024
        $region44: #{tpu_custom_call.1} parent=39 // pred_fallthru
          _
        %s365 = sand.u32 %s31, 1
        %s366 = scalar_lea.sflag [#allocation7], %s365
        %s367 = sand.u32 %s89, 1
        %s368 = smul.addr %s367, 8
        %s369 = scalar_lea.vmem [#allocation6], %s368
        // Predicated region
        $region45: #{tpu_custom_call.1} parent=39 // pred_check
          %p370 = pneg %p102
        $region46: #{tpu_custom_call.1} parent=39 // pred_check_branch
          %372 = sbr.rel (%p370) target = $region48
        $region47: #{tpu_custom_call.1} parent=39 // pred_region
          %373 = dma.done %s366, 128
        $region48: #{tpu_custom_call.1} parent=39 // pred_fallthru
          _
        %s374 = sand.u32 %s31, 1
        %s375 = scalar_lea.sflag [#allocation7], %s374
        %s376 = sand.u32 %s125, 1
        %s377 = smul.addr %s376, 8
        %s378 = scalar_lea.vmem [#allocation8], %s377
        // Predicated region
        $region49: #{tpu_custom_call.1} parent=39 // pred_check
          %p379 = pneg %p138
        $region50: #{tpu_custom_call.1} parent=39 // pred_check_branch
          %381 = sbr.rel (%p379) target = $region52
        $region51: #{tpu_custom_call.1} parent=39 // pred_region
          %382 = dma.done %s375, 128
        $region52: #{tpu_custom_call.1} parent=39 // pred_fallthru
          _
        // Predicated region
        $region53: #{tpu_custom_call.1} parent=39 // pred_check
          %p383 = pneg %p159
        $region54: #{tpu_custom_call.1} parent=39 // pred_check_branch
          %385 = sbr.rel (%p383) target = $region56
        $region55: #{tpu_custom_call.1} parent=39 // pred_region
          %386 = dma.done [#allocation10], 9216
        $region56: #{tpu_custom_call.1} parent=39 // pred_fallthru
          _
        %s387 = sand.u32 %s53, 1
        %s388 = scalar_lea.sflag [#allocation4], %s387
        %s389 = sand.u32 %s53, 1
        %s390 = smul.addr %s389, 64
        %s391 = scalar_lea.vmem [#allocation3], %s390
        %p392 = pneg %p66
        %p393 = pneg %p63
        %s394 = sand.u32 %s31, 1
        %s395 = scalar_lea.sflag [#allocation7], %s394
        %s396 = sand.u32 %s89, 1
        %s397 = smul.addr %s396, 8
        %s398 = scalar_lea.vmem [#allocation6], %s397
        %p399 = pneg %p102
        %p400 = pneg %p99
        %s401 = sand.u32 %s31, 1
        %s402 = scalar_lea.sflag [#allocation7], %s401
        %s403 = sand.u32 %s125, 1
        %s404 = smul.addr %s403, 8
        %s405 = scalar_lea.vmem [#allocation8], %s404
        %p406 = pneg %p138
        %p407 = pneg %p135
        %p408 = pneg %p159
        %p409 = pneg %p156
        %p410 = pneg %p180
        %p411 = pneg %p177
        %p412 = pneg %p208
        %p413 = pneg %p205
        %s414 = sand.u32 %s195, 1
        %s415 = scalar_lea.sflag [#allocation5], %s414
        %s416 = sand.u32 %s195, 1
        %s417 = smul.addr %s416, 64
        %s418 = scalar_lea.vmem [#allocation11], %s417
        %p419 = pneg %p236
        %p420 = pneg %p233
        %s421 = sand.u32 %s223, 1
        %s422 = scalar_lea.sflag [#allocation13], %s421
        %s423 = sand.u32 %s223, 1
        %s424 = smul.addr %s423, 2
        %s425 = scalar_lea.vmem [#allocation12], %s424
        %s426 = smul.u32 8, %s36
        %s427 = smul.u32 %s36, 8
        %s428 = ssub.s32 %s427, 1
        %p429 = scmp.gt.s32.totalorder %s428, 0
        %s430 = scalar_select %p429, %s428, 0
        %s431 = sadd.s32 %s36, 1
        %s432 = smul.u32 %s431, 8
        %p433 = scmp.lt.s32.totalorder %s432, 15
        %s434 = scalar_select %p433, %s432, 15
        %s435 = smul.u32 8, %s36
        %vm437 = vcmask 1040384
        %vm438 = vsmask.f32 256
        %vm439 = vmand %vm437, %vm438
        %v440 = vld [vmem:[#allocation2] sm:$0x1]
        %v441 = vsel %vm439, 0, %v440
        %442 = vst [vmem:[#allocation2] sm:$0x1] %v441
        %v443 = vld [vmem:[#allocation2 + $0xc] sm:$0x1]
        %v444 = vsel %vm439, 0, %v443
        %445 = vst [vmem:[#allocation2 + $0xc] sm:$0x1] %v444
        %v446 = vld [vmem:[#allocation2 + $0x18] sm:$0x1]
        %v447 = vsel %vm439, 0, %v446
        %448 = vst [vmem:[#allocation2 + $0x18] sm:$0x1] %v447
        %v449 = vld [vmem:[#allocation2 + $0x24] sm:$0x1]
        %v450 = vsel %vm439, 0, %v449
        %451 = vst [vmem:[#allocation2 + $0x24] sm:$0x1] %v450
        %v452 = vld [vmem:[#allocation2 + $0x30] sm:$0x1]
        %v453 = vsel %vm439, 0, %v452
        %454 = vst [vmem:[#allocation2 + $0x30] sm:$0x1] %v453
        %v455 = vld [vmem:[#allocation2 + $0x3c] sm:$0x1]
        %v456 = vsel %vm439, 0, %v455
        %457 = vst [vmem:[#allocation2 + $0x3c] sm:$0x1] %v456
        %v458 = vld [vmem:[#allocation2 + $0x48] sm:$0x1]
        %v459 = vsel %vm439, 0, %v458
        %460 = vst [vmem:[#allocation2 + $0x48] sm:$0x1] %v459
        %v461 = vld [vmem:[#allocation2 + $0x54] sm:$0x1]
        %v462 = vsel %vm439, 0, %v461
        %463 = vst [vmem:[#allocation2 + $0x54] sm:$0x1] %v462
        %v464 = vld [vmem:[#allocation2 + $0x60] sm:$0x1]
        %v465 = vsel %vm439, 0, %v464
        %466 = vst [vmem:[#allocation2 + $0x60] sm:$0x1] %v465
        %v467 = vld [vmem:[#allocation2 + $0x6c] sm:$0x1]
        %v468 = vsel %vm439, 0, %v467
        %469 = vst [vmem:[#allocation2 + $0x6c] sm:$0x1] %v468
        %vm470 = vsmask.f32 7938
        %vm471 = vmand %vm437, %vm470
        %v472 = vld [vmem:[#allocation2 + $0x8] sm:$0x1]
        %v473 = vsel %vm471, 0, %v472
        %474 = vst [vmem:[#allocation2 + $0x8] sm:$0x1] %v473
        %v475 = vld [vmem:[#allocation2 + $0x14] sm:$0x1]
        %v476 = vsel %vm471, 0, %v475
        %477 = vst [vmem:[#allocation2 + $0x14] sm:$0x1] %v476
        %v478 = vld [vmem:[#allocation2 + $0x20] sm:$0x1]
        %v479 = vsel %vm471, 0, %v478
        %480 = vst [vmem:[#allocation2 + $0x20] sm:$0x1] %v479
        %v481 = vld [vmem:[#allocation2 + $0x2c] sm:$0x1]
        %v482 = vsel %vm471, 0, %v481
        %483 = vst [vmem:[#allocation2 + $0x2c] sm:$0x1] %v482
        %v484 = vld [vmem:[#allocation2 + $0x38] sm:$0x1]
        %v485 = vsel %vm471, 0, %v484
        %486 = vst [vmem:[#allocation2 + $0x38] sm:$0x1] %v485
        %v487 = vld [vmem:[#allocation2 + $0x44] sm:$0x1]
        %v488 = vsel %vm471, 0, %v487
        %489 = vst [vmem:[#allocation2 + $0x44] sm:$0x1] %v488
        %v490 = vld [vmem:[#allocation2 + $0x50] sm:$0x1]
        %v491 = vsel %vm471, 0, %v490
        %492 = vst [vmem:[#allocation2 + $0x50] sm:$0x1] %v491
        %v493 = vld [vmem:[#allocation2 + $0x5c] sm:$0x1]
        %v494 = vsel %vm471, 0, %v493
        %495 = vst [vmem:[#allocation2 + $0x5c] sm:$0x1] %v494
        %v496 = vld [vmem:[#allocation2 + $0x68] sm:$0x1]
        %v497 = vsel %vm471, 0, %v496
        %498 = vst [vmem:[#allocation2 + $0x68] sm:$0x1] %v497
        %v499 = vld [vmem:[#allocation2 + $0x74] sm:$0x1]
        %v500 = vsel %vm471, 0, %v499
        %501 = vst [vmem:[#allocation2 + $0x74] sm:$0x1] %v500
        %v502 = vld [vmem:[%s360] sm:$0xf]
        %v503 = vld [vmem:[%s360 + $0x4] sm:$0xf]
        %v504 = vld [vmem:[%s360 + $0x8] sm:$0xf]
        %v505 = vld [vmem:[%s360 + $0xc] sm:$0xf]
        %v506 = vld [vmem:[%s360 + $0x10] sm:$0xf]
        %v507 = vld [vmem:[%s360 + $0x14] sm:$0xf]
        %v508 = vld [vmem:[%s360 + $0x18] sm:$0xf]
        %v509 = vld [vmem:[%s360 + $0x1c] sm:$0xf]
        %v510 = vld [vmem:[%s360 + $0x20] sm:$0xf]
        %v511 = vld [vmem:[%s360 + $0x24] sm:$0xf]
        %v512 = vld [vmem:[%s360 + $0x28] sm:$0xf]
        %v513 = vld [vmem:[%s360 + $0x2c] sm:$0xf]
        %v514 = vld [vmem:[%s360 + $0x30] sm:$0xf]
        %v515 = vld [vmem:[%s360 + $0x34] sm:$0xf]
        %v516 = vld [vmem:[%s360 + $0x38] sm:$0xf]
        %v517 = vld [vmem:[%s360 + $0x3c] sm:$0xf]
        %vm518 = vsmask.f32 4368
        %vm519 = vmor %vm438, %vm518
        %v521 = vshrl.u32 %v502, 16
        %v523 = vrot.slane %v521, 7
        %v524 = vshll.u32 %v502, 16
        %v526 = vor.u32 %v523, %v524
        %v527 = vrot.slane %v523, 4
        %v529 = vshrl.u32 %v503, 16
        %v531 = vrot.slane %v529, 7
        %v532 = vshll.u32 %v503, 16
        %v534 = vor.u32 %v531, %v532
        %v535 = vsel %vm519, %v527, %v534
        %v536 = vrot.slane %v531, 4
        %v538 = vshrl.u32 %v504, 16
        %v540 = vrot.slane %v538, 7
        %v541 = vshll.u32 %v504, 16
        %v543 = vor.u32 %v540, %v541
        %v544 = vrot.slane %v540, 4
        %v546 = vshrl.u32 %v505, 16
        %v548 = vrot.slane %v546, 7
        %v549 = vshll.u32 %v505, 16
        %v551 = vor.u32 %v548, %v549
        %v552 = vsel %vm519, %v544, %v551
        %v553 = vrot.slane %v548, 4
        %v555 = vshrl.u32 %v506, 16
        %v557 = vrot.slane %v555, 7
        %v558 = vshll.u32 %v506, 16
        %v560 = vor.u32 %v557, %v558
        %v561 = vrot.slane %v557, 4
        %v563 = vshrl.u32 %v507, 16
        %v565 = vrot.slane %v563, 7
        %v566 = vshll.u32 %v507, 16
        %v568 = vor.u32 %v565, %v566
        %v569 = vsel %vm519, %v561, %v568
        %v570 = vrot.slane %v565, 4
        %v572 = vshrl.u32 %v508, 16
        %v574 = vrot.slane %v572, 7
        %v575 = vshll.u32 %v508, 16
        %v577 = vor.u32 %v574, %v575
        %v578 = vrot.slane %v574, 4
        %v580 = vshrl.u32 %v509, 16
        %v582 = vrot.slane %v580, 7
        %v583 = vshll.u32 %v509, 16
        %v585 = vor.u32 %v582, %v583
        %v586 = vsel %vm519, %v578, %v585
        %v587 = vrot.slane %v582, 4
        %v589 = vshrl.u32 %v510, 16
        %v591 = vrot.slane %v589, 7
        %v592 = vshll.u32 %v510, 16
        %v594 = vor.u32 %v591, %v592
        %v595 = vrot.slane %v591, 4
        %v597 = vshrl.u32 %v511, 16
        %v599 = vrot.slane %v597, 7
        %v600 = vshll.u32 %v511, 16
        %v602 = vor.u32 %v599, %v600
        %v603 = vsel %vm519, %v595, %v602
        %v604 = vrot.slane %v599, 4
        %v606 = vshrl.u32 %v512, 16
        %v608 = vrot.slane %v606, 7
        %v609 = vshll.u32 %v512, 16
        %v611 = vor.u32 %v608, %v609
        %v612 = vrot.slane %v608, 4
        %v614 = vshrl.u32 %v513, 16
        %v616 = vrot.slane %v614, 7
        %v617 = vshll.u32 %v513, 16
        %v619 = vor.u32 %v616, %v617
        %v620 = vsel %vm519, %v612, %v619
        %v621 = vrot.slane %v616, 4
        %v623 = vshrl.u32 %v514, 16
        %v625 = vrot.slane %v623, 7
        %v626 = vshll.u32 %v514, 16
        %v628 = vor.u32 %v625, %v626
        %v629 = vrot.slane %v625, 4
        %v631 = vshrl.u32 %v515, 16
        %v633 = vrot.slane %v631, 7
        %v634 = vshll.u32 %v515, 16
        %v636 = vor.u32 %v633, %v634
        %v637 = vsel %vm519, %v629, %v636
        %v638 = vrot.slane %v633, 4
        %v640 = vshrl.u32 %v516, 16
        %v642 = vrot.slane %v640, 7
        %v643 = vshll.u32 %v516, 16
        %v645 = vor.u32 %v642, %v643
        %v646 = vrot.slane %v642, 4
        %v648 = vshrl.u32 %v517, 16
        %v650 = vrot.slane %v648, 7
        %v651 = vshll.u32 %v517, 16
        %v653 = vor.u32 %v650, %v651
        %v654 = vsel %vm519, %v646, %v653
        %v655 = vrot.slane %v650, 4
        %s680 = scalar_lea.vmem [#allocation2], 12
        %vm681 = vcmask 1043456
        %vm682 = vmand %vm681, %vm470
        %v683 = vld [vmem:[%s680] sm:$0xf]
        %v684 = vsel %vm682, %v526, %v683
        %685 = vst [vmem:[%s680] sm:$0xf] %v684
        %686 = vst [vmem:[%s680 + $0x4] sm:$0xf] %v535
        %v687 = vld [vmem:[%s680 + $0x8] sm:$0x1]
        %v688 = vsel %vm439, %v536, %v687
        %689 = vst [vmem:[%s680 + $0x8] sm:$0x1] %v688
        %v690 = vld [vmem:[%s680 + $0xc] sm:$0xf]
        %v691 = vsel %vm682, %v543, %v690
        %692 = vst [vmem:[%s680 + $0xc] sm:$0xf] %v691
        %693 = vst [vmem:[%s680 + $0x10] sm:$0xf] %v552
        %v694 = vld [vmem:[%s680 + $0x14] sm:$0x1]
        %v695 = vsel %vm439, %v553, %v694
        %696 = vst [vmem:[%s680 + $0x14] sm:$0x1] %v695
        %v697 = vld [vmem:[%s680 + $0x18] sm:$0xf]
        %v698 = vsel %vm682, %v560, %v697
        %699 = vst [vmem:[%s680 + $0x18] sm:$0xf] %v698
        %700 = vst [vmem:[%s680 + $0x1c] sm:$0xf] %v569
        %v701 = vld [vmem:[%s680 + $0x20] sm:$0x1]
        %v702 = vsel %vm439, %v570, %v701
        %703 = vst [vmem:[%s680 + $0x20] sm:$0x1] %v702
        %v704 = vld [vmem:[%s680 + $0x24] sm:$0xf]
        %v705 = vsel %vm682, %v577, %v704
        %706 = vst [vmem:[%s680 + $0x24] sm:$0xf] %v705
        %707 = vst [vmem:[%s680 + $0x28] sm:$0xf] %v586
        %v708 = vld [vmem:[%s680 + $0x2c] sm:$0x1]
        %v709 = vsel %vm439, %v587, %v708
        %710 = vst [vmem:[%s680 + $0x2c] sm:$0x1] %v709
        %v711 = vld [vmem:[%s680 + $0x30] sm:$0xf]
        %v712 = vsel %vm682, %v594, %v711
        %713 = vst [vmem:[%s680 + $0x30] sm:$0xf] %v712
        %714 = vst [vmem:[%s680 + $0x34] sm:$0xf] %v603
        %v715 = vld [vmem:[%s680 + $0x38] sm:$0x1]
        %v716 = vsel %vm439, %v604, %v715
        %717 = vst [vmem:[%s680 + $0x38] sm:$0x1] %v716
        %v718 = vld [vmem:[%s680 + $0x3c] sm:$0xf]
        %v719 = vsel %vm682, %v611, %v718
        %720 = vst [vmem:[%s680 + $0x3c] sm:$0xf] %v719
        %721 = vst [vmem:[%s680 + $0x40] sm:$0xf] %v620
        %v722 = vld [vmem:[%s680 + $0x44] sm:$0x1]
        %v723 = vsel %vm439, %v621, %v722
        %724 = vst [vmem:[%s680 + $0x44] sm:$0x1] %v723
        %v725 = vld [vmem:[%s680 + $0x48] sm:$0xf]
        %v726 = vsel %vm682, %v628, %v725
        %727 = vst [vmem:[%s680 + $0x48] sm:$0xf] %v726
        %728 = vst [vmem:[%s680 + $0x4c] sm:$0xf] %v637
        %v729 = vld [vmem:[%s680 + $0x50] sm:$0x1]
        %v730 = vsel %vm439, %v638, %v729
        %731 = vst [vmem:[%s680 + $0x50] sm:$0x1] %v730
        %v732 = vld [vmem:[%s680 + $0x54] sm:$0xf]
        %v733 = vsel %vm682, %v645, %v732
        %734 = vst [vmem:[%s680 + $0x54] sm:$0xf] %v733
        %735 = vst [vmem:[%s680 + $0x58] sm:$0xf] %v654
        %v736 = vld [vmem:[%s680 + $0x5c] sm:$0x1]
        %v737 = vsel %vm439, %v655, %v736
        %738 = vst [vmem:[%s680 + $0x5c] sm:$0x1] %v737
        %p739 = scmp.gt.s32.totalorder %s36, 0
        %v740 = vld [vmem:[%s369] sm:$0xf]
        %v741 = vld [vmem:[%s369 + $0x4] sm:$0xf]
        %s742 = scalar_select %p739, 1, 0
        %v743 = vstv %s742
        %vm744 = vcmp.eq.s32.totalorder %v743, 1
        %v745 = vsel %vm744, %v740, 0
        %v746 = vsel %vm744, %v741, 0
        %p747 = scmp.lt.s32.totalorder %s36, 1
        %v748 = vld [vmem:[%s378] sm:$0xf]
        %v749 = vld [vmem:[%s378 + $0x4] sm:$0xf]
        %s750 = scalar_select %p747, 1, 0
        %v751 = vstv %s750
        %vm752 = vcmp.eq.s32.totalorder %v751, 1
        %v753 = vsel %vm752, %v748, 0
        %v754 = vsel %vm752, %v749, 0
        %v756 = vshrl.u32 %v745, 16
        %v758 = vrot.slane %v756, 7
        %v759 = vshll.u32 %v745, 16
        %v761 = vor.u32 %v758, %v759
        %v762 = vrot.slane %v758, 4
        %v764 = vshrl.u32 %v746, 16
        %v766 = vrot.slane %v764, 7
        %v767 = vshll.u32 %v746, 16
        %v769 = vor.u32 %v766, %v767
        %v770 = vsel %vm519, %v762, %v769
        %v771 = vrot.slane %v766, 4
        %v775 = vld [vmem:[#allocation2] sm:$0xf]
        %v776 = vsel %vm682, %v761, %v775
        %777 = vst [vmem:[#allocation2] sm:$0xf] %v776
        %778 = vst [vmem:[#allocation2 + $0x4] sm:$0xf] %v770
        %v779 = vld [vmem:[#allocation2 + $0x8] sm:$0x1]
        %v780 = vsel %vm439, %v771, %v779
        %781 = vst [vmem:[#allocation2 + $0x8] sm:$0x1] %v780
        %v783 = vshrl.u32 %v753, 16
        %v785 = vrot.slane %v783, 7
        %v786 = vshll.u32 %v753, 16
        %v788 = vor.u32 %v785, %v786
        %v789 = vrot.slane %v785, 4
        %v791 = vshrl.u32 %v754, 16
        %v793 = vrot.slane %v791, 7
        %v794 = vshll.u32 %v754, 16
        %v796 = vor.u32 %v793, %v794
        %v797 = vsel %vm519, %v789, %v796
        %v798 = vrot.slane %v793, 4
        %s802 = scalar_lea.vmem [#allocation2], 108
        %v803 = vld [vmem:[%s802] sm:$0xf]
        %v804 = vsel %vm682, %v788, %v803
        %805 = vst [vmem:[%s802] sm:$0xf] %v804
        %806 = vst [vmem:[%s802 + $0x4] sm:$0xf] %v797
        %v807 = vld [vmem:[%s802 + $0x8] sm:$0x1]
        %v808 = vsel %vm439, %v798, %v807
        %809 = vst [vmem:[%s802 + $0x8] sm:$0x1] %v808
        %v810 = vld [vmem:[#allocation2] sm:$0xf]
        %v811 = vld [vmem:[#allocation2 + $0x4] sm:$0xf]
        %v812 = vld [vmem:[#allocation2 + $0xc] sm:$0xf]
        %v813 = vld [vmem:[#allocation2 + $0x10] sm:$0xf]
        %v814 = vld [vmem:[#allocation2 + $0x18] sm:$0xf]
        %v815 = vld [vmem:[#allocation2 + $0x1c] sm:$0xf]
        %v816 = vld [vmem:[#allocation2 + $0x24] sm:$0xf]
        %v817 = vld [vmem:[#allocation2 + $0x28] sm:$0xf]
        %v818 = vld [vmem:[#allocation2 + $0x30] sm:$0xf]
        %v819 = vld [vmem:[#allocation2 + $0x34] sm:$0xf]
        %v820 = vld [vmem:[#allocation2 + $0x3c] sm:$0xf]
        %v821 = vld [vmem:[#allocation2 + $0x40] sm:$0xf]
        %v822 = vld [vmem:[#allocation2 + $0x48] sm:$0xf]
        %v823 = vld [vmem:[#allocation2 + $0x4c] sm:$0xf]
        %v824 = vld [vmem:[#allocation2 + $0x54] sm:$0xf]
        %v825 = vld [vmem:[#allocation2 + $0x58] sm:$0xf]
        %v826 = vld [vmem:[#allocation9] sm:$0xf]
        %v827 = vld [vmem:[#allocation9 + $0x4] sm:$0xf]
        %v828 = vld [vmem:[#allocation9 + $0x8] sm:$0xf]
        %v829 = vld [vmem:[#allocation9 + $0xc] sm:$0xf]
        %v830 = vld [vmem:[#allocation9 + $0x10] sm:$0xf]
        %v831 = vld [vmem:[#allocation9 + $0x14] sm:$0xf]
        %v832 = vld [vmem:[#allocation9 + $0x18] sm:$0xf]
        %v833 = vld [vmem:[#allocation9 + $0x1c] sm:$0xf]
        %v834 = vld [vmem:[#allocation9 + $0x20] sm:$0xf]
        %v835 = vld [vmem:[#allocation9 + $0x24] sm:$0xf]
        %v836 = vld [vmem:[#allocation9 + $0x28] sm:$0xf]
        %v837 = vld [vmem:[#allocation9 + $0x2c] sm:$0xf]
        %v838 = vld [vmem:[#allocation9 + $0x30] sm:$0xf]
        %v839 = vld [vmem:[#allocation9 + $0x34] sm:$0xf]
        %v840 = vld [vmem:[#allocation9 + $0x38] sm:$0xf]
        %v841 = vld [vmem:[#allocation9 + $0x3c] sm:$0xf]
        %v842 = vld [vmem:[#allocation2 + $0x8] sm:$0x1]
        %v843 = vld [vmem:[#allocation2 + $0x14] sm:$0x1]
        %v844 = vld [vmem:[#allocation2 + $0x20] sm:$0x1]
        %v845 = vld [vmem:[#allocation2 + $0x2c] sm:$0x1]
        %v846 = vld [vmem:[#allocation2 + $0x38] sm:$0x1]
        %v847 = vld [vmem:[#allocation2 + $0x44] sm:$0x1]
        %v848 = vld [vmem:[#allocation2 + $0x50] sm:$0x1]
        %v849 = vld [vmem:[#allocation2 + $0x5c] sm:$0x1]
        %vm850 = vsmask.f32 3328
        %vm851 = vsmask.f32 7440
        %vm852 = vmor %vm850, %vm851
        %v854 = vshrl.u32 %v810, 16
        %v856 = vrot.slane %v854, 4
        %v857 = vshll.u32 %v810, 16
        %v859 = vrot.slane %v857, 5
        %v860 = vor.u32 %v856, %v859
        %v861 = vrot.slane %v860, 4
        %v863 = vshll.u32 %v811, 16
        %v865 = vrot.slane %v863, 5
        %v866 = vsel %vm852, %v861, %v865
        %v867 = vshrl.u32 %v811, 16
        %v869 = vrot.slane %v867, 4
        %v870 = vor.u32 %v869, %v865
        %v871 = vrot.slane %v870, 4
        %v873 = vshll.u32 %v842, 16
        %v875 = vrot.slane %v873, 5
        %v876 = vsel %vm852, %v871, %v875
        %v878 = vshrl.u32 %v812, 16
        %v880 = vrot.slane %v878, 4
        %v881 = vshll.u32 %v812, 16
        %v883 = vrot.slane %v881, 5
        %v884 = vor.u32 %v880, %v883
        %v885 = vrot.slane %v884, 4
        %v887 = vshll.u32 %v813, 16
        %v889 = vrot.slane %v887, 5
        %v890 = vsel %vm852, %v885, %v889
        %v891 = vshrl.u32 %v813, 16
        %v893 = vrot.slane %v891, 4
        %v894 = vor.u32 %v893, %v889
        %v895 = vrot.slane %v894, 4
        %v897 = vshll.u32 %v843, 16
        %v899 = vrot.slane %v897, 5
        %v900 = vsel %vm852, %v895, %v899
        %v902 = vshrl.u32 %v814, 16
        %v904 = vrot.slane %v902, 4
        %v905 = vshll.u32 %v814, 16
        %v907 = vrot.slane %v905, 5
        %v908 = vor.u32 %v904, %v907
        %v909 = vrot.slane %v908, 4
        %v911 = vshll.u32 %v815, 16
        %v913 = vrot.slane %v911, 5
        %v914 = vsel %vm852, %v909, %v913
        %v915 = vshrl.u32 %v815, 16
        %v917 = vrot.slane %v915, 4
        %v918 = vor.u32 %v917, %v913
        %v919 = vrot.slane %v918, 4
        %v921 = vshll.u32 %v844, 16
        %v923 = vrot.slane %v921, 5
        %v924 = vsel %vm852, %v919, %v923
        %v926 = vshrl.u32 %v816, 16
        %v928 = vrot.slane %v926, 4
        %v929 = vshll.u32 %v816, 16
        %v931 = vrot.slane %v929, 5
        %v932 = vor.u32 %v928, %v931
        %v933 = vrot.slane %v932, 4
        %v935 = vshll.u32 %v817, 16
        %v937 = vrot.slane %v935, 5
        %v938 = vsel %vm852, %v933, %v937
        %v939 = vshrl.u32 %v817, 16
        %v941 = vrot.slane %v939, 4
        %v942 = vor.u32 %v941, %v937
        %v943 = vrot.slane %v942, 4
        %v945 = vshll.u32 %v845, 16
        %v947 = vrot.slane %v945, 5
        %v948 = vsel %vm852, %v943, %v947
        %v950 = vshrl.u32 %v818, 16
        %v952 = vrot.slane %v950, 4
        %v953 = vshll.u32 %v818, 16
        %v955 = vrot.slane %v953, 5
        %v956 = vor.u32 %v952, %v955
        %v957 = vrot.slane %v956, 4
        %v959 = vshll.u32 %v819, 16
        %v961 = vrot.slane %v959, 5
        %v962 = vsel %vm852, %v957, %v961
        %v963 = vshrl.u32 %v819, 16
        %v965 = vrot.slane %v963, 4
        %v966 = vor.u32 %v965, %v961
        %v967 = vrot.slane %v966, 4
        %v969 = vshll.u32 %v846, 16
        %v971 = vrot.slane %v969, 5
        %v972 = vsel %vm852, %v967, %v971
        %v974 = vshrl.u32 %v820, 16
        %v976 = vrot.slane %v974, 4
        %v977 = vshll.u32 %v820, 16
        %v979 = vrot.slane %v977, 5
        %v980 = vor.u32 %v976, %v979
        %v981 = vrot.slane %v980, 4
        %v983 = vshll.u32 %v821, 16
        %v985 = vrot.slane %v983, 5
        %v986 = vsel %vm852, %v981, %v985
        %v987 = vshrl.u32 %v821, 16
        %v989 = vrot.slane %v987, 4
        %v990 = vor.u32 %v989, %v985
        %v991 = vrot.slane %v990, 4
        %v993 = vshll.u32 %v847, 16
        %v995 = vrot.slane %v993, 5
        %v996 = vsel %vm852, %v991, %v995
        %v998 = vshrl.u32 %v822, 16
        %v1000 = vrot.slane %v998, 4
        %v1001 = vshll.u32 %v822, 16
        %v1003 = vrot.slane %v1001, 5
        %v1004 = vor.u32 %v1000, %v1003
        %v1005 = vrot.slane %v1004, 4
        %v1007 = vshll.u32 %v823, 16
        %v1009 = vrot.slane %v1007, 5
        %v1010 = vsel %vm852, %v1005, %v1009
        %v1011 = vshrl.u32 %v823, 16
        %v1013 = vrot.slane %v1011, 4
        %v1014 = vor.u32 %v1013, %v1009
        %v1015 = vrot.slane %v1014, 4
        %v1017 = vshll.u32 %v848, 16
        %v1019 = vrot.slane %v1017, 5
        %v1020 = vsel %vm852, %v1015, %v1019
        %v1022 = vshrl.u32 %v824, 16
        %v1024 = vrot.slane %v1022, 4
        %v1025 = vshll.u32 %v824, 16
        %v1027 = vrot.slane %v1025, 5
        %v1028 = vor.u32 %v1024, %v1027
        %v1029 = vrot.slane %v1028, 4
        %v1031 = vshll.u32 %v825, 16
        %v1033 = vrot.slane %v1031, 5
        %v1034 = vsel %vm852, %v1029, %v1033
        %v1035 = vshrl.u32 %v825, 16
        %v1037 = vrot.slane %v1035, 4
        %v1038 = vor.u32 %v1037, %v1033
        %v1039 = vrot.slane %v1038, 4
        %v1041 = vshll.u32 %v849, 16
        %v1043 = vrot.slane %v1041, 5
        %v1044 = vsel %vm852, %v1039, %v1043
        %s1045 = scalar_lea.vmem [#allocation9], 64
        %v1046 = vld [vmem:[%s1045] sm:$0xf]
        %v1047 = vld [vmem:[%s1045 + $0x4] sm:$0xf]
        %v1048 = vld [vmem:[%s1045 + $0x8] sm:$0xf]
        %v1049 = vld [vmem:[%s1045 + $0xc] sm:$0xf]
        %v1050 = vld [vmem:[%s1045 + $0x10] sm:$0xf]
        %v1051 = vld [vmem:[%s1045 + $0x14] sm:$0xf]
        %v1052 = vld [vmem:[%s1045 + $0x18] sm:$0xf]
        %v1053 = vld [vmem:[%s1045 + $0x1c] sm:$0xf]
        %v1054 = vld [vmem:[%s1045 + $0x20] sm:$0xf]
        %v1055 = vld [vmem:[%s1045 + $0x24] sm:$0xf]
        %v1056 = vld [vmem:[%s1045 + $0x28] sm:$0xf]
        %v1057 = vld [vmem:[%s1045 + $0x2c] sm:$0xf]
        %v1058 = vld [vmem:[%s1045 + $0x30] sm:$0xf]
        %v1059 = vld [vmem:[%s1045 + $0x34] sm:$0xf]
        %v1060 = vld [vmem:[%s1045 + $0x38] sm:$0xf]
        %v1061 = vld [vmem:[%s1045 + $0x3c] sm:$0xf]
        %v1062 = vunpack.c.l.b16 %v866
        %v1063 = vunpack.c.l.b16 %v876
        %v1064 = vunpack.c.l.b16 %v890
        %v1065 = vunpack.c.l.b16 %v900
        %v1066 = vunpack.c.l.b16 %v914
        %v1067 = vunpack.c.l.b16 %v924
        %v1068 = vunpack.c.l.b16 %v938
        %v1069 = vunpack.c.l.b16 %v948
        %v1070 = vunpack.c.l.b16 %v962
        %v1071 = vunpack.c.l.b16 %v972
        %v1072 = vunpack.c.l.b16 %v986
        %v1073 = vunpack.c.l.b16 %v996
        %v1074 = vunpack.c.l.b16 %v1010
        %v1075 = vunpack.c.l.b16 %v1020
        %v1076 = vunpack.c.l.b16 %v1034
        %v1077 = vunpack.c.l.b16 %v1044
        %v1078 = vpack.c.b16 %v1063, %v1062
        %v1079 = vpack.c.b16 %v1065, %v1064
        %v1080 = vpack.c.b16 %v1067, %v1066
        %v1081 = vpack.c.b16 %v1069, %v1068
        %v1082 = vpack.c.b16 %v1071, %v1070
        %v1083 = vpack.c.b16 %v1073, %v1072
        %v1084 = vpack.c.b16 %v1075, %v1074
        %v1085 = vpack.c.b16 %v1077, %v1076
        %v1110 = vunpack.c.l.b16 %v1046
        %v1111 = vunpack.c.l.b16 %v1047
        %v1112 = vunpack.c.l.b16 %v1048
        %v1113 = vunpack.c.l.b16 %v1049
        %v1114 = vunpack.c.l.b16 %v1050
        %v1115 = vunpack.c.l.b16 %v1051
        %v1116 = vunpack.c.l.b16 %v1052
        %v1117 = vunpack.c.l.b16 %v1053
        %v1118 = vunpack.c.l.b16 %v1054
        %v1119 = vunpack.c.l.b16 %v1055
        %v1120 = vunpack.c.l.b16 %v1056
        %v1121 = vunpack.c.l.b16 %v1057
        %v1122 = vunpack.c.l.b16 %v1058
        %v1123 = vunpack.c.l.b16 %v1059
        %v1124 = vunpack.c.l.b16 %v1060
        %v1125 = vunpack.c.l.b16 %v1061
        %v1126 = vpack.c.b16 %v1111, %v1110
        %v1127 = vpack.c.b16 %v1113, %v1112
        %v1128 = vpack.c.b16 %v1115, %v1114
        %v1129 = vpack.c.b16 %v1117, %v1116
        %v1130 = vpack.c.b16 %v1119, %v1118
        %v1131 = vpack.c.b16 %v1121, %v1120
        %v1132 = vpack.c.b16 %v1123, %v1122
        %v1133 = vpack.c.b16 %v1125, %v1124
        %1142 = vmatprep.subr.bf16.mxu0 0
        %1143 = vmatpush1.bf16.msra.mxu0 %v1126
        %1144 = vmatprep.subr.bf16.mxu0 0
        %1145 = vmatpush1.bf16.msra.mxu0 %v1127
        %1146 = vmatprep.subr.bf16.mxu0 0
        %1147 = vmatpush1.bf16.msra.mxu0 %v1128
        %1148 = vmatprep.subr.bf16.mxu0 0
        %1149 = vmatpush1.bf16.msra.mxu0 %v1129
        %1150 = vmatprep.subr.bf16.mxu0 0
        %1151 = vmatpush1.bf16.msra.mxu0 %v1130
        %1152 = vmatprep.subr.bf16.mxu0 0
        %1153 = vmatpush1.bf16.msra.mxu0 %v1131
        %1154 = vmatprep.subr.bf16.mxu0 0
        %1155 = vmatpush1.bf16.msra.mxu0 %v1132
        %1156 = vmatprep.subr.bf16.mxu0 0
        %1157 = vmatpush1.bf16.msra.mxu0 %v1133
        %1158 = vmatprep.subr.bf16.mxu0 0
        %1159 = vmatpush1.bf16.msra.mxu0 0
        %1160 = vmatprep.subr.bf16.mxu0 0
        %1161 = vmatpush1.bf16.msra.mxu0 0
        %1162 = vmatprep.subr.bf16.mxu0 0
        %1163 = vmatpush1.bf16.msra.mxu0 0
        %1164 = vmatprep.subr.bf16.mxu0 0
        %1165 = vmatpush1.bf16.msra.mxu0 0
        %1166 = vmatprep.subr.bf16.mxu0 0
        %1167 = vmatpush1.bf16.msra.mxu0 0
        %1168 = vmatprep.subr.bf16.mxu0 0
        %1169 = vmatpush1.bf16.msra.mxu0 0
        %1170 = vmatprep.subr.bf16.mxu0 0
        %1171 = vmatpush1.bf16.msra.mxu0 0
        %1172 = vmatprep.subr.bf16.mxu0 0
        %1173 = vmatpush1.bf16.msra.mxu0 0
        %1174 = vmatprep.mubr.bf16.mxu0 0
        %1175 = vmatmul.mubr.bf16.gmra.mrb[0].mxu0 %v1078
        %v1176 = vpop.f32.mrb[0].mxu0
        %v1177 = vadd.f32 0.0, %v1176
        %v1178 = vpop.f32.mrb[0].mxu0
        %v1179 = vpop.f32.mrb[0].mxu0
        %v1180 = vadd.f32 0.0, %v1179
        %v1181 = vpop.f32.mrb[0].mxu0
        %1182 = vmatprep.mubr.bf16.mxu0 0
        %1183 = vmatmul.mubr.bf16.gmra.mrb[0].mxu0 %v1079
        %v1184 = vpop.f32.mrb[0].mxu0
        %v1185 = vadd.f32 0.0, %v1184
        %v1186 = vpop.f32.mrb[0].mxu0
        %v1187 = vpop.f32.mrb[0].mxu0
        %v1188 = vadd.f32 0.0, %v1187
        %v1189 = vpop.f32.mrb[0].mxu0
        %1190 = vmatprep.mubr.bf16.mxu0 0
        %1191 = vmatmul.mubr.bf16.gmra.mrb[0].mxu0 %v1080
        %v1192 = vpop.f32.mrb[0].mxu0
        %v1193 = vadd.f32 0.0, %v1192
        %v1194 = vpop.f32.mrb[0].mxu0
        %v1195 = vpop.f32.mrb[0].mxu0
        %v1196 = vadd.f32 0.0, %v1195
        %v1197 = vpop.f32.mrb[0].mxu0
        %1198 = vmatprep.mubr.bf16.mxu0 0
        %1199 = vmatmul.mubr.bf16.gmra.mrb[0].mxu0 %v1081
        %v1200 = vpop.f32.mrb[0].mxu0
        %v1201 = vadd.f32 0.0, %v1200
        %v1202 = vpop.f32.mrb[0].mxu0
        %v1203 = vpop.f32.mrb[0].mxu0
        %v1204 = vadd.f32 0.0, %v1203
        %v1205 = vpop.f32.mrb[0].mxu0
        %1206 = vmatprep.mubr.bf16.mxu0 0
        %1207 = vmatmul.mubr.bf16.gmra.mrb[0].mxu0 %v1082
        %v1208 = vpop.f32.mrb[0].mxu0
        %v1209 = vadd.f32 0.0, %v1208
        %v1210 = vpop.f32.mrb[0].mxu0
        %v1211 = vpop.f32.mrb[0].mxu0
        %v1212 = vadd.f32 0.0, %v1211
        %v1213 = vpop.f32.mrb[0].mxu0
        %1214 = vmatprep.mubr.bf16.mxu0 0
        %1215 = vmatmul.mubr.bf16.gmra.mrb[0].mxu0 %v1083
        %v1216 = vpop.f32.mrb[0].mxu0
        %v1217 = vadd.f32 0.0, %v1216
        %v1218 = vpop.f32.mrb[0].mxu0
        %v1219 = vpop.f32.mrb[0].mxu0
        %v1220 = vadd.f32 0.0, %v1219
        %v1221 = vpop.f32.mrb[0].mxu0
        %1222 = vmatprep.mubr.bf16.mxu0 0
        %1223 = vmatmul.mubr.bf16.gmra.mrb[0].mxu0 %v1084
        %v1224 = vpop.f32.mrb[0].mxu0
        %v1225 = vadd.f32 0.0, %v1224
        %v1226 = vpop.f32.mrb[0].mxu0
        %v1227 = vpop.f32.mrb[0].mxu0
        %v1228 = vadd.f32 0.0, %v1227
        %v1229 = vpop.f32.mrb[0].mxu0
        %1230 = vmatprep.mubr.bf16.mxu0 0
        %1231 = vmatmul.mubr.bf16.gmra.mrb[0].mxu0 %v1085
        %v1232 = vpop.f32.mrb[0].mxu0
        %v1233 = vadd.f32 0.0, %v1232
        %v1234 = vpop.f32.mrb[0].mxu0
        %v1235 = vpop.f32.mrb[0].mxu0
        %v1236 = vadd.f32 0.0, %v1235
        %v1237 = vpop.f32.mrb[0].mxu0
        %1238 = vdwg.mxu0
        %v1255 = vunpack.c.l.b16 %v810
        %v1256 = vunpack.c.l.b16 %v811
        %v1257 = vunpack.c.l.b16 %v812
        %v1258 = vunpack.c.l.b16 %v813
        %v1259 = vunpack.c.l.b16 %v814
        %v1260 = vunpack.c.l.b16 %v815
        %v1261 = vunpack.c.l.b16 %v816
        %v1262 = vunpack.c.l.b16 %v817
        %v1263 = vunpack.c.l.b16 %v818
        %v1264 = vunpack.c.l.b16 %v819
        %v1265 = vunpack.c.l.b16 %v820
        %v1266 = vunpack.c.l.b16 %v821
        %v1267 = vunpack.c.l.b16 %v822
        %v1268 = vunpack.c.l.b16 %v823
        %v1269 = vunpack.c.l.b16 %v824
        %v1270 = vunpack.c.l.b16 %v825
        %v1271 = vpack.c.b16 %v1256, %v1255
        %v1272 = vpack.c.b16 %v1258, %v1257
        %v1273 = vpack.c.b16 %v1260, %v1259
        %v1274 = vpack.c.b16 %v1262, %v1261
        %v1275 = vpack.c.b16 %v1264, %v1263
        %v1276 = vpack.c.b16 %v1266, %v1265
        %v1277 = vpack.c.b16 %v1268, %v1267
        %v1278 = vpack.c.b16 %v1270, %v1269
        %v1303 = vunpack.c.l.b16 %v826
        %v1304 = vunpack.c.l.b16 %v827
        %v1305 = vunpack.c.l.b16 %v828
        %v1306 = vunpack.c.l.b16 %v829
        %v1307 = vunpack.c.l.b16 %v830
        %v1308 = vunpack.c.l.b16 %v831
        %v1309 = vunpack.c.l.b16 %v832
        %v1310 = vunpack.c.l.b16 %v833
        %v1311 = vunpack.c.l.b16 %v834
        %v1312 = vunpack.c.l.b16 %v835
        %v1313 = vunpack.c.l.b16 %v836
        %v1314 = vunpack.c.l.b16 %v837
        %v1315 = vunpack.c.l.b16 %v838
        %v1316 = vunpack.c.l.b16 %v839
        %v1317 = vunpack.c.l.b16 %v840
        %v1318 = vunpack.c.l.b16 %v841
        %v1319 = vpack.c.b16 %v1304, %v1303
        %v1320 = vpack.c.b16 %v1306, %v1305
        %v1321 = vpack.c.b16 %v1308, %v1307
        %v1322 = vpack.c.b16 %v1310, %v1309
        %v1323 = vpack.c.b16 %v1312, %v1311
        %v1324 = vpack.c.b16 %v1314, %v1313
        %v1325 = vpack.c.b16 %v1316, %v1315
        %v1326 = vpack.c.b16 %v1318, %v1317
        %1335 = vmatprep.subr.bf16.mxu0 0
        %1336 = vmatpush1.bf16.msra.mxu0 %v1319
        %1337 = vmatprep.subr.bf16.mxu0 0
        %1338 = vmatpush1.bf16.msra.mxu0 %v1320
        %1339 = vmatprep.subr.bf16.mxu0 0
        %1340 = vmatpush1.bf16.msra.mxu0 %v1321
        %1341 = vmatprep.subr.bf16.mxu0 0
        %1342 = vmatpush1.bf16.msra.mxu0 %v1322
        %1343 = vmatprep.subr.bf16.mxu0 0
        %1344 = vmatpush1.bf16.msra.mxu0 %v1323
        %1345 = vmatprep.subr.bf16.mxu0 0
        %1346 = vmatpush1.bf16.msra.mxu0 %v1324
        %1347 = vmatprep.subr.bf16.mxu0 0
        %1348 = vmatpush1.bf16.msra.mxu0 %v1325
        %1349 = vmatprep.subr.bf16.mxu0 0
        %1350 = vmatpush1.bf16.msra.mxu0 %v1326
        %1351 = vmatprep.subr.bf16.mxu0 0
        %1352 = vmatpush1.bf16.msra.mxu0 0
        %1353 = vmatprep.subr.bf16.mxu0 0
        %1354 = vmatpush1.bf16.msra.mxu0 0
        %1355 = vmatprep.subr.bf16.mxu0 0
        %1356 = vmatpush1.bf16.msra.mxu0 0
        %1357 = vmatprep.subr.bf16.mxu0 0
        %1358 = vmatpush1.bf16.msra.mxu0 0
        %1359 = vmatprep.subr.bf16.mxu0 0
        %1360 = vmatpush1.bf16.msra.mxu0 0
        %1361 = vmatprep.subr.bf16.mxu0 0
        %1362 = vmatpush1.bf16.msra.mxu0 0
        %1363 = vmatprep.subr.bf16.mxu0 0
        %1364 = vmatpush1.bf16.msra.mxu0 0
        %1365 = vmatprep.subr.bf16.mxu0 0
        %1366 = vmatpush1.bf16.msra.mxu0 0
        %1367 = vmatprep.mubr.bf16.mxu0 0
        %1368 = vmatmul.mubr.bf16.gmra.mrb[0].mxu0 %v1271
        %v1369 = vpop.f32.mrb[0].mxu0
        %v1370 = vadd.f32 %v1177, %v1369
        %v1371 = vpop.f32.mrb[0].mxu0
        %v1372 = vpop.f32.mrb[0].mxu0
        %v1373 = vadd.f32 %v1180, %v1372
        %v1374 = vpop.f32.mrb[0].mxu0
        %1375 = vmatprep.mubr.bf16.mxu0 0
        %1376 = vmatmul.mubr.bf16.gmra.mrb[0].mxu0 %v1272
        %v1377 = vpop.f32.mrb[0].mxu0
        %v1378 = vadd.f32 %v1185, %v1377
        %v1379 = vpop.f32.mrb[0].mxu0
        %v1380 = vpop.f32.mrb[0].mxu0
        %v1381 = vadd.f32 %v1188, %v1380
        %v1382 = vpop.f32.mrb[0].mxu0
        %1383 = vmatprep.mubr.bf16.mxu0 0
        %1384 = vmatmul.mubr.bf16.gmra.mrb[0].mxu0 %v1273
        %v1385 = vpop.f32.mrb[0].mxu0
        %v1386 = vadd.f32 %v1193, %v1385
        %v1387 = vpop.f32.mrb[0].mxu0
        %v1388 = vpop.f32.mrb[0].mxu0
        %v1389 = vadd.f32 %v1196, %v1388
        %v1390 = vpop.f32.mrb[0].mxu0
        %1391 = vmatprep.mubr.bf16.mxu0 0
        %1392 = vmatmul.mubr.bf16.gmra.mrb[0].mxu0 %v1274
        %v1393 = vpop.f32.mrb[0].mxu0
        %v1394 = vadd.f32 %v1201, %v1393
        %v1395 = vpop.f32.mrb[0].mxu0
        %v1396 = vpop.f32.mrb[0].mxu0
        %v1397 = vadd.f32 %v1204, %v1396
        %v1398 = vpop.f32.mrb[0].mxu0
        %1399 = vmatprep.mubr.bf16.mxu0 0
        %1400 = vmatmul.mubr.bf16.gmra.mrb[0].mxu0 %v1275
        %v1401 = vpop.f32.mrb[0].mxu0
        %v1402 = vadd.f32 %v1209, %v1401
        %v1403 = vpop.f32.mrb[0].mxu0
        %v1404 = vpop.f32.mrb[0].mxu0
        %v1405 = vadd.f32 %v1212, %v1404
        %v1406 = vpop.f32.mrb[0].mxu0
        %1407 = vmatprep.mubr.bf16.mxu0 0
        %1408 = vmatmul.mubr.bf16.gmra.mrb[0].mxu0 %v1276
        %v1409 = vpop.f32.mrb[0].mxu0
        %v1410 = vadd.f32 %v1217, %v1409
        %v1411 = vpop.f32.mrb[0].mxu0
        %v1412 = vpop.f32.mrb[0].mxu0
        %v1413 = vadd.f32 %v1220, %v1412
        %v1414 = vpop.f32.mrb[0].mxu0
        %1415 = vmatprep.mubr.bf16.mxu0 0
        %1416 = vmatmul.mubr.bf16.gmra.mrb[0].mxu0 %v1277
        %v1417 = vpop.f32.mrb[0].mxu0
        %v1418 = vadd.f32 %v1225, %v1417
        %v1419 = vpop.f32.mrb[0].mxu0
        %v1420 = vpop.f32.mrb[0].mxu0
        %v1421 = vadd.f32 %v1228, %v1420
        %v1422 = vpop.f32.mrb[0].mxu0
        %1423 = vmatprep.mubr.bf16.mxu0 0
        %1424 = vmatmul.mubr.bf16.gmra.mrb[0].mxu0 %v1278
        %v1425 = vpop.f32.mrb[0].mxu0
        %v1426 = vadd.f32 %v1233, %v1425
        %v1427 = vpop.f32.mrb[0].mxu0
        %v1428 = vpop.f32.mrb[0].mxu0
        %v1429 = vadd.f32 %v1236, %v1428
        %v1430 = vpop.f32.mrb[0].mxu0
        %1431 = vdwg.mxu0
        %v1432 = vld [vmem:[#allocation2] sm:$0xe]
        %v1433 = vld [vmem:[#allocation2 + $0xc] sm:$0xe]
        %v1434 = vld [vmem:[#allocation2 + $0x18] sm:$0xe]
        %v1435 = vld [vmem:[#allocation2 + $0x24] sm:$0xe]
        %v1436 = vld [vmem:[#allocation2 + $0x30] sm:$0xe]
        %v1437 = vld [vmem:[#allocation2 + $0x3c] sm:$0xe]
        %v1438 = vld [vmem:[#allocation2 + $0x48] sm:$0xe]
        %v1439 = vld [vmem:[#allocation2 + $0x54] sm:$0xe]
        %vm1456 = vcmask 1042432
        %vm1457 = vcmask 1046532
        %vm1458 = vmor %vm1456, %vm1457
        %v1459 = vrot.slane %v1432, 5
        %v1460 = vrot.slane %v1459, 4
        %v1461 = vrot.slane %v811, 5
        %v1462 = vsel %vm1458, %v1460, %v1461
        %v1463 = vrot.slane %v1461, 4
        %v1464 = vrot.slane %v842, 5
        %v1465 = vsel %vm1458, %v1463, %v1464
        %v1466 = vrot.slane %v1433, 5
        %v1467 = vrot.slane %v1466, 4
        %v1468 = vrot.slane %v813, 5
        %v1469 = vsel %vm1458, %v1467, %v1468
        %v1470 = vrot.slane %v1468, 4
        %v1471 = vrot.slane %v843, 5
        %v1472 = vsel %vm1458, %v1470, %v1471
        %v1473 = vrot.slane %v1434, 5
        %v1474 = vrot.slane %v1473, 4
        %v1475 = vrot.slane %v815, 5
        %v1476 = vsel %vm1458, %v1474, %v1475
        %v1477 = vrot.slane %v1475, 4
        %v1478 = vrot.slane %v844, 5
        %v1479 = vsel %vm1458, %v1477, %v1478
        %v1480 = vrot.slane %v1435, 5
        %v1481 = vrot.slane %v1480, 4
        %v1482 = vrot.slane %v817, 5
        %v1483 = vsel %vm1458, %v1481, %v1482
        %v1484 = vrot.slane %v1482, 4
        %v1485 = vrot.slane %v845, 5
        %v1486 = vsel %vm1458, %v1484, %v1485
        %v1487 = vrot.slane %v1436, 5
        %v1488 = vrot.slane %v1487, 4
        %v1489 = vrot.slane %v819, 5
        %v1490 = vsel %vm1458, %v1488, %v1489
        %v1491 = vrot.slane %v1489, 4
        %v1492 = vrot.slane %v846, 5
        %v1493 = vsel %vm1458, %v1491, %v1492
        %v1494 = vrot.slane %v1437, 5
        %v1495 = vrot.slane %v1494, 4
        %v1496 = vrot.slane %v821, 5
        %v1497 = vsel %vm1458, %v1495, %v1496
        %v1498 = vrot.slane %v1496, 4
        %v1499 = vrot.slane %v847, 5
        %v1500 = vsel %vm1458, %v1498, %v1499
        %v1501 = vrot.slane %v1438, 5
        %v1502 = vrot.slane %v1501, 4
        %v1503 = vrot.slane %v823, 5
        %v1504 = vsel %vm1458, %v1502, %v1503
        %v1505 = vrot.slane %v1503, 4
        %v1506 = vrot.slane %v848, 5
        %v1507 = vsel %vm1458, %v1505, %v1506
        %v1508 = vrot.slane %v1439, 5
        %v1509 = vrot.slane %v1508, 4
        %v1510 = vrot.slane %v825, 5
        %v1511 = vsel %vm1458, %v1509, %v1510
        %v1512 = vrot.slane %v1510, 4
        %v1513 = vrot.slane %v849, 5
        %v1514 = vsel %vm1458, %v1512, %v1513
        %s1515 = scalar_lea.vmem [#allocation9], 128
        %v1516 = vld [vmem:[%s1515] sm:$0xf]
        %v1517 = vld [vmem:[%s1515 + $0x4] sm:$0xf]
        %v1518 = vld [vmem:[%s1515 + $0x8] sm:$0xf]
        %v1519 = vld [vmem:[%s1515 + $0xc] sm:$0xf]
        %v1520 = vld [vmem:[%s1515 + $0x10] sm:$0xf]
        %v1521 = vld [vmem:[%s1515 + $0x14] sm:$0xf]
        %v1522 = vld [vmem:[%s1515 + $0x18] sm:$0xf]
        %v1523 = vld [vmem:[%s1515 + $0x1c] sm:$0xf]
        %v1524 = vld [vmem:[%s1515 + $0x20] sm:$0xf]
        %v1525 = vld [vmem:[%s1515 + $0x24] sm:$0xf]
        %v1526 = vld [vmem:[%s1515 + $0x28] sm:$0xf]
        %v1527 = vld [vmem:[%s1515 + $0x2c] sm:$0xf]
        %v1528 = vld [vmem:[%s1515 + $0x30] sm:$0xf]
        %v1529 = vld [vmem:[%s1515 + $0x34] sm:$0xf]
        %v1530 = vld [vmem:[%s1515 + $0x38] sm:$0xf]
        %v1531 = vld [vmem:[%s1515 + $0x3c] sm:$0xf]
        %v1532 = vunpack.c.l.b16 %v1462
        %v1533 = vunpack.c.l.b16 %v1465
        %v1534 = vunpack.c.l.b16 %v1469
        %v1535 = vunpack.c.l.b16 %v1472
        %v1536 = vunpack.c.l.b16 %v1476
        %v1537 = vunpack.c.l.b16 %v1479
        %v1538 = vunpack.c.l.b16 %v1483
        %v1539 = vunpack.c.l.b16 %v1486
        %v1540 = vunpack.c.l.b16 %v1490
        %v1541 = vunpack.c.l.b16 %v1493
        %v1542 = vunpack.c.l.b16 %v1497
        %v1543 = vunpack.c.l.b16 %v1500
        %v1544 = vunpack.c.l.b16 %v1504
        %v1545 = vunpack.c.l.b16 %v1507
        %v1546 = vunpack.c.l.b16 %v1511
        %v1547 = vunpack.c.l.b16 %v1514
        %v1548 = vpack.c.b16 %v1533, %v1532
        %v1549 = vpack.c.b16 %v1535, %v1534
        %v1550 = vpack.c.b16 %v1537, %v1536
        %v1551 = vpack.c.b16 %v1539, %v1538
        %v1552 = vpack.c.b16 %v1541, %v1540
        %v1553 = vpack.c.b16 %v1543, %v1542
        %v1554 = vpack.c.b16 %v1545, %v1544
        %v1555 = vpack.c.b16 %v1547, %v1546
        %v1580 = vunpack.c.l.b16 %v1516
        %v1581 = vunpack.c.l.b16 %v1517
        %v1582 = vunpack.c.l.b16 %v1518
        %v1583 = vunpack.c.l.b16 %v1519
        %v1584 = vunpack.c.l.b16 %v1520
        %v1585 = vunpack.c.l.b16 %v1521
        %v1586 = vunpack.c.l.b16 %v1522
        %v1587 = vunpack.c.l.b16 %v1523
        %v1588 = vunpack.c.l.b16 %v1524
        %v1589 = vunpack.c.l.b16 %v1525
        %v1590 = vunpack.c.l.b16 %v1526
        %v1591 = vunpack.c.l.b16 %v1527
        %v1592 = vunpack.c.l.b16 %v1528
        %v1593 = vunpack.c.l.b16 %v1529
        %v1594 = vunpack.c.l.b16 %v1530
        %v1595 = vunpack.c.l.b16 %v1531
        %v1596 = vpack.c.b16 %v1581, %v1580
        %v1597 = vpack.c.b16 %v1583, %v1582
        %v1598 = vpack.c.b16 %v1585, %v1584
        %v1599 = vpack.c.b16 %v1587, %v1586
        %v1600 = vpack.c.b16 %v1589, %v1588
        %v1601 = vpack.c.b16 %v1591, %v1590
        %v1602 = vpack.c.b16 %v1593, %v1592
        %v1603 = vpack.c.b16 %v1595, %v1594
        %1612 = vmatprep.subr.bf16.mxu0 0
        %1613 = vmatpush1.bf16.msra.mxu0 %v1596
        %1614 = vmatprep.subr.bf16.mxu0 0
        %1615 = vmatpush1.bf16.msra.mxu0 %v1597
        %1616 = vmatprep.subr.bf16.mxu0 0
        %1617 = vmatpush1.bf16.msra.mxu0 %v1598
        %1618 = vmatprep.subr.bf16.mxu0 0
        %1619 = vmatpush1.bf16.msra.mxu0 %v1599
        %1620 = vmatprep.subr.bf16.mxu0 0
        %1621 = vmatpush1.bf16.msra.mxu0 %v1600
        %1622 = vmatprep.subr.bf16.mxu0 0
        %1623 = vmatpush1.bf16.msra.mxu0 %v1601
        %1624 = vmatprep.subr.bf16.mxu0 0
        %1625 = vmatpush1.bf16.msra.mxu0 %v1602
        %1626 = vmatprep.subr.bf16.mxu0 0
        %1627 = vmatpush1.bf16.msra.mxu0 %v1603
        %1628 = vmatprep.subr.bf16.mxu0 0
        %1629 = vmatpush1.bf16.msra.mxu0 0
        %1630 = vmatprep.subr.bf16.mxu0 0
        %1631 = vmatpush1.bf16.msra.mxu0 0
        %1632 = vmatprep.subr.bf16.mxu0 0
        %1633 = vmatpush1.bf16.msra.mxu0 0
        %1634 = vmatprep.subr.bf16.mxu0 0
        %1635 = vmatpush1.bf16.msra.mxu0 0
        %1636 = vmatprep.subr.bf16.mxu0 0
        %1637 = vmatpush1.bf16.msra.mxu0 0
        %1638 = vmatprep.subr.bf16.mxu0 0
        %1639 = vmatpush1.bf16.msra.mxu0 0
        %1640 = vmatprep.subr.bf16.mxu0 0
        %1641 = vmatpush1.bf16.msra.mxu0 0
        %1642 = vmatprep.subr.bf16.mxu0 0
        %1643 = vmatpush1.bf16.msra.mxu0 0
        %1644 = vmatprep.mubr.bf16.mxu0 0
        %1645 = vmatmul.mubr.bf16.gmra.mrb[0].mxu0 %v1548
        %v1646 = vpop.f32.mrb[0].mxu0
        %v1647 = vadd.f32 0.0, %v1646
        %v1648 = vpop.f32.mrb[0].mxu0
        %v1649 = vpop.f32.mrb[0].mxu0
        %v1650 = vadd.f32 0.0, %v1649
        %v1651 = vpop.f32.mrb[0].mxu0
        %1652 = vmatprep.mubr.bf16.mxu0 0
        %1653 = vmatmul.mubr.bf16.gmra.mrb[0].mxu0 %v1549
        %v1654 = vpop.f32.mrb[0].mxu0
        %v1655 = vadd.f32 0.0, %v1654
        %v1656 = vpop.f32.mrb[0].mxu0
        %v1657 = vpop.f32.mrb[0].mxu0
        %v1658 = vadd.f32 0.0, %v1657
        %v1659 = vpop.f32.mrb[0].mxu0
        %1660 = vmatprep.mubr.bf16.mxu0 0
        %1661 = vmatmul.mubr.bf16.gmra.mrb[0].mxu0 %v1550
        %v1662 = vpop.f32.mrb[0].mxu0
        %v1663 = vadd.f32 0.0, %v1662
        %v1664 = vpop.f32.mrb[0].mxu0
        %v1665 = vpop.f32.mrb[0].mxu0
        %v1666 = vadd.f32 0.0, %v1665
        %v1667 = vpop.f32.mrb[0].mxu0
        %1668 = vmatprep.mubr.bf16.mxu0 0
        %1669 = vmatmul.mubr.bf16.gmra.mrb[0].mxu0 %v1551
        %v1670 = vpop.f32.mrb[0].mxu0
        %v1671 = vadd.f32 0.0, %v1670
        %v1672 = vpop.f32.mrb[0].mxu0
        %v1673 = vpop.f32.mrb[0].mxu0
        %v1674 = vadd.f32 0.0, %v1673
        %v1675 = vpop.f32.mrb[0].mxu0
        %1676 = vmatprep.mubr.bf16.mxu0 0
        %1677 = vmatmul.mubr.bf16.gmra.mrb[0].mxu0 %v1552
        %v1678 = vpop.f32.mrb[0].mxu0
        %v1679 = vadd.f32 0.0, %v1678
        %v1680 = vpop.f32.mrb[0].mxu0
        %v1681 = vpop.f32.mrb[0].mxu0
        %v1682 = vadd.f32 0.0, %v1681
        %v1683 = vpop.f32.mrb[0].mxu0
        %1684 = vmatprep.mubr.bf16.mxu0 0
        %1685 = vmatmul.mubr.bf16.gmra.mrb[0].mxu0 %v1553
        %v1686 = vpop.f32.mrb[0].mxu0
        %v1687 = vadd.f32 0.0, %v1686
        %v1688 = vpop.f32.mrb[0].mxu0
        %v1689 = vpop.f32.mrb[0].mxu0
        %v1690 = vadd.f32 0.0, %v1689
        %v1691 = vpop.f32.mrb[0].mxu0
        %1692 = vmatprep.mubr.bf16.mxu0 0
        %1693 = vmatmul.mubr.bf16.gmra.mrb[0].mxu0 %v1554
        %v1694 = vpop.f32.mrb[0].mxu0
        %v1695 = vadd.f32 0.0, %v1694
        %v1696 = vpop.f32.mrb[0].mxu0
        %v1697 = vpop.f32.mrb[0].mxu0
        %v1698 = vadd.f32 0.0, %v1697
        %v1699 = vpop.f32.mrb[0].mxu0
        %1700 = vmatprep.mubr.bf16.mxu0 0
        %1701 = vmatmul.mubr.bf16.gmra.mrb[0].mxu0 %v1555
        %v1702 = vpop.f32.mrb[0].mxu0
        %v1703 = vadd.f32 0.0, %v1702
        %v1704 = vpop.f32.mrb[0].mxu0
        %v1705 = vpop.f32.mrb[0].mxu0
        %v1706 = vadd.f32 0.0, %v1705
        %v1707 = vpop.f32.mrb[0].mxu0
        %1708 = vdwg.mxu0
        %v1709 = vadd.f32 %v1370, %v1647
        %v1710 = vadd.f32 %v1373, %v1650
        %v1711 = vadd.f32 %v1378, %v1655
        %v1712 = vadd.f32 %v1381, %v1658
        %v1713 = vadd.f32 %v1386, %v1663
        %v1714 = vadd.f32 %v1389, %v1666
        %v1715 = vadd.f32 %v1394, %v1671
        %v1716 = vadd.f32 %v1397, %v1674
        %v1717 = vadd.f32 %v1402, %v1679
        %v1718 = vadd.f32 %v1405, %v1682
        %v1719 = vadd.f32 %v1410, %v1687
        %v1720 = vadd.f32 %v1413, %v1690
        %v1721 = vadd.f32 %v1418, %v1695
        %v1722 = vadd.f32 %v1421, %v1698
        %v1723 = vadd.f32 %v1426, %v1703
        %v1724 = vadd.f32 %v1429, %v1706
        %v1725 = vld [vmem:[%s680] sm:$0xf]
        %v1726 = vld [vmem:[%s680 + $0x4] sm:$0xf]
        %v1727 = vld [vmem:[%s680 + $0xc] sm:$0xf]
        %v1728 = vld [vmem:[%s680 + $0x10] sm:$0xf]
        %v1729 = vld [vmem:[%s680 + $0x18] sm:$0xf]
        %v1730 = vld [vmem:[%s680 + $0x1c] sm:$0xf]
        %v1731 = vld [vmem:[%s680 + $0x24] sm:$0xf]
        %v1732 = vld [vmem:[%s680 + $0x28] sm:$0xf]
        %v1733 = vld [vmem:[%s680 + $0x30] sm:$0xf]
        %v1734 = vld [vmem:[%s680 + $0x34] sm:$0xf]
        %v1735 = vld [vmem:[%s680 + $0x3c] sm:$0xf]
        %v1736 = vld [vmem:[%s680 + $0x40] sm:$0xf]
        %v1737 = vld [vmem:[%s680 + $0x48] sm:$0xf]
        %v1738 = vld [vmem:[%s680 + $0x4c] sm:$0xf]
        %v1739 = vld [vmem:[%s680 + $0x54] sm:$0xf]
        %v1740 = vld [vmem:[%s680 + $0x58] sm:$0xf]
        %s1741 = scalar_lea.vmem [#allocation9], 192
        %v1742 = vld [vmem:[%s1741] sm:$0xf]
        %v1743 = vld [vmem:[%s1741 + $0x4] sm:$0xf]
        %v1744 = vld [vmem:[%s1741 + $0x8] sm:$0xf]
        %v1745 = vld [vmem:[%s1741 + $0xc] sm:$0xf]
        %v1746 = vld [vmem:[%s1741 + $0x10] sm:$0xf]
        %v1747 = vld [vmem:[%s1741 + $0x14] sm:$0xf]
        %v1748 = vld [vmem:[%s1741 + $0x18] sm:$0xf]
        %v1749 = vld [vmem:[%s1741 + $0x1c] sm:$0xf]
        %v1750 = vld [vmem:[%s1741 + $0x20] sm:$0xf]
        %v1751 = vld [vmem:[%s1741 + $0x24] sm:$0xf]
        %v1752 = vld [vmem:[%s1741 + $0x28] sm:$0xf]
        %v1753 = vld [vmem:[%s1741 + $0x2c] sm:$0xf]
        %v1754 = vld [vmem:[%s1741 + $0x30] sm:$0xf]
        %v1755 = vld [vmem:[%s1741 + $0x34] sm:$0xf]
        %v1756 = vld [vmem:[%s1741 + $0x38] sm:$0xf]
        %v1757 = vld [vmem:[%s1741 + $0x3c] sm:$0xf]
        %v1774 = vunpack.c.l.b16 %v1725
        %v1775 = vunpack.c.l.b16 %v1726
        %v1776 = vunpack.c.l.b16 %v1727
        %v1777 = vunpack.c.l.b16 %v1728
        %v1778 = vunpack.c.l.b16 %v1729
        %v1779 = vunpack.c.l.b16 %v1730
        %v1780 = vunpack.c.l.b16 %v1731
        %v1781 = vunpack.c.l.b16 %v1732
        %v1782 = vunpack.c.l.b16 %v1733
        %v1783 = vunpack.c.l.b16 %v1734
        %v1784 = vunpack.c.l.b16 %v1735
        %v1785 = vunpack.c.l.b16 %v1736
        %v1786 = vunpack.c.l.b16 %v1737
        %v1787 = vunpack.c.l.b16 %v1738
        %v1788 = vunpack.c.l.b16 %v1739
        %v1789 = vunpack.c.l.b16 %v1740
        %v1790 = vpack.c.b16 %v1775, %v1774
        %v1791 = vpack.c.b16 %v1777, %v1776
        %v1792 = vpack.c.b16 %v1779, %v1778
        %v1793 = vpack.c.b16 %v1781, %v1780
        %v1794 = vpack.c.b16 %v1783, %v1782
        %v1795 = vpack.c.b16 %v1785, %v1784
        %v1796 = vpack.c.b16 %v1787, %v1786
        %v1797 = vpack.c.b16 %v1789, %v1788
        %v1822 = vunpack.c.l.b16 %v1742
        %v1823 = vunpack.c.l.b16 %v1743
        %v1824 = vunpack.c.l.b16 %v1744
        %v1825 = vunpack.c.l.b16 %v1745
        %v1826 = vunpack.c.l.b16 %v1746
        %v1827 = vunpack.c.l.b16 %v1747
        %v1828 = vunpack.c.l.b16 %v1748
        %v1829 = vunpack.c.l.b16 %v1749
        %v1830 = vunpack.c.l.b16 %v1750
        %v1831 = vunpack.c.l.b16 %v1751
        %v1832 = vunpack.c.l.b16 %v1752
        %v1833 = vunpack.c.l.b16 %v1753
        %v1834 = vunpack.c.l.b16 %v1754
        %v1835 = vunpack.c.l.b16 %v1755
        %v1836 = vunpack.c.l.b16 %v1756
        %v1837 = vunpack.c.l.b16 %v1757
        %v1838 = vpack.c.b16 %v1823, %v1822
        %v1839 = vpack.c.b16 %v1825, %v1824
        %v1840 = vpack.c.b16 %v1827, %v1826
        %v1841 = vpack.c.b16 %v1829, %v1828
        %v1842 = vpack.c.b16 %v1831, %v1830
        %v1843 = vpack.c.b16 %v1833, %v1832
        %v1844 = vpack.c.b16 %v1835, %v1834
        %v1845 = vpack.c.b16 %v1837, %v1836
        %1854 = vmatprep.subr.bf16.mxu0 0
        %1855 = vmatpush1.bf16.msra.mxu0 %v1838
        %1856 = vmatprep.subr.bf16.mxu0 0
        %1857 = vmatpush1.bf16.msra.mxu0 %v1839
        %1858 = vmatprep.subr.bf16.mxu0 0
        %1859 = vmatpush1.bf16.msra.mxu0 %v1840
        %1860 = vmatprep.subr.bf16.mxu0 0
        %1861 = vmatpush1.bf16.msra.mxu0 %v1841
        %1862 = vmatprep.subr.bf16.mxu0 0
        %1863 = vmatpush1.bf16.msra.mxu0 %v1842
        %1864 = vmatprep.subr.bf16.mxu0 0
        %1865 = vmatpush1.bf16.msra.mxu0 %v1843
        %1866 = vmatprep.subr.bf16.mxu0 0
        %1867 = vmatpush1.bf16.msra.mxu0 %v1844
        %1868 = vmatprep.subr.bf16.mxu0 0
        %1869 = vmatpush1.bf16.msra.mxu0 %v1845
        %1870 = vmatprep.subr.bf16.mxu0 0
        %1871 = vmatpush1.bf16.msra.mxu0 0
        %1872 = vmatprep.subr.bf16.mxu0 0
        %1873 = vmatpush1.bf16.msra.mxu0 0
        %1874 = vmatprep.subr.bf16.mxu0 0
        %1875 = vmatpush1.bf16.msra.mxu0 0
        %1876 = vmatprep.subr.bf16.mxu0 0
        %1877 = vmatpush1.bf16.msra.mxu0 0
        %1878 = vmatprep.subr.bf16.mxu0 0
        %1879 = vmatpush1.bf16.msra.mxu0 0
        %1880 = vmatprep.subr.bf16.mxu0 0
        %1881 = vmatpush1.bf16.msra.mxu0 0
        %1882 = vmatprep.subr.bf16.mxu0 0
        %1883 = vmatpush1.bf16.msra.mxu0 0
        %1884 = vmatprep.subr.bf16.mxu0 0
        %1885 = vmatpush1.bf16.msra.mxu0 0
        %1886 = vmatprep.mubr.bf16.mxu0 0
        %1887 = vmatmul.mubr.bf16.gmra.mrb[0].mxu0 %v1790
        %v1888 = vpop.f32.mrb[0].mxu0
        %v1889 = vadd.f32 0.0, %v1888
        %v1890 = vpop.f32.mrb[0].mxu0
        %v1891 = vpop.f32.mrb[0].mxu0
        %v1892 = vadd.f32 0.0, %v1891
        %v1893 = vpop.f32.mrb[0].mxu0
        %1894 = vmatprep.mubr.bf16.mxu0 0
        %1895 = vmatmul.mubr.bf16.gmra.mrb[0].mxu0 %v1791
        %v1896 = vpop.f32.mrb[0].mxu0
        %v1897 = vadd.f32 0.0, %v1896
        %v1898 = vpop.f32.mrb[0].mxu0
        %v1899 = vpop.f32.mrb[0].mxu0
        %v1900 = vadd.f32 0.0, %v1899
        %v1901 = vpop.f32.mrb[0].mxu0
        %1902 = vmatprep.mubr.bf16.mxu0 0
        %1903 = vmatmul.mubr.bf16.gmra.mrb[0].mxu0 %v1792
        %v1904 = vpop.f32.mrb[0].mxu0
        %v1905 = vadd.f32 0.0, %v1904
        %v1906 = vpop.f32.mrb[0].mxu0
        %v1907 = vpop.f32.mrb[0].mxu0
        %v1908 = vadd.f32 0.0, %v1907
        %v1909 = vpop.f32.mrb[0].mxu0
        %1910 = vmatprep.mubr.bf16.mxu0 0
        %1911 = vmatmul.mubr.bf16.gmra.mrb[0].mxu0 %v1793
        %v1912 = vpop.f32.mrb[0].mxu0
        %v1913 = vadd.f32 0.0, %v1912
        %v1914 = vpop.f32.mrb[0].mxu0
        %v1915 = vpop.f32.mrb[0].mxu0
        %v1916 = vadd.f32 0.0, %v1915
        %v1917 = vpop.f32.mrb[0].mxu0
        %1918 = vmatprep.mubr.bf16.mxu0 0
        %1919 = vmatmul.mubr.bf16.gmra.mrb[0].mxu0 %v1794
        %v1920 = vpop.f32.mrb[0].mxu0
        %v1921 = vadd.f32 0.0, %v1920
        %v1922 = vpop.f32.mrb[0].mxu0
        %v1923 = vpop.f32.mrb[0].mxu0
        %v1924 = vadd.f32 0.0, %v1923
        %v1925 = vpop.f32.mrb[0].mxu0
        %1926 = vmatprep.mubr.bf16.mxu0 0
        %1927 = vmatmul.mubr.bf16.gmra.mrb[0].mxu0 %v1795
        %v1928 = vpop.f32.mrb[0].mxu0
        %v1929 = vadd.f32 0.0, %v1928
        %v1930 = vpop.f32.mrb[0].mxu0
        %v1931 = vpop.f32.mrb[0].mxu0
        %v1932 = vadd.f32 0.0, %v1931
        %v1933 = vpop.f32.mrb[0].mxu0
        %1934 = vmatprep.mubr.bf16.mxu0 0
        %1935 = vmatmul.mubr.bf16.gmra.mrb[0].mxu0 %v1796
        %v1936 = vpop.f32.mrb[0].mxu0
        %v1937 = vadd.f32 0.0, %v1936
        %v1938 = vpop.f32.mrb[0].mxu0
        %v1939 = vpop.f32.mrb[0].mxu0
        %v1940 = vadd.f32 0.0, %v1939
        %v1941 = vpop.f32.mrb[0].mxu0
        %1942 = vmatprep.mubr.bf16.mxu0 0
        %1943 = vmatmul.mubr.bf16.gmra.mrb[0].mxu0 %v1797
        %v1944 = vpop.f32.mrb[0].mxu0
        %v1945 = vadd.f32 0.0, %v1944
        %v1946 = vpop.f32.mrb[0].mxu0
        %v1947 = vpop.f32.mrb[0].mxu0
        %v1948 = vadd.f32 0.0, %v1947
        %v1949 = vpop.f32.mrb[0].mxu0
        %1950 = vdwg.mxu0
        %v1951 = vadd.f32 %v1709, %v1889
        %v1952 = vadd.f32 %v1710, %v1892
        %v1953 = vadd.f32 %v1711, %v1897
        %v1954 = vadd.f32 %v1712, %v1900
        %v1955 = vadd.f32 %v1713, %v1905
        %v1956 = vadd.f32 %v1714, %v1908
        %v1957 = vadd.f32 %v1715, %v1913
        %v1958 = vadd.f32 %v1716, %v1916
        %v1959 = vadd.f32 %v1717, %v1921
        %v1960 = vadd.f32 %v1718, %v1924
        %v1961 = vadd.f32 %v1719, %v1929
        %v1962 = vadd.f32 %v1720, %v1932
        %v1963 = vadd.f32 %v1721, %v1937
        %v1964 = vadd.f32 %v1722, %v1940
        %v1965 = vadd.f32 %v1723, %v1945
        %v1966 = vadd.f32 %v1724, %v1948
        %v1967 = vld [vmem:[%s680] sm:$0xf]
        %v1968 = vld [vmem:[%s680 + $0x4] sm:$0xf]
        %v1969 = vld [vmem:[%s680 + $0x8] sm:$0x1]
        %v1970 = vld [vmem:[%s680 + $0xc] sm:$0xf]
        %v1971 = vld [vmem:[%s680 + $0x10] sm:$0xf]
        %v1972 = vld [vmem:[%s680 + $0x14] sm:$0x1]
        %v1973 = vld [vmem:[%s680 + $0x18] sm:$0xf]
        %v1974 = vld [vmem:[%s680 + $0x1c] sm:$0xf]
        %v1975 = vld [vmem:[%s680 + $0x20] sm:$0x1]
        %v1976 = vld [vmem:[%s680 + $0x24] sm:$0xf]
        %v1977 = vld [vmem:[%s680 + $0x28] sm:$0xf]
        %v1978 = vld [vmem:[%s680 + $0x2c] sm:$0x1]
        %v1979 = vld [vmem:[%s680 + $0x30] sm:$0xf]
        %v1980 = vld [vmem:[%s680 + $0x34] sm:$0xf]
        %v1981 = vld [vmem:[%s680 + $0x38] sm:$0x1]
        %v1982 = vld [vmem:[%s680 + $0x3c] sm:$0xf]
        %v1983 = vld [vmem:[%s680 + $0x40] sm:$0xf]
        %v1984 = vld [vmem:[%s680 + $0x44] sm:$0x1]
        %v1985 = vld [vmem:[%s680 + $0x48] sm:$0xf]
        %v1986 = vld [vmem:[%s680 + $0x4c] sm:$0xf]
        %v1987 = vld [vmem:[%s680 + $0x50] sm:$0x1]
        %v1988 = vld [vmem:[%s680 + $0x54] sm:$0xf]
        %v1989 = vld [vmem:[%s680 + $0x58] sm:$0xf]
        %v1990 = vld [vmem:[%s680 + $0x5c] sm:$0x1]
        %v1992 = vshrl.u32 %v1967, 16
        %v1994 = vrot.slane %v1992, 4
        %v1995 = vshll.u32 %v1967, 16
        %v1997 = vrot.slane %v1995, 5
        %v1998 = vor.u32 %v1994, %v1997
        %v1999 = vrot.slane %v1998, 4
        %v2001 = vshll.u32 %v1968, 16
        %v2003 = vrot.slane %v2001, 5
        %v2004 = vsel %vm852, %v1999, %v2003
        %v2005 = vshrl.u32 %v1968, 16
        %v2007 = vrot.slane %v2005, 4
        %v2008 = vor.u32 %v2007, %v2003
        %v2009 = vrot.slane %v2008, 4
        %v2011 = vshll.u32 %v1969, 16
        %v2013 = vrot.slane %v2011, 5
        %v2014 = vsel %vm852, %v2009, %v2013
        %v2016 = vshrl.u32 %v1970, 16
        %v2018 = vrot.slane %v2016, 4
        %v2019 = vshll.u32 %v1970, 16
        %v2021 = vrot.slane %v2019, 5
        %v2022 = vor.u32 %v2018, %v2021
        %v2023 = vrot.slane %v2022, 4
        %v2025 = vshll.u32 %v1971, 16
        %v2027 = vrot.slane %v2025, 5
        %v2028 = vsel %vm852, %v2023, %v2027
        %v2029 = vshrl.u32 %v1971, 16
        %v2031 = vrot.slane %v2029, 4
        %v2032 = vor.u32 %v2031, %v2027
        %v2033 = vrot.slane %v2032, 4
        %v2035 = vshll.u32 %v1972, 16
        %v2037 = vrot.slane %v2035, 5
        %v2038 = vsel %vm852, %v2033, %v2037
        %v2040 = vshrl.u32 %v1973, 16
        %v2042 = vrot.slane %v2040, 4
        %v2043 = vshll.u32 %v1973, 16
        %v2045 = vrot.slane %v2043, 5
        %v2046 = vor.u32 %v2042, %v2045
        %v2047 = vrot.slane %v2046, 4
        %v2049 = vshll.u32 %v1974, 16
        %v2051 = vrot.slane %v2049, 5
        %v2052 = vsel %vm852, %v2047, %v2051
        %v2053 = vshrl.u32 %v1974, 16
        %v2055 = vrot.slane %v2053, 4
        %v2056 = vor.u32 %v2055, %v2051
        %v2057 = vrot.slane %v2056, 4
        %v2059 = vshll.u32 %v1975, 16
        %v2061 = vrot.slane %v2059, 5
        %v2062 = vsel %vm852, %v2057, %v2061
        %v2064 = vshrl.u32 %v1976, 16
        %v2066 = vrot.slane %v2064, 4
        %v2067 = vshll.u32 %v1976, 16
        %v2069 = vrot.slane %v2067, 5
        %v2070 = vor.u32 %v2066, %v2069
        %v2071 = vrot.slane %v2070, 4
        %v2073 = vshll.u32 %v1977, 16
        %v2075 = vrot.slane %v2073, 5
        %v2076 = vsel %vm852, %v2071, %v2075
        %v2077 = vshrl.u32 %v1977, 16
        %v2079 = vrot.slane %v2077, 4
        %v2080 = vor.u32 %v2079, %v2075
        %v2081 = vrot.slane %v2080, 4
        %v2083 = vshll.u32 %v1978, 16
        %v2085 = vrot.slane %v2083, 5
        %v2086 = vsel %vm852, %v2081, %v2085
        %v2088 = vshrl.u32 %v1979, 16
        %v2090 = vrot.slane %v2088, 4
        %v2091 = vshll.u32 %v1979, 16
        %v2093 = vrot.slane %v2091, 5
        %v2094 = vor.u32 %v2090, %v2093
        %v2095 = vrot.slane %v2094, 4
        %v2097 = vshll.u32 %v1980, 16
        %v2099 = vrot.slane %v2097, 5
        %v2100 = vsel %vm852, %v2095, %v2099
        %v2101 = vshrl.u32 %v1980, 16
        %v2103 = vrot.slane %v2101, 4
        %v2104 = vor.u32 %v2103, %v2099
        %v2105 = vrot.slane %v2104, 4
        %v2107 = vshll.u32 %v1981, 16
        %v2109 = vrot.slane %v2107, 5
        %v2110 = vsel %vm852, %v2105, %v2109
        %v2112 = vshrl.u32 %v1982, 16
        %v2114 = vrot.slane %v2112, 4
        %v2115 = vshll.u32 %v1982, 16
        %v2117 = vrot.slane %v2115, 5
        %v2118 = vor.u32 %v2114, %v2117
        %v2119 = vrot.slane %v2118, 4
        %v2121 = vshll.u32 %v1983, 16
        %v2123 = vrot.slane %v2121, 5
        %v2124 = vsel %vm852, %v2119, %v2123
        %v2125 = vshrl.u32 %v1983, 16
        %v2127 = vrot.slane %v2125, 4
        %v2128 = vor.u32 %v2127, %v2123
        %v2129 = vrot.slane %v2128, 4
        %v2131 = vshll.u32 %v1984, 16
        %v2133 = vrot.slane %v2131, 5
        %v2134 = vsel %vm852, %v2129, %v2133
        %v2136 = vshrl.u32 %v1985, 16
        %v2138 = vrot.slane %v2136, 4
        %v2139 = vshll.u32 %v1985, 16
        %v2141 = vrot.slane %v2139, 5
        %v2142 = vor.u32 %v2138, %v2141
        %v2143 = vrot.slane %v2142, 4
        %v2145 = vshll.u32 %v1986, 16
        %v2147 = vrot.slane %v2145, 5
        %v2148 = vsel %vm852, %v2143, %v2147
        %v2149 = vshrl.u32 %v1986, 16
        %v2151 = vrot.slane %v2149, 4
        %v2152 = vor.u32 %v2151, %v2147
        %v2153 = vrot.slane %v2152, 4
        %v2155 = vshll.u32 %v1987, 16
        %v2157 = vrot.slane %v2155, 5
        %v2158 = vsel %vm852, %v2153, %v2157
        %v2160 = vshrl.u32 %v1988, 16
        %v2162 = vrot.slane %v2160, 4
        %v2163 = vshll.u32 %v1988, 16
        %v2165 = vrot.slane %v2163, 5
        %v2166 = vor.u32 %v2162, %v2165
        %v2167 = vrot.slane %v2166, 4
        %v2169 = vshll.u32 %v1989, 16
        %v2171 = vrot.slane %v2169, 5
        %v2172 = vsel %vm852, %v2167, %v2171
        %v2173 = vshrl.u32 %v1989, 16
        %v2175 = vrot.slane %v2173, 4
        %v2176 = vor.u32 %v2175, %v2171
        %v2177 = vrot.slane %v2176, 4
        %v2179 = vshll.u32 %v1990, 16
        %v2181 = vrot.slane %v2179, 5
        %v2182 = vsel %vm852, %v2177, %v2181
        %s2183 = scalar_lea.vmem [#allocation9], 256
        %v2184 = vld [vmem:[%s2183] sm:$0xf]
        %v2185 = vld [vmem:[%s2183 + $0x4] sm:$0xf]
        %v2186 = vld [vmem:[%s2183 + $0x8] sm:$0xf]
        %v2187 = vld [vmem:[%s2183 + $0xc] sm:$0xf]
        %v2188 = vld [vmem:[%s2183 + $0x10] sm:$0xf]
        %v2189 = vld [vmem:[%s2183 + $0x14] sm:$0xf]
        %v2190 = vld [vmem:[%s2183 + $0x18] sm:$0xf]
        %v2191 = vld [vmem:[%s2183 + $0x1c] sm:$0xf]
        %v2192 = vld [vmem:[%s2183 + $0x20] sm:$0xf]
        %v2193 = vld [vmem:[%s2183 + $0x24] sm:$0xf]
        %v2194 = vld [vmem:[%s2183 + $0x28] sm:$0xf]
        %v2195 = vld [vmem:[%s2183 + $0x2c] sm:$0xf]
        %v2196 = vld [vmem:[%s2183 + $0x30] sm:$0xf]
        %v2197 = vld [vmem:[%s2183 + $0x34] sm:$0xf]
        %v2198 = vld [vmem:[%s2183 + $0x38] sm:$0xf]
        %v2199 = vld [vmem:[%s2183 + $0x3c] sm:$0xf]
        %v2200 = vunpack.c.l.b16 %v2004
        %v2201 = vunpack.c.l.b16 %v2014
        %v2202 = vunpack.c.l.b16 %v2028
        %v2203 = vunpack.c.l.b16 %v2038
        %v2204 = vunpack.c.l.b16 %v2052
        %v2205 = vunpack.c.l.b16 %v2062
        %v2206 = vunpack.c.l.b16 %v2076
        %v2207 = vunpack.c.l.b16 %v2086
        %v2208 = vunpack.c.l.b16 %v2100
        %v2209 = vunpack.c.l.b16 %v2110
        %v2210 = vunpack.c.l.b16 %v2124
        %v2211 = vunpack.c.l.b16 %v2134
        %v2212 = vunpack.c.l.b16 %v2148
        %v2213 = vunpack.c.l.b16 %v2158
        %v2214 = vunpack.c.l.b16 %v2172
        %v2215 = vunpack.c.l.b16 %v2182
        %v2216 = vpack.c.b16 %v2201, %v2200
        %v2217 = vpack.c.b16 %v2203, %v2202
        %v2218 = vpack.c.b16 %v2205, %v2204
        %v2219 = vpack.c.b16 %v2207, %v2206
        %v2220 = vpack.c.b16 %v2209, %v2208
        %v2221 = vpack.c.b16 %v2211, %v2210
        %v2222 = vpack.c.b16 %v2213, %v2212
        %v2223 = vpack.c.b16 %v2215, %v2214
        %v2248 = vunpack.c.l.b16 %v2184
        %v2249 = vunpack.c.l.b16 %v2185
        %v2250 = vunpack.c.l.b16 %v2186
        %v2251 = vunpack.c.l.b16 %v2187
        %v2252 = vunpack.c.l.b16 %v2188
        %v2253 = vunpack.c.l.b16 %v2189
        %v2254 = vunpack.c.l.b16 %v2190
        %v2255 = vunpack.c.l.b16 %v2191
        %v2256 = vunpack.c.l.b16 %v2192
        %v2257 = vunpack.c.l.b16 %v2193
        %v2258 = vunpack.c.l.b16 %v2194
        %v2259 = vunpack.c.l.b16 %v2195
        %v2260 = vunpack.c.l.b16 %v2196
        %v2261 = vunpack.c.l.b16 %v2197
        %v2262 = vunpack.c.l.b16 %v2198
        %v2263 = vunpack.c.l.b16 %v2199
        %v2264 = vpack.c.b16 %v2249, %v2248
        %v2265 = vpack.c.b16 %v2251, %v2250
        %v2266 = vpack.c.b16 %v2253, %v2252
        %v2267 = vpack.c.b16 %v2255, %v2254
        %v2268 = vpack.c.b16 %v2257, %v2256
        %v2269 = vpack.c.b16 %v2259, %v2258
        %v2270 = vpack.c.b16 %v2261, %v2260
        %v2271 = vpack.c.b16 %v2263, %v2262
        %2280 = vmatprep.subr.bf16.mxu0 0
        %2281 = vmatpush1.bf16.msra.mxu0 %v2264
        %2282 = vmatprep.subr.bf16.mxu0 0
        %2283 = vmatpush1.bf16.msra.mxu0 %v2265
        %2284 = vmatprep.subr.bf16.mxu0 0
        %2285 = vmatpush1.bf16.msra.mxu0 %v2266
        %2286 = vmatprep.subr.bf16.mxu0 0
        %2287 = vmatpush1.bf16.msra.mxu0 %v2267
        %2288 = vmatprep.subr.bf16.mxu0 0
        %2289 = vmatpush1.bf16.msra.mxu0 %v2268
        %2290 = vmatprep.subr.bf16.mxu0 0
        %2291 = vmatpush1.bf16.msra.mxu0 %v2269
        %2292 = vmatprep.subr.bf16.mxu0 0
        %2293 = vmatpush1.bf16.msra.mxu0 %v2270
        %2294 = vmatprep.subr.bf16.mxu0 0
        %2295 = vmatpush1.bf16.msra.mxu0 %v2271
        %2296 = vmatprep.subr.bf16.mxu0 0
        %2297 = vmatpush1.bf16.msra.mxu0 0
        %2298 = vmatprep.subr.bf16.mxu0 0
        %2299 = vmatpush1.bf16.msra.mxu0 0
        %2300 = vmatprep.subr.bf16.mxu0 0
        %2301 = vmatpush1.bf16.msra.mxu0 0
        %2302 = vmatprep.subr.bf16.mxu0 0
        %2303 = vmatpush1.bf16.msra.mxu0 0
        %2304 = vmatprep.subr.bf16.mxu0 0
        %2305 = vmatpush1.bf16.msra.mxu0 0
        %2306 = vmatprep.subr.bf16.mxu0 0
        %2307 = vmatpush1.bf16.msra.mxu0 0
        %2308 = vmatprep.subr.bf16.mxu0 0
        %2309 = vmatpush1.bf16.msra.mxu0 0
        %2310 = vmatprep.subr.bf16.mxu0 0
        %2311 = vmatpush1.bf16.msra.mxu0 0
        %2312 = vmatprep.mubr.bf16.mxu0 0
        %2313 = vmatmul.mubr.bf16.gmra.mrb[0].mxu0 %v2216
        %v2314 = vpop.f32.mrb[0].mxu0
        %v2315 = vadd.f32 0.0, %v2314
        %v2316 = vpop.f32.mrb[0].mxu0
        %v2317 = vpop.f32.mrb[0].mxu0
        %v2318 = vadd.f32 0.0, %v2317
        %v2319 = vpop.f32.mrb[0].mxu0
        %2320 = vmatprep.mubr.bf16.mxu0 0
        %2321 = vmatmul.mubr.bf16.gmra.mrb[0].mxu0 %v2217
        %v2322 = vpop.f32.mrb[0].mxu0
        %v2323 = vadd.f32 0.0, %v2322
        %v2324 = vpop.f32.mrb[0].mxu0
        %v2325 = vpop.f32.mrb[0].mxu0
        %v2326 = vadd.f32 0.0, %v2325
        %v2327 = vpop.f32.mrb[0].mxu0
        %2328 = vmatprep.mubr.bf16.mxu0 0
        %2329 = vmatmul.mubr.bf16.gmra.mrb[0].mxu0 %v2218
        %v2330 = vpop.f32.mrb[0].mxu0
        %v2331 = vadd.f32 0.0, %v2330
        %v2332 = vpop.f32.mrb[0].mxu0
        %v2333 = vpop.f32.mrb[0].mxu0
        %v2334 = vadd.f32 0.0, %v2333
        %v2335 = vpop.f32.mrb[0].mxu0
        %2336 = vmatprep.mubr.bf16.mxu0 0
        %2337 = vmatmul.mubr.bf16.gmra.mrb[0].mxu0 %v2219
        %v2338 = vpop.f32.mrb[0].mxu0
        %v2339 = vadd.f32 0.0, %v2338
        %v2340 = vpop.f32.mrb[0].mxu0
        %v2341 = vpop.f32.mrb[0].mxu0
        %v2342 = vadd.f32 0.0, %v2341
        %v2343 = vpop.f32.mrb[0].mxu0
        %2344 = vmatprep.mubr.bf16.mxu0 0
        %2345 = vmatmul.mubr.bf16.gmra.mrb[0].mxu0 %v2220
        %v2346 = vpop.f32.mrb[0].mxu0
        %v2347 = vadd.f32 0.0, %v2346
        %v2348 = vpop.f32.mrb[0].mxu0
        %v2349 = vpop.f32.mrb[0].mxu0
        %v2350 = vadd.f32 0.0, %v2349
        %v2351 = vpop.f32.mrb[0].mxu0
        %2352 = vmatprep.mubr.bf16.mxu0 0
        %2353 = vmatmul.mubr.bf16.gmra.mrb[0].mxu0 %v2221
        %v2354 = vpop.f32.mrb[0].mxu0
        %v2355 = vadd.f32 0.0, %v2354
        %v2356 = vpop.f32.mrb[0].mxu0
        %v2357 = vpop.f32.mrb[0].mxu0
        %v2358 = vadd.f32 0.0, %v2357
        %v2359 = vpop.f32.mrb[0].mxu0
        %2360 = vmatprep.mubr.bf16.mxu0 0
        %2361 = vmatmul.mubr.bf16.gmra.mrb[0].mxu0 %v2222
        %v2362 = vpop.f32.mrb[0].mxu0
        %v2363 = vadd.f32 0.0, %v2362
        %v2364 = vpop.f32.mrb[0].mxu0
        %v2365 = vpop.f32.mrb[0].mxu0
        %v2366 = vadd.f32 0.0, %v2365
        %v2367 = vpop.f32.mrb[0].mxu0
        %2368 = vmatprep.mubr.bf16.mxu0 0
        %2369 = vmatmul.mubr.bf16.gmra.mrb[0].mxu0 %v2223
        %v2370 = vpop.f32.mrb[0].mxu0
        %v2371 = vadd.f32 0.0, %v2370
        %v2372 = vpop.f32.mrb[0].mxu0
        %v2373 = vpop.f32.mrb[0].mxu0
        %v2374 = vadd.f32 0.0, %v2373
        %v2375 = vpop.f32.mrb[0].mxu0
        %2376 = vdwg.mxu0
        %v2377 = vadd.f32 %v1951, %v2315
        %v2378 = vadd.f32 %v1952, %v2318
        %v2379 = vadd.f32 %v1953, %v2323
        %v2380 = vadd.f32 %v1954, %v2326
        %v2381 = vadd.f32 %v1955, %v2331
        %v2382 = vadd.f32 %v1956, %v2334
        %v2383 = vadd.f32 %v1957, %v2339
        %v2384 = vadd.f32 %v1958, %v2342
        %v2385 = vadd.f32 %v1959, %v2347
        %v2386 = vadd.f32 %v1960, %v2350
        %v2387 = vadd.f32 %v1961, %v2355
        %v2388 = vadd.f32 %v1962, %v2358
        %v2389 = vadd.f32 %v1963, %v2363
        %v2390 = vadd.f32 %v1964, %v2366
        %v2391 = vadd.f32 %v1965, %v2371
        %v2392 = vadd.f32 %v1966, %v2374
        %v2393 = vld [vmem:[%s680] sm:$0xe]
        %v2394 = vld [vmem:[%s680 + $0xc] sm:$0xe]
        %v2395 = vld [vmem:[%s680 + $0x18] sm:$0xe]
        %v2396 = vld [vmem:[%s680 + $0x24] sm:$0xe]
        %v2397 = vld [vmem:[%s680 + $0x30] sm:$0xe]
        %v2398 = vld [vmem:[%s680 + $0x3c] sm:$0xe]
        %v2399 = vld [vmem:[%s680 + $0x48] sm:$0xe]
        %v2400 = vld [vmem:[%s680 + $0x54] sm:$0xe]
        %v2425 = vrot.slane %v2393, 5
        %v2426 = vrot.slane %v2425, 4
        %v2427 = vrot.slane %v1968, 5
        %v2428 = vsel %vm1458, %v2426, %v2427
        %v2429 = vrot.slane %v2427, 4
        %v2430 = vrot.slane %v1969, 5
        %v2431 = vsel %vm1458, %v2429, %v2430
        %v2432 = vrot.slane %v2394, 5
        %v2433 = vrot.slane %v2432, 4
        %v2434 = vrot.slane %v1971, 5
        %v2435 = vsel %vm1458, %v2433, %v2434
        %v2436 = vrot.slane %v2434, 4
        %v2437 = vrot.slane %v1972, 5
        %v2438 = vsel %vm1458, %v2436, %v2437
        %v2439 = vrot.slane %v2395, 5
        %v2440 = vrot.slane %v2439, 4
        %v2441 = vrot.slane %v1974, 5
        %v2442 = vsel %vm1458, %v2440, %v2441
        %v2443 = vrot.slane %v2441, 4
        %v2444 = vrot.slane %v1975, 5
        %v2445 = vsel %vm1458, %v2443, %v2444
        %v2446 = vrot.slane %v2396, 5
        %v2447 = vrot.slane %v2446, 4
        %v2448 = vrot.slane %v1977, 5
        %v2449 = vsel %vm1458, %v2447, %v2448
        %v2450 = vrot.slane %v2448, 4
        %v2451 = vrot.slane %v1978, 5
        %v2452 = vsel %vm1458, %v2450, %v2451
        %v2453 = vrot.slane %v2397, 5
        %v2454 = vrot.slane %v2453, 4
        %v2455 = vrot.slane %v1980, 5
        %v2456 = vsel %vm1458, %v2454, %v2455
        %v2457 = vrot.slane %v2455, 4
        %v2458 = vrot.slane %v1981, 5
        %v2459 = vsel %vm1458, %v2457, %v2458
        %v2460 = vrot.slane %v2398, 5
        %v2461 = vrot.slane %v2460, 4
        %v2462 = vrot.slane %v1983, 5
        %v2463 = vsel %vm1458, %v2461, %v2462
        %v2464 = vrot.slane %v2462, 4
        %v2465 = vrot.slane %v1984, 5
        %v2466 = vsel %vm1458, %v2464, %v2465
        %v2467 = vrot.slane %v2399, 5
        %v2468 = vrot.slane %v2467, 4
        %v2469 = vrot.slane %v1986, 5
        %v2470 = vsel %vm1458, %v2468, %v2469
        %v2471 = vrot.slane %v2469, 4
        %v2472 = vrot.slane %v1987, 5
        %v2473 = vsel %vm1458, %v2471, %v2472
        %v2474 = vrot.slane %v2400, 5
        %v2475 = vrot.slane %v2474, 4
        %v2476 = vrot.slane %v1989, 5
        %v2477 = vsel %vm1458, %v2475, %v2476
        %v2478 = vrot.slane %v2476, 4
        %v2479 = vrot.slane %v1990, 5
        %v2480 = vsel %vm1458, %v2478, %v2479
        %s2481 = scalar_lea.vmem [#allocation9], 320
        %v2482 = vld [vmem:[%s2481] sm:$0xf]
        %v2483 = vld [vmem:[%s2481 + $0x4] sm:$0xf]
        %v2484 = vld [vmem:[%s2481 + $0x8] sm:$0xf]
        %v2485 = vld [vmem:[%s2481 + $0xc] sm:$0xf]
        %v2486 = vld [vmem:[%s2481 + $0x10] sm:$0xf]
        %v2487 = vld [vmem:[%s2481 + $0x14] sm:$0xf]
        %v2488 = vld [vmem:[%s2481 + $0x18] sm:$0xf]
        %v2489 = vld [vmem:[%s2481 + $0x1c] sm:$0xf]
        %v2490 = vld [vmem:[%s2481 + $0x20] sm:$0xf]
        %v2491 = vld [vmem:[%s2481 + $0x24] sm:$0xf]
        %v2492 = vld [vmem:[%s2481 + $0x28] sm:$0xf]
        %v2493 = vld [vmem:[%s2481 + $0x2c] sm:$0xf]
        %v2494 = vld [vmem:[%s2481 + $0x30] sm:$0xf]
        %v2495 = vld [vmem:[%s2481 + $0x34] sm:$0xf]
        %v2496 = vld [vmem:[%s2481 + $0x38] sm:$0xf]
        %v2497 = vld [vmem:[%s2481 + $0x3c] sm:$0xf]
        %v2498 = vunpack.c.l.b16 %v2428
        %v2499 = vunpack.c.l.b16 %v2431
        %v2500 = vunpack.c.l.b16 %v2435
        %v2501 = vunpack.c.l.b16 %v2438
        %v2502 = vunpack.c.l.b16 %v2442
        %v2503 = vunpack.c.l.b16 %v2445
        %v2504 = vunpack.c.l.b16 %v2449
        %v2505 = vunpack.c.l.b16 %v2452
        %v2506 = vunpack.c.l.b16 %v2456
        %v2507 = vunpack.c.l.b16 %v2459
        %v2508 = vunpack.c.l.b16 %v2463
        %v2509 = vunpack.c.l.b16 %v2466
        %v2510 = vunpack.c.l.b16 %v2470
        %v2511 = vunpack.c.l.b16 %v2473
        %v2512 = vunpack.c.l.b16 %v2477
        %v2513 = vunpack.c.l.b16 %v2480
        %v2514 = vpack.c.b16 %v2499, %v2498
        %v2515 = vpack.c.b16 %v2501, %v2500
        %v2516 = vpack.c.b16 %v2503, %v2502
        %v2517 = vpack.c.b16 %v2505, %v2504
        %v2518 = vpack.c.b16 %v2507, %v2506
        %v2519 = vpack.c.b16 %v2509, %v2508
        %v2520 = vpack.c.b16 %v2511, %v2510
        %v2521 = vpack.c.b16 %v2513, %v2512
        %v2546 = vunpack.c.l.b16 %v2482
        %v2547 = vunpack.c.l.b16 %v2483
        %v2548 = vunpack.c.l.b16 %v2484
        %v2549 = vunpack.c.l.b16 %v2485
        %v2550 = vunpack.c.l.b16 %v2486
        %v2551 = vunpack.c.l.b16 %v2487
        %v2552 = vunpack.c.l.b16 %v2488
        %v2553 = vunpack.c.l.b16 %v2489
        %v2554 = vunpack.c.l.b16 %v2490
        %v2555 = vunpack.c.l.b16 %v2491
        %v2556 = vunpack.c.l.b16 %v2492
        %v2557 = vunpack.c.l.b16 %v2493
        %v2558 = vunpack.c.l.b16 %v2494
        %v2559 = vunpack.c.l.b16 %v2495
        %v2560 = vunpack.c.l.b16 %v2496
        %v2561 = vunpack.c.l.b16 %v2497
        %v2562 = vpack.c.b16 %v2547, %v2546
        %v2563 = vpack.c.b16 %v2549, %v2548
        %v2564 = vpack.c.b16 %v2551, %v2550
        %v2565 = vpack.c.b16 %v2553, %v2552
        %v2566 = vpack.c.b16 %v2555, %v2554
        %v2567 = vpack.c.b16 %v2557, %v2556
        %v2568 = vpack.c.b16 %v2559, %v2558
        %v2569 = vpack.c.b16 %v2561, %v2560
        %2578 = vmatprep.subr.bf16.mxu0 0
        %2579 = vmatpush1.bf16.msra.mxu0 %v2562
        %2580 = vmatprep.subr.bf16.mxu0 0
        %2581 = vmatpush1.bf16.msra.mxu0 %v2563
        %2582 = vmatprep.subr.bf16.mxu0 0
        %2583 = vmatpush1.bf16.msra.mxu0 %v2564
        %2584 = vmatprep.subr.bf16.mxu0 0
        %2585 = vmatpush1.bf16.msra.mxu0 %v2565
        %2586 = vmatprep.subr.bf16.mxu0 0
        %2587 = vmatpush1.bf16.msra.mxu0 %v2566
        %2588 = vmatprep.subr.bf16.mxu0 0
        %2589 = vmatpush1.bf16.msra.mxu0 %v2567
        %2590 = vmatprep.subr.bf16.mxu0 0
        %2591 = vmatpush1.bf16.msra.mxu0 %v2568
        %2592 = vmatprep.subr.bf16.mxu0 0
        %2593 = vmatpush1.bf16.msra.mxu0 %v2569
        %2594 = vmatprep.subr.bf16.mxu0 0
        %2595 = vmatpush1.bf16.msra.mxu0 0
        %2596 = vmatprep.subr.bf16.mxu0 0
        %2597 = vmatpush1.bf16.msra.mxu0 0
        %2598 = vmatprep.subr.bf16.mxu0 0
        %2599 = vmatpush1.bf16.msra.mxu0 0
        %2600 = vmatprep.subr.bf16.mxu0 0
        %2601 = vmatpush1.bf16.msra.mxu0 0
        %2602 = vmatprep.subr.bf16.mxu0 0
        %2603 = vmatpush1.bf16.msra.mxu0 0
        %2604 = vmatprep.subr.bf16.mxu0 0
        %2605 = vmatpush1.bf16.msra.mxu0 0
        %2606 = vmatprep.subr.bf16.mxu0 0
        %2607 = vmatpush1.bf16.msra.mxu0 0
        %2608 = vmatprep.subr.bf16.mxu0 0
        %2609 = vmatpush1.bf16.msra.mxu0 0
        %2610 = vmatprep.mubr.bf16.mxu0 0
        %2611 = vmatmul.mubr.bf16.gmra.mrb[0].mxu0 %v2514
        %v2612 = vpop.f32.mrb[0].mxu0
        %v2613 = vadd.f32 0.0, %v2612
        %v2614 = vpop.f32.mrb[0].mxu0
        %v2615 = vpop.f32.mrb[0].mxu0
        %v2616 = vadd.f32 0.0, %v2615
        %v2617 = vpop.f32.mrb[0].mxu0
        %2618 = vmatprep.mubr.bf16.mxu0 0
        %2619 = vmatmul.mubr.bf16.gmra.mrb[0].mxu0 %v2515
        %v2620 = vpop.f32.mrb[0].mxu0
        %v2621 = vadd.f32 0.0, %v2620
        %v2622 = vpop.f32.mrb[0].mxu0
        %v2623 = vpop.f32.mrb[0].mxu0
        %v2624 = vadd.f32 0.0, %v2623
        %v2625 = vpop.f32.mrb[0].mxu0
        %2626 = vmatprep.mubr.bf16.mxu0 0
        %2627 = vmatmul.mubr.bf16.gmra.mrb[0].mxu0 %v2516
        %v2628 = vpop.f32.mrb[0].mxu0
        %v2629 = vadd.f32 0.0, %v2628
        %v2630 = vpop.f32.mrb[0].mxu0
        %v2631 = vpop.f32.mrb[0].mxu0
        %v2632 = vadd.f32 0.0, %v2631
        %v2633 = vpop.f32.mrb[0].mxu0
        %2634 = vmatprep.mubr.bf16.mxu0 0
        %2635 = vmatmul.mubr.bf16.gmra.mrb[0].mxu0 %v2517
        %v2636 = vpop.f32.mrb[0].mxu0
        %v2637 = vadd.f32 0.0, %v2636
        %v2638 = vpop.f32.mrb[0].mxu0
        %v2639 = vpop.f32.mrb[0].mxu0
        %v2640 = vadd.f32 0.0, %v2639
        %v2641 = vpop.f32.mrb[0].mxu0
        %2642 = vmatprep.mubr.bf16.mxu0 0
        %2643 = vmatmul.mubr.bf16.gmra.mrb[0].mxu0 %v2518
        %v2644 = vpop.f32.mrb[0].mxu0
        %v2645 = vadd.f32 0.0, %v2644
        %v2646 = vpop.f32.mrb[0].mxu0
        %v2647 = vpop.f32.mrb[0].mxu0
        %v2648 = vadd.f32 0.0, %v2647
        %v2649 = vpop.f32.mrb[0].mxu0
        %2650 = vmatprep.mubr.bf16.mxu0 0
        %2651 = vmatmul.mubr.bf16.gmra.mrb[0].mxu0 %v2519
        %v2652 = vpop.f32.mrb[0].mxu0
        %v2653 = vadd.f32 0.0, %v2652
        %v2654 = vpop.f32.mrb[0].mxu0
        %v2655 = vpop.f32.mrb[0].mxu0
        %v2656 = vadd.f32 0.0, %v2655
        %v2657 = vpop.f32.mrb[0].mxu0
        %2658 = vmatprep.mubr.bf16.mxu0 0
        %2659 = vmatmul.mubr.bf16.gmra.mrb[0].mxu0 %v2520
        %v2660 = vpop.f32.mrb[0].mxu0
        %v2661 = vadd.f32 0.0, %v2660
        %v2662 = vpop.f32.mrb[0].mxu0
        %v2663 = vpop.f32.mrb[0].mxu0
        %v2664 = vadd.f32 0.0, %v2663
        %v2665 = vpop.f32.mrb[0].mxu0
        %2666 = vmatprep.mubr.bf16.mxu0 0
        %2667 = vmatmul.mubr.bf16.gmra.mrb[0].mxu0 %v2521
        %v2668 = vpop.f32.mrb[0].mxu0
        %v2669 = vadd.f32 0.0, %v2668
        %v2670 = vpop.f32.mrb[0].mxu0
        %v2671 = vpop.f32.mrb[0].mxu0
        %v2672 = vadd.f32 0.0, %v2671
        %v2673 = vpop.f32.mrb[0].mxu0
        %2674 = vdwg.mxu0
        %v2675 = vadd.f32 %v2377, %v2613
        %v2676 = vadd.f32 %v2378, %v2616
        %v2677 = vadd.f32 %v2379, %v2621
        %v2678 = vadd.f32 %v2380, %v2624
        %v2679 = vadd.f32 %v2381, %v2629
        %v2680 = vadd.f32 %v2382, %v2632
        %v2681 = vadd.f32 %v2383, %v2637
        %v2682 = vadd.f32 %v2384, %v2640
        %v2683 = vadd.f32 %v2385, %v2645
        %v2684 = vadd.f32 %v2386, %v2648
        %v2685 = vadd.f32 %v2387, %v2653
        %v2686 = vadd.f32 %v2388, %v2656
        %v2687 = vadd.f32 %v2389, %v2661
        %v2688 = vadd.f32 %v2390, %v2664
        %v2689 = vadd.f32 %v2391, %v2669
        %v2690 = vadd.f32 %v2392, %v2672
        %s2691 = scalar_lea.vmem [#allocation2], 24
        %v2692 = vld [vmem:[%s2691] sm:$0xf]
        %v2693 = vld [vmem:[%s2691 + $0x4] sm:$0xf]
        %v2694 = vld [vmem:[%s2691 + $0xc] sm:$0xf]
        %v2695 = vld [vmem:[%s2691 + $0x10] sm:$0xf]
        %v2696 = vld [vmem:[%s2691 + $0x18] sm:$0xf]
        %v2697 = vld [vmem:[%s2691 + $0x1c] sm:$0xf]
        %v2698 = vld [vmem:[%s2691 + $0x24] sm:$0xf]
        %v2699 = vld [vmem:[%s2691 + $0x28] sm:$0xf]
        %v2700 = vld [vmem:[%s2691 + $0x30] sm:$0xf]
        %v2701 = vld [vmem:[%s2691 + $0x34] sm:$0xf]
        %v2702 = vld [vmem:[%s2691 + $0x3c] sm:$0xf]
        %v2703 = vld [vmem:[%s2691 + $0x40] sm:$0xf]
        %v2704 = vld [vmem:[%s2691 + $0x48] sm:$0xf]
        %v2705 = vld [vmem:[%s2691 + $0x4c] sm:$0xf]
        %v2706 = vld [vmem:[%s2691 + $0x54] sm:$0xf]
        %v2707 = vld [vmem:[%s2691 + $0x58] sm:$0xf]
        %s2708 = scalar_lea.vmem [#allocation9], 384
        %v2709 = vld [vmem:[%s2708] sm:$0xf]
        %v2710 = vld [vmem:[%s2708 + $0x4] sm:$0xf]
        %v2711 = vld [vmem:[%s2708 + $0x8] sm:$0xf]
        %v2712 = vld [vmem:[%s2708 + $0xc] sm:$0xf]
        %v2713 = vld [vmem:[%s2708 + $0x10] sm:$0xf]
        %v2714 = vld [vmem:[%s2708 + $0x14] sm:$0xf]
        %v2715 = vld [vmem:[%s2708 + $0x18] sm:$0xf]
        %v2716 = vld [vmem:[%s2708 + $0x1c] sm:$0xf]
        %v2717 = vld [vmem:[%s2708 + $0x20] sm:$0xf]
        %v2718 = vld [vmem:[%s2708 + $0x24] sm:$0xf]
        %v2719 = vld [vmem:[%s2708 + $0x28] sm:$0xf]
        %v2720 = vld [vmem:[%s2708 + $0x2c] sm:$0xf]
        %v2721 = vld [vmem:[%s2708 + $0x30] sm:$0xf]
        %v2722 = vld [vmem:[%s2708 + $0x34] sm:$0xf]
        %v2723 = vld [vmem:[%s2708 + $0x38] sm:$0xf]
        %v2724 = vld [vmem:[%s2708 + $0x3c] sm:$0xf]
        %v2741 = vunpack.c.l.b16 %v2692
        %v2742 = vunpack.c.l.b16 %v2693
        %v2743 = vunpack.c.l.b16 %v2694
        %v2744 = vunpack.c.l.b16 %v2695
        %v2745 = vunpack.c.l.b16 %v2696
        %v2746 = vunpack.c.l.b16 %v2697
        %v2747 = vunpack.c.l.b16 %v2698
        %v2748 = vunpack.c.l.b16 %v2699
        %v2749 = vunpack.c.l.b16 %v2700
        %v2750 = vunpack.c.l.b16 %v2701
        %v2751 = vunpack.c.l.b16 %v2702
        %v2752 = vunpack.c.l.b16 %v2703
        %v2753 = vunpack.c.l.b16 %v2704
        %v2754 = vunpack.c.l.b16 %v2705
        %v2755 = vunpack.c.l.b16 %v2706
        %v2756 = vunpack.c.l.b16 %v2707
        %v2757 = vpack.c.b16 %v2742, %v2741
        %v2758 = vpack.c.b16 %v2744, %v2743
        %v2759 = vpack.c.b16 %v2746, %v2745
        %v2760 = vpack.c.b16 %v2748, %v2747
        %v2761 = vpack.c.b16 %v2750, %v2749
        %v2762 = vpack.c.b16 %v2752, %v2751
        %v2763 = vpack.c.b16 %v2754, %v2753
        %v2764 = vpack.c.b16 %v2756, %v2755
        %v2789 = vunpack.c.l.b16 %v2709
        %v2790 = vunpack.c.l.b16 %v2710
        %v2791 = vunpack.c.l.b16 %v2711
        %v2792 = vunpack.c.l.b16 %v2712
        %v2793 = vunpack.c.l.b16 %v2713
        %v2794 = vunpack.c.l.b16 %v2714
        %v2795 = vunpack.c.l.b16 %v2715
        %v2796 = vunpack.c.l.b16 %v2716
        %v2797 = vunpack.c.l.b16 %v2717
        %v2798 = vunpack.c.l.b16 %v2718
        %v2799 = vunpack.c.l.b16 %v2719
        %v2800 = vunpack.c.l.b16 %v2720
        %v2801 = vunpack.c.l.b16 %v2721
        %v2802 = vunpack.c.l.b16 %v2722
        %v2803 = vunpack.c.l.b16 %v2723
        %v2804 = vunpack.c.l.b16 %v2724
        %v2805 = vpack.c.b16 %v2790, %v2789
        %v2806 = vpack.c.b16 %v2792, %v2791
        %v2807 = vpack.c.b16 %v2794, %v2793
        %v2808 = vpack.c.b16 %v2796, %v2795
        %v2809 = vpack.c.b16 %v2798, %v2797
        %v2810 = vpack.c.b16 %v2800, %v2799
        %v2811 = vpack.c.b16 %v2802, %v2801
        %v2812 = vpack.c.b16 %v2804, %v2803
        %2821 = vmatprep.subr.bf16.mxu0 0
        %2822 = vmatpush1.bf16.msra.mxu0 %v2805
        %2823 = vmatprep.subr.bf16.mxu0 0
        %2824 = vmatpush1.bf16.msra.mxu0 %v2806
        %2825 = vmatprep.subr.bf16.mxu0 0
        %2826 = vmatpush1.bf16.msra.mxu0 %v2807
        %2827 = vmatprep.subr.bf16.mxu0 0
        %2828 = vmatpush1.bf16.msra.mxu0 %v2808
        %2829 = vmatprep.subr.bf16.mxu0 0
        %2830 = vmatpush1.bf16.msra.mxu0 %v2809
        %2831 = vmatprep.subr.bf16.mxu0 0
        %2832 = vmatpush1.bf16.msra.mxu0 %v2810
        %2833 = vmatprep.subr.bf16.mxu0 0
        %2834 = vmatpush1.bf16.msra.mxu0 %v2811
        %2835 = vmatprep.subr.bf16.mxu0 0
        %2836 = vmatpush1.bf16.msra.mxu0 %v2812
        %2837 = vmatprep.subr.bf16.mxu0 0
        %2838 = vmatpush1.bf16.msra.mxu0 0
        %2839 = vmatprep.subr.bf16.mxu0 0
        %2840 = vmatpush1.bf16.msra.mxu0 0
        %2841 = vmatprep.subr.bf16.mxu0 0
        %2842 = vmatpush1.bf16.msra.mxu0 0
        %2843 = vmatprep.subr.bf16.mxu0 0
        %2844 = vmatpush1.bf16.msra.mxu0 0
        %2845 = vmatprep.subr.bf16.mxu0 0
        %2846 = vmatpush1.bf16.msra.mxu0 0
        %2847 = vmatprep.subr.bf16.mxu0 0
        %2848 = vmatpush1.bf16.msra.mxu0 0
        %2849 = vmatprep.subr.bf16.mxu0 0
        %2850 = vmatpush1.bf16.msra.mxu0 0
        %2851 = vmatprep.subr.bf16.mxu0 0
        %2852 = vmatpush1.bf16.msra.mxu0 0
        %2853 = vmatprep.mubr.bf16.mxu0 0
        %2854 = vmatmul.mubr.bf16.gmra.mrb[0].mxu0 %v2757
        %v2855 = vpop.f32.mrb[0].mxu0
        %v2856 = vadd.f32 0.0, %v2855
        %v2857 = vpop.f32.mrb[0].mxu0
        %v2858 = vpop.f32.mrb[0].mxu0
        %v2859 = vadd.f32 0.0, %v2858
        %v2860 = vpop.f32.mrb[0].mxu0
        %2861 = vmatprep.mubr.bf16.mxu0 0
        %2862 = vmatmul.mubr.bf16.gmra.mrb[0].mxu0 %v2758
        %v2863 = vpop.f32.mrb[0].mxu0
        %v2864 = vadd.f32 0.0, %v2863
        %v2865 = vpop.f32.mrb[0].mxu0
        %v2866 = vpop.f32.mrb[0].mxu0
        %v2867 = vadd.f32 0.0, %v2866
        %v2868 = vpop.f32.mrb[0].mxu0
        %2869 = vmatprep.mubr.bf16.mxu0 0
        %2870 = vmatmul.mubr.bf16.gmra.mrb[0].mxu0 %v2759
        %v2871 = vpop.f32.mrb[0].mxu0
        %v2872 = vadd.f32 0.0, %v2871
        %v2873 = vpop.f32.mrb[0].mxu0
        %v2874 = vpop.f32.mrb[0].mxu0
        %v2875 = vadd.f32 0.0, %v2874
        %v2876 = vpop.f32.mrb[0].mxu0
        %2877 = vmatprep.mubr.bf16.mxu0 0
        %2878 = vmatmul.mubr.bf16.gmra.mrb[0].mxu0 %v2760
        %v2879 = vpop.f32.mrb[0].mxu0
        %v2880 = vadd.f32 0.0, %v2879
        %v2881 = vpop.f32.mrb[0].mxu0
        %v2882 = vpop.f32.mrb[0].mxu0
        %v2883 = vadd.f32 0.0, %v2882
        %v2884 = vpop.f32.mrb[0].mxu0
        %2885 = vmatprep.mubr.bf16.mxu0 0
        %2886 = vmatmul.mubr.bf16.gmra.mrb[0].mxu0 %v2761
        %v2887 = vpop.f32.mrb[0].mxu0
        %v2888 = vadd.f32 0.0, %v2887
        %v2889 = vpop.f32.mrb[0].mxu0
        %v2890 = vpop.f32.mrb[0].mxu0
        %v2891 = vadd.f32 0.0, %v2890
        %v2892 = vpop.f32.mrb[0].mxu0
        %2893 = vmatprep.mubr.bf16.mxu0 0
        %2894 = vmatmul.mubr.bf16.gmra.mrb[0].mxu0 %v2762
        %v2895 = vpop.f32.mrb[0].mxu0
        %v2896 = vadd.f32 0.0, %v2895
        %v2897 = vpop.f32.mrb[0].mxu0
        %v2898 = vpop.f32.mrb[0].mxu0
        %v2899 = vadd.f32 0.0, %v2898
        %v2900 = vpop.f32.mrb[0].mxu0
        %2901 = vmatprep.mubr.bf16.mxu0 0
        %2902 = vmatmul.mubr.bf16.gmra.mrb[0].mxu0 %v2763
        %v2903 = vpop.f32.mrb[0].mxu0
        %v2904 = vadd.f32 0.0, %v2903
        %v2905 = vpop.f32.mrb[0].mxu0
        %v2906 = vpop.f32.mrb[0].mxu0
        %v2907 = vadd.f32 0.0, %v2906
        %v2908 = vpop.f32.mrb[0].mxu0
        %2909 = vmatprep.mubr.bf16.mxu0 0
        %2910 = vmatmul.mubr.bf16.gmra.mrb[0].mxu0 %v2764
        %v2911 = vpop.f32.mrb[0].mxu0
        %v2912 = vadd.f32 0.0, %v2911
        %v2913 = vpop.f32.mrb[0].mxu0
        %v2914 = vpop.f32.mrb[0].mxu0
        %v2915 = vadd.f32 0.0, %v2914
        %v2916 = vpop.f32.mrb[0].mxu0
        %2917 = vdwg.mxu0
        %v2918 = vadd.f32 %v2675, %v2856
        %v2919 = vadd.f32 %v2676, %v2859
        %v2920 = vadd.f32 %v2677, %v2864
        %v2921 = vadd.f32 %v2678, %v2867
        %v2922 = vadd.f32 %v2679, %v2872
        %v2923 = vadd.f32 %v2680, %v2875
        %v2924 = vadd.f32 %v2681, %v2880
        %v2925 = vadd.f32 %v2682, %v2883
        %v2926 = vadd.f32 %v2683, %v2888
        %v2927 = vadd.f32 %v2684, %v2891
        %v2928 = vadd.f32 %v2685, %v2896
        %v2929 = vadd.f32 %v2686, %v2899
        %v2930 = vadd.f32 %v2687, %v2904
        %v2931 = vadd.f32 %v2688, %v2907
        %v2932 = vadd.f32 %v2689, %v2912
        %v2933 = vadd.f32 %v2690, %v2915
        %v2934 = vld [vmem:[%s2691] sm:$0xf]
        %v2935 = vld [vmem:[%s2691 + $0x4] sm:$0xf]
        %v2936 = vld [vmem:[%s2691 + $0x8] sm:$0x1]
        %v2937 = vld [vmem:[%s2691 + $0xc] sm:$0xf]
        %v2938 = vld [vmem:[%s2691 + $0x10] sm:$0xf]
        %v2939 = vld [vmem:[%s2691 + $0x14] sm:$0x1]
        %v2940 = vld [vmem:[%s2691 + $0x18] sm:$0xf]
        %v2941 = vld [vmem:[%s2691 + $0x1c] sm:$0xf]
        %v2942 = vld [vmem:[%s2691 + $0x20] sm:$0x1]
        %v2943 = vld [vmem:[%s2691 + $0x24] sm:$0xf]
        %v2944 = vld [vmem:[%s2691 + $0x28] sm:$0xf]
        %v2945 = vld [vmem:[%s2691 + $0x2c] sm:$0x1]
        %v2946 = vld [vmem:[%s2691 + $0x30] sm:$0xf]
        %v2947 = vld [vmem:[%s2691 + $0x34] sm:$0xf]
        %v2948 = vld [vmem:[%s2691 + $0x38] sm:$0x1]
        %v2949 = vld [vmem:[%s2691 + $0x3c] sm:$0xf]
        %v2950 = vld [vmem:[%s2691 + $0x40] sm:$0xf]
        %v2951 = vld [vmem:[%s2691 + $0x44] sm:$0x1]
        %v2952 = vld [vmem:[%s2691 + $0x48] sm:$0xf]
        %v2953 = vld [vmem:[%s2691 + $0x4c] sm:$0xf]
        %v2954 = vld [vmem:[%s2691 + $0x50] sm:$0x1]
        %v2955 = vld [vmem:[%s2691 + $0x54] sm:$0xf]
        %v2956 = vld [vmem:[%s2691 + $0x58] sm:$0xf]
        %v2957 = vld [vmem:[%s2691 + $0x5c] sm:$0x1]
        %v2959 = vshrl.u32 %v2934, 16
        %v2961 = vrot.slane %v2959, 4
        %v2962 = vshll.u32 %v2934, 16
        %v2964 = vrot.slane %v2962, 5
        %v2965 = vor.u32 %v2961, %v2964
        %v2966 = vrot.slane %v2965, 4
        %v2968 = vshll.u32 %v2935, 16
        %v2970 = vrot.slane %v2968, 5
        %v2971 = vsel %vm852, %v2966, %v2970
        %v2972 = vshrl.u32 %v2935, 16
        %v2974 = vrot.slane %v2972, 4
        %v2975 = vor.u32 %v2974, %v2970
        %v2976 = vrot.slane %v2975, 4
        %v2978 = vshll.u32 %v2936, 16
        %v2980 = vrot.slane %v2978, 5
        %v2981 = vsel %vm852, %v2976, %v2980
        %v2983 = vshrl.u32 %v2937, 16
        %v2985 = vrot.slane %v2983, 4
        %v2986 = vshll.u32 %v2937, 16
        %v2988 = vrot.slane %v2986, 5
        %v2989 = vor.u32 %v2985, %v2988
        %v2990 = vrot.slane %v2989, 4
        %v2992 = vshll.u32 %v2938, 16
        %v2994 = vrot.slane %v2992, 5
        %v2995 = vsel %vm852, %v2990, %v2994
        %v2996 = vshrl.u32 %v2938, 16
        %v2998 = vrot.slane %v2996, 4
        %v2999 = vor.u32 %v2998, %v2994
        %v3000 = vrot.slane %v2999, 4
        %v3002 = vshll.u32 %v2939, 16
        %v3004 = vrot.slane %v3002, 5
        %v3005 = vsel %vm852, %v3000, %v3004
        %v3007 = vshrl.u32 %v2940, 16
        %v3009 = vrot.slane %v3007, 4
        %v3010 = vshll.u32 %v2940, 16
        %v3012 = vrot.slane %v3010, 5
        %v3013 = vor.u32 %v3009, %v3012
        %v3014 = vrot.slane %v3013, 4
        %v3016 = vshll.u32 %v2941, 16
        %v3018 = vrot.slane %v3016, 5
        %v3019 = vsel %vm852, %v3014, %v3018
        %v3020 = vshrl.u32 %v2941, 16
        %v3022 = vrot.slane %v3020, 4
        %v3023 = vor.u32 %v3022, %v3018
        %v3024 = vrot.slane %v3023, 4
        %v3026 = vshll.u32 %v2942, 16
        %v3028 = vrot.slane %v3026, 5
        %v3029 = vsel %vm852, %v3024, %v3028
        %v3031 = vshrl.u32 %v2943, 16
        %v3033 = vrot.slane %v3031, 4
        %v3034 = vshll.u32 %v2943, 16
        %v3036 = vrot.slane %v3034, 5
        %v3037 = vor.u32 %v3033, %v3036
        %v3038 = vrot.slane %v3037, 4
        %v3040 = vshll.u32 %v2944, 16
        %v3042 = vrot.slane %v3040, 5
        %v3043 = vsel %vm852, %v3038, %v3042
        %v3044 = vshrl.u32 %v2944, 16
        %v3046 = vrot.slane %v3044, 4
        %v3047 = vor.u32 %v3046, %v3042
        %v3048 = vrot.slane %v3047, 4
        %v3050 = vshll.u32 %v2945, 16
        %v3052 = vrot.slane %v3050, 5
        %v3053 = vsel %vm852, %v3048, %v3052
        %v3055 = vshrl.u32 %v2946, 16
        %v3057 = vrot.slane %v3055, 4
        %v3058 = vshll.u32 %v2946, 16
        %v3060 = vrot.slane %v3058, 5
        %v3061 = vor.u32 %v3057, %v3060
        %v3062 = vrot.slane %v3061, 4
        %v3064 = vshll.u32 %v2947, 16
        %v3066 = vrot.slane %v3064, 5
        %v3067 = vsel %vm852, %v3062, %v3066
        %v3068 = vshrl.u32 %v2947, 16
        %v3070 = vrot.slane %v3068, 4
        %v3071 = vor.u32 %v3070, %v3066
        %v3072 = vrot.slane %v3071, 4
        %v3074 = vshll.u32 %v2948, 16
        %v3076 = vrot.slane %v3074, 5
        %v3077 = vsel %vm852, %v3072, %v3076
        %v3079 = vshrl.u32 %v2949, 16
        %v3081 = vrot.slane %v3079, 4
        %v3082 = vshll.u32 %v2949, 16
        %v3084 = vrot.slane %v3082, 5
        %v3085 = vor.u32 %v3081, %v3084
        %v3086 = vrot.slane %v3085, 4
        %v3088 = vshll.u32 %v2950, 16
        %v3090 = vrot.slane %v3088, 5
        %v3091 = vsel %vm852, %v3086, %v3090
        %v3092 = vshrl.u32 %v2950, 16
        %v3094 = vrot.slane %v3092, 4
        %v3095 = vor.u32 %v3094, %v3090
        %v3096 = vrot.slane %v3095, 4
        %v3098 = vshll.u32 %v2951, 16
        %v3100 = vrot.slane %v3098, 5
        %v3101 = vsel %vm852, %v3096, %v3100
        %v3103 = vshrl.u32 %v2952, 16
        %v3105 = vrot.slane %v3103, 4
        %v3106 = vshll.u32 %v2952, 16
        %v3108 = vrot.slane %v3106, 5
        %v3109 = vor.u32 %v3105, %v3108
        %v3110 = vrot.slane %v3109, 4
        %v3112 = vshll.u32 %v2953, 16
        %v3114 = vrot.slane %v3112, 5
        %v3115 = vsel %vm852, %v3110, %v3114
        %v3116 = vshrl.u32 %v2953, 16
        %v3118 = vrot.slane %v3116, 4
        %v3119 = vor.u32 %v3118, %v3114
        %v3120 = vrot.slane %v3119, 4
        %v3122 = vshll.u32 %v2954, 16
        %v3124 = vrot.slane %v3122, 5
        %v3125 = vsel %vm852, %v3120, %v3124
        %v3127 = vshrl.u32 %v2955, 16
        %v3129 = vrot.slane %v3127, 4
        %v3130 = vshll.u32 %v2955, 16
        %v3132 = vrot.slane %v3130, 5
        %v3133 = vor.u32 %v3129, %v3132
        %v3134 = vrot.slane %v3133, 4
        %v3136 = vshll.u32 %v2956, 16
        %v3138 = vrot.slane %v3136, 5
        %v3139 = vsel %vm852, %v3134, %v3138
        %v3140 = vshrl.u32 %v2956, 16
        %v3142 = vrot.slane %v3140, 4
        %v3143 = vor.u32 %v3142, %v3138
        %v3144 = vrot.slane %v3143, 4
        %v3146 = vshll.u32 %v2957, 16
        %v3148 = vrot.slane %v3146, 5
        %v3149 = vsel %vm852, %v3144, %v3148
        %s3150 = scalar_lea.vmem [#allocation9], 448
        %v3151 = vld [vmem:[%s3150] sm:$0xf]
        %v3152 = vld [vmem:[%s3150 + $0x4] sm:$0xf]
        %v3153 = vld [vmem:[%s3150 + $0x8] sm:$0xf]
        %v3154 = vld [vmem:[%s3150 + $0xc] sm:$0xf]
        %v3155 = vld [vmem:[%s3150 + $0x10] sm:$0xf]
        %v3156 = vld [vmem:[%s3150 + $0x14] sm:$0xf]
        %v3157 = vld [vmem:[%s3150 + $0x18] sm:$0xf]
        %v3158 = vld [vmem:[%s3150 + $0x1c] sm:$0xf]
        %v3159 = vld [vmem:[%s3150 + $0x20] sm:$0xf]
        %v3160 = vld [vmem:[%s3150 + $0x24] sm:$0xf]
        %v3161 = vld [vmem:[%s3150 + $0x28] sm:$0xf]
        %v3162 = vld [vmem:[%s3150 + $0x2c] sm:$0xf]
        %v3163 = vld [vmem:[%s3150 + $0x30] sm:$0xf]
        %v3164 = vld [vmem:[%s3150 + $0x34] sm:$0xf]
        %v3165 = vld [vmem:[%s3150 + $0x38] sm:$0xf]
        %v3166 = vld [vmem:[%s3150 + $0x3c] sm:$0xf]
        %v3167 = vunpack.c.l.b16 %v2971
        %v3168 = vunpack.c.l.b16 %v2981
        %v3169 = vunpack.c.l.b16 %v2995
        %v3170 = vunpack.c.l.b16 %v3005
        %v3171 = vunpack.c.l.b16 %v3019
        %v3172 = vunpack.c.l.b16 %v3029
        %v3173 = vunpack.c.l.b16 %v3043
        %v3174 = vunpack.c.l.b16 %v3053
        %v3175 = vunpack.c.l.b16 %v3067
        %v3176 = vunpack.c.l.b16 %v3077
        %v3177 = vunpack.c.l.b16 %v3091
        %v3178 = vunpack.c.l.b16 %v3101
        %v3179 = vunpack.c.l.b16 %v3115
        %v3180 = vunpack.c.l.b16 %v3125
        %v3181 = vunpack.c.l.b16 %v3139
        %v3182 = vunpack.c.l.b16 %v3149
        %v3183 = vpack.c.b16 %v3168, %v3167
        %v3184 = vpack.c.b16 %v3170, %v3169
        %v3185 = vpack.c.b16 %v3172, %v3171
        %v3186 = vpack.c.b16 %v3174, %v3173
        %v3187 = vpack.c.b16 %v3176, %v3175
        %v3188 = vpack.c.b16 %v3178, %v3177
        %v3189 = vpack.c.b16 %v3180, %v3179
        %v3190 = vpack.c.b16 %v3182, %v3181
        %v3215 = vunpack.c.l.b16 %v3151
        %v3216 = vunpack.c.l.b16 %v3152
        %v3217 = vunpack.c.l.b16 %v3153
        %v3218 = vunpack.c.l.b16 %v3154
        %v3219 = vunpack.c.l.b16 %v3155
        %v3220 = vunpack.c.l.b16 %v3156
        %v3221 = vunpack.c.l.b16 %v3157
        %v3222 = vunpack.c.l.b16 %v3158
        %v3223 = vunpack.c.l.b16 %v3159
        %v3224 = vunpack.c.l.b16 %v3160
        %v3225 = vunpack.c.l.b16 %v3161
        %v3226 = vunpack.c.l.b16 %v3162
        %v3227 = vunpack.c.l.b16 %v3163
        %v3228 = vunpack.c.l.b16 %v3164
        %v3229 = vunpack.c.l.b16 %v3165
        %v3230 = vunpack.c.l.b16 %v3166
        %v3231 = vpack.c.b16 %v3216, %v3215
        %v3232 = vpack.c.b16 %v3218, %v3217
        %v3233 = vpack.c.b16 %v3220, %v3219
        %v3234 = vpack.c.b16 %v3222, %v3221
        %v3235 = vpack.c.b16 %v3224, %v3223
        %v3236 = vpack.c.b16 %v3226, %v3225
        %v3237 = vpack.c.b16 %v3228, %v3227
        %v3238 = vpack.c.b16 %v3230, %v3229
        %3247 = vmatprep.subr.bf16.mxu0 0
        %3248 = vmatpush1.bf16.msra.mxu0 %v3231
        %3249 = vmatprep.subr.bf16.mxu0 0
        %3250 = vmatpush1.bf16.msra.mxu0 %v3232
        %3251 = vmatprep.subr.bf16.mxu0 0
        %3252 = vmatpush1.bf16.msra.mxu0 %v3233
        %3253 = vmatprep.subr.bf16.mxu0 0
        %3254 = vmatpush1.bf16.msra.mxu0 %v3234
        %3255 = vmatprep.subr.bf16.mxu0 0
        %3256 = vmatpush1.bf16.msra.mxu0 %v3235
        %3257 = vmatprep.subr.bf16.mxu0 0
        %3258 = vmatpush1.bf16.msra.mxu0 %v3236
        %3259 = vmatprep.subr.bf16.mxu0 0
        %3260 = vmatpush1.bf16.msra.mxu0 %v3237
        %3261 = vmatprep.subr.bf16.mxu0 0
        %3262 = vmatpush1.bf16.msra.mxu0 %v3238
        %3263 = vmatprep.subr.bf16.mxu0 0
        %3264 = vmatpush1.bf16.msra.mxu0 0
        %3265 = vmatprep.subr.bf16.mxu0 0
        %3266 = vmatpush1.bf16.msra.mxu0 0
        %3267 = vmatprep.subr.bf16.mxu0 0
        %3268 = vmatpush1.bf16.msra.mxu0 0
        %3269 = vmatprep.subr.bf16.mxu0 0
        %3270 = vmatpush1.bf16.msra.mxu0 0
        %3271 = vmatprep.subr.bf16.mxu0 0
        %3272 = vmatpush1.bf16.msra.mxu0 0
        %3273 = vmatprep.subr.bf16.mxu0 0
        %3274 = vmatpush1.bf16.msra.mxu0 0
        %3275 = vmatprep.subr.bf16.mxu0 0
        %3276 = vmatpush1.bf16.msra.mxu0 0
        %3277 = vmatprep.subr.bf16.mxu0 0
        %3278 = vmatpush1.bf16.msra.mxu0 0
        %3279 = vmatprep.mubr.bf16.mxu0 0
        %3280 = vmatmul.mubr.bf16.gmra.mrb[0].mxu0 %v3183
        %v3281 = vpop.f32.mrb[0].mxu0
        %v3282 = vadd.f32 0.0, %v3281
        %v3283 = vpop.f32.mrb[0].mxu0
        %v3284 = vpop.f32.mrb[0].mxu0
        %v3285 = vadd.f32 0.0, %v3284
        %v3286 = vpop.f32.mrb[0].mxu0
        %3287 = vmatprep.mubr.bf16.mxu0 0
        %3288 = vmatmul.mubr.bf16.gmra.mrb[0].mxu0 %v3184
        %v3289 = vpop.f32.mrb[0].mxu0
        %v3290 = vadd.f32 0.0, %v3289
        %v3291 = vpop.f32.mrb[0].mxu0
        %v3292 = vpop.f32.mrb[0].mxu0
        %v3293 = vadd.f32 0.0, %v3292
        %v3294 = vpop.f32.mrb[0].mxu0
        %3295 = vmatprep.mubr.bf16.mxu0 0
        %3296 = vmatmul.mubr.bf16.gmra.mrb[0].mxu0 %v3185
        %v3297 = vpop.f32.mrb[0].mxu0
        %v3298 = vadd.f32 0.0, %v3297
        %v3299 = vpop.f32.mrb[0].mxu0
        %v3300 = vpop.f32.mrb[0].mxu0
        %v3301 = vadd.f32 0.0, %v3300
        %v3302 = vpop.f32.mrb[0].mxu0
        %3303 = vmatprep.mubr.bf16.mxu0 0
        %3304 = vmatmul.mubr.bf16.gmra.mrb[0].mxu0 %v3186
        %v3305 = vpop.f32.mrb[0].mxu0
        %v3306 = vadd.f32 0.0, %v3305
        %v3307 = vpop.f32.mrb[0].mxu0
        %v3308 = vpop.f32.mrb[0].mxu0
        %v3309 = vadd.f32 0.0, %v3308
        %v3310 = vpop.f32.mrb[0].mxu0
        %3311 = vmatprep.mubr.bf16.mxu0 0
        %3312 = vmatmul.mubr.bf16.gmra.mrb[0].mxu0 %v3187
        %v3313 = vpop.f32.mrb[0].mxu0
        %v3314 = vadd.f32 0.0, %v3313
        %v3315 = vpop.f32.mrb[0].mxu0
        %v3316 = vpop.f32.mrb[0].mxu0
        %v3317 = vadd.f32 0.0, %v3316
        %v3318 = vpop.f32.mrb[0].mxu0
        %3319 = vmatprep.mubr.bf16.mxu0 0
        %3320 = vmatmul.mubr.bf16.gmra.mrb[0].mxu0 %v3188
        %v3321 = vpop.f32.mrb[0].mxu0
        %v3322 = vadd.f32 0.0, %v3321
        %v3323 = vpop.f32.mrb[0].mxu0
        %v3324 = vpop.f32.mrb[0].mxu0
        %v3325 = vadd.f32 0.0, %v3324
        %v3326 = vpop.f32.mrb[0].mxu0
        %3327 = vmatprep.mubr.bf16.mxu0 0
        %3328 = vmatmul.mubr.bf16.gmra.mrb[0].mxu0 %v3189
        %v3329 = vpop.f32.mrb[0].mxu0
        %v3330 = vadd.f32 0.0, %v3329
        %v3331 = vpop.f32.mrb[0].mxu0
        %v3332 = vpop.f32.mrb[0].mxu0
        %v3333 = vadd.f32 0.0, %v3332
        %v3334 = vpop.f32.mrb[0].mxu0
        %3335 = vmatprep.mubr.bf16.mxu0 0
        %3336 = vmatmul.mubr.bf16.gmra.mrb[0].mxu0 %v3190
        %v3337 = vpop.f32.mrb[0].mxu0
        %v3338 = vadd.f32 0.0, %v3337
        %v3339 = vpop.f32.mrb[0].mxu0
        %v3340 = vpop.f32.mrb[0].mxu0
        %v3341 = vadd.f32 0.0, %v3340
        %v3342 = vpop.f32.mrb[0].mxu0
        %3343 = vdwg.mxu0
        %v3344 = vadd.f32 %v2918, %v3282
        %v3345 = vadd.f32 %v2919, %v3285
        %v3346 = vadd.f32 %v2920, %v3290
        %v3347 = vadd.f32 %v2921, %v3293
        %v3348 = vadd.f32 %v2922, %v3298
        %v3349 = vadd.f32 %v2923, %v3301
        %v3350 = vadd.f32 %v2924, %v3306
        %v3351 = vadd.f32 %v2925, %v3309
        %v3352 = vadd.f32 %v2926, %v3314
        %v3353 = vadd.f32 %v2927, %v3317
        %v3354 = vadd.f32 %v2928, %v3322
        %v3355 = vadd.f32 %v2929, %v3325
        %v3356 = vadd.f32 %v2930, %v3330
        %v3357 = vadd.f32 %v2931, %v3333
        %v3358 = vadd.f32 %v2932, %v3338
        %v3359 = vadd.f32 %v2933, %v3341
        %v3360 = vld [vmem:[%s2691] sm:$0xe]
        %v3361 = vld [vmem:[%s2691 + $0xc] sm:$0xe]
        %v3362 = vld [vmem:[%s2691 + $0x18] sm:$0xe]
        %v3363 = vld [vmem:[%s2691 + $0x24] sm:$0xe]
        %v3364 = vld [vmem:[%s2691 + $0x30] sm:$0xe]
        %v3365 = vld [vmem:[%s2691 + $0x3c] sm:$0xe]
        %v3366 = vld [vmem:[%s2691 + $0x48] sm:$0xe]
        %v3367 = vld [vmem:[%s2691 + $0x54] sm:$0xe]
        %v3392 = vrot.slane %v3360, 5
        %v3393 = vrot.slane %v3392, 4
        %v3394 = vrot.slane %v2935, 5
        %v3395 = vsel %vm1458, %v3393, %v3394
        %v3396 = vrot.slane %v3394, 4
        %v3397 = vrot.slane %v2936, 5
        %v3398 = vsel %vm1458, %v3396, %v3397
        %v3399 = vrot.slane %v3361, 5
        %v3400 = vrot.slane %v3399, 4
        %v3401 = vrot.slane %v2938, 5
        %v3402 = vsel %vm1458, %v3400, %v3401
        %v3403 = vrot.slane %v3401, 4
        %v3404 = vrot.slane %v2939, 5
        %v3405 = vsel %vm1458, %v3403, %v3404
        %v3406 = vrot.slane %v3362, 5
        %v3407 = vrot.slane %v3406, 4
        %v3408 = vrot.slane %v2941, 5
        %v3409 = vsel %vm1458, %v3407, %v3408
        %v3410 = vrot.slane %v3408, 4
        %v3411 = vrot.slane %v2942, 5
        %v3412 = vsel %vm1458, %v3410, %v3411
        %v3413 = vrot.slane %v3363, 5
        %v3414 = vrot.slane %v3413, 4
        %v3415 = vrot.slane %v2944, 5
        %v3416 = vsel %vm1458, %v3414, %v3415
        %v3417 = vrot.slane %v3415, 4
        %v3418 = vrot.slane %v2945, 5
        %v3419 = vsel %vm1458, %v3417, %v3418
        %v3420 = vrot.slane %v3364, 5
        %v3421 = vrot.slane %v3420, 4
        %v3422 = vrot.slane %v2947, 5
        %v3423 = vsel %vm1458, %v3421, %v3422
        %v3424 = vrot.slane %v3422, 4
        %v3425 = vrot.slane %v2948, 5
        %v3426 = vsel %vm1458, %v3424, %v3425
        %v3427 = vrot.slane %v3365, 5
        %v3428 = vrot.slane %v3427, 4
        %v3429 = vrot.slane %v2950, 5
        %v3430 = vsel %vm1458, %v3428, %v3429
        %v3431 = vrot.slane %v3429, 4
        %v3432 = vrot.slane %v2951, 5
        %v3433 = vsel %vm1458, %v3431, %v3432
        %v3434 = vrot.slane %v3366, 5
        %v3435 = vrot.slane %v3434, 4
        %v3436 = vrot.slane %v2953, 5
        %v3437 = vsel %vm1458, %v3435, %v3436
        %v3438 = vrot.slane %v3436, 4
        %v3439 = vrot.slane %v2954, 5
        %v3440 = vsel %vm1458, %v3438, %v3439
        %v3441 = vrot.slane %v3367, 5
        %v3442 = vrot.slane %v3441, 4
        %v3443 = vrot.slane %v2956, 5
        %v3444 = vsel %vm1458, %v3442, %v3443
        %v3445 = vrot.slane %v3443, 4
        %v3446 = vrot.slane %v2957, 5
        %v3447 = vsel %vm1458, %v3445, %v3446
        %s3448 = scalar_lea.vmem [#allocation9], 512
        %v3449 = vld [vmem:[%s3448] sm:$0xf]
        %v3450 = vld [vmem:[%s3448 + $0x4] sm:$0xf]
        %v3451 = vld [vmem:[%s3448 + $0x8] sm:$0xf]
        %v3452 = vld [vmem:[%s3448 + $0xc] sm:$0xf]
        %v3453 = vld [vmem:[%s3448 + $0x10] sm:$0xf]
        %v3454 = vld [vmem:[%s3448 + $0x14] sm:$0xf]
        %v3455 = vld [vmem:[%s3448 + $0x18] sm:$0xf]
        %v3456 = vld [vmem:[%s3448 + $0x1c] sm:$0xf]
        %v3457 = vld [vmem:[%s3448 + $0x20] sm:$0xf]
        %v3458 = vld [vmem:[%s3448 + $0x24] sm:$0xf]
        %v3459 = vld [vmem:[%s3448 + $0x28] sm:$0xf]
        %v3460 = vld [vmem:[%s3448 + $0x2c] sm:$0xf]
        %v3461 = vld [vmem:[%s3448 + $0x30] sm:$0xf]
        %v3462 = vld [vmem:[%s3448 + $0x34] sm:$0xf]
        %v3463 = vld [vmem:[%s3448 + $0x38] sm:$0xf]
        %v3464 = vld [vmem:[%s3448 + $0x3c] sm:$0xf]
        %v3465 = vunpack.c.l.b16 %v3395
        %v3466 = vunpack.c.l.b16 %v3398
        %v3467 = vunpack.c.l.b16 %v3402
        %v3468 = vunpack.c.l.b16 %v3405
        %v3469 = vunpack.c.l.b16 %v3409
        %v3470 = vunpack.c.l.b16 %v3412
        %v3471 = vunpack.c.l.b16 %v3416
        %v3472 = vunpack.c.l.b16 %v3419
        %v3473 = vunpack.c.l.b16 %v3423
        %v3474 = vunpack.c.l.b16 %v3426
        %v3475 = vunpack.c.l.b16 %v3430
        %v3476 = vunpack.c.l.b16 %v3433
        %v3477 = vunpack.c.l.b16 %v3437
        %v3478 = vunpack.c.l.b16 %v3440
        %v3479 = vunpack.c.l.b16 %v3444
        %v3480 = vunpack.c.l.b16 %v3447
        %v3481 = vpack.c.b16 %v3466, %v3465
        %v3482 = vpack.c.b16 %v3468, %v3467
        %v3483 = vpack.c.b16 %v3470, %v3469
        %v3484 = vpack.c.b16 %v3472, %v3471
        %v3485 = vpack.c.b16 %v3474, %v3473
        %v3486 = vpack.c.b16 %v3476, %v3475
        %v3487 = vpack.c.b16 %v3478, %v3477
        %v3488 = vpack.c.b16 %v3480, %v3479
        %v3513 = vunpack.c.l.b16 %v3449
        %v3514 = vunpack.c.l.b16 %v3450
        %v3515 = vunpack.c.l.b16 %v3451
        %v3516 = vunpack.c.l.b16 %v3452
        %v3517 = vunpack.c.l.b16 %v3453
        %v3518 = vunpack.c.l.b16 %v3454
        %v3519 = vunpack.c.l.b16 %v3455
        %v3520 = vunpack.c.l.b16 %v3456
        %v3521 = vunpack.c.l.b16 %v3457
        %v3522 = vunpack.c.l.b16 %v3458
        %v3523 = vunpack.c.l.b16 %v3459
        %v3524 = vunpack.c.l.b16 %v3460
        %v3525 = vunpack.c.l.b16 %v3461
        %v3526 = vunpack.c.l.b16 %v3462
        %v3527 = vunpack.c.l.b16 %v3463
        %v3528 = vunpack.c.l.b16 %v3464
        %v3529 = vpack.c.b16 %v3514, %v3513
        %v3530 = vpack.c.b16 %v3516, %v3515
        %v3531 = vpack.c.b16 %v3518, %v3517
        %v3532 = vpack.c.b16 %v3520, %v3519
        %v3533 = vpack.c.b16 %v3522, %v3521
        %v3534 = vpack.c.b16 %v3524, %v3523
        %v3535 = vpack.c.b16 %v3526, %v3525
        %v3536 = vpack.c.b16 %v3528, %v3527
        %3545 = vmatprep.subr.bf16.mxu0 0
        %3546 = vmatpush1.bf16.msra.mxu0 %v3529
        %3547 = vmatprep.subr.bf16.mxu0 0
        %3548 = vmatpush1.bf16.msra.mxu0 %v3530
        %3549 = vmatprep.subr.bf16.mxu0 0
        %3550 = vmatpush1.bf16.msra.mxu0 %v3531
        %3551 = vmatprep.subr.bf16.mxu0 0
        %3552 = vmatpush1.bf16.msra.mxu0 %v3532
        %3553 = vmatprep.subr.bf16.mxu0 0
        %3554 = vmatpush1.bf16.msra.mxu0 %v3533
        %3555 = vmatprep.subr.bf16.mxu0 0
        %3556 = vmatpush1.bf16.msra.mxu0 %v3534
        %3557 = vmatprep.subr.bf16.mxu0 0
        %3558 = vmatpush1.bf16.msra.mxu0 %v3535
        %3559 = vmatprep.subr.bf16.mxu0 0
        %3560 = vmatpush1.bf16.msra.mxu0 %v3536
        %3561 = vmatprep.subr.bf16.mxu0 0
        %3562 = vmatpush1.bf16.msra.mxu0 0
        %3563 = vmatprep.subr.bf16.mxu0 0
        %3564 = vmatpush1.bf16.msra.mxu0 0
        %3565 = vmatprep.subr.bf16.mxu0 0
        %3566 = vmatpush1.bf16.msra.mxu0 0
        %3567 = vmatprep.subr.bf16.mxu0 0
        %3568 = vmatpush1.bf16.msra.mxu0 0
        %3569 = vmatprep.subr.bf16.mxu0 0
        %3570 = vmatpush1.bf16.msra.mxu0 0
        %3571 = vmatprep.subr.bf16.mxu0 0
        %3572 = vmatpush1.bf16.msra.mxu0 0
        %3573 = vmatprep.subr.bf16.mxu0 0
        %3574 = vmatpush1.bf16.msra.mxu0 0
        %3575 = vmatprep.subr.bf16.mxu0 0
        %3576 = vmatpush1.bf16.msra.mxu0 0
        %3577 = vmatprep.mubr.bf16.mxu0 0
        %3578 = vmatmul.mubr.bf16.gmra.mrb[0].mxu0 %v3481
        %v3579 = vpop.f32.mrb[0].mxu0
        %v3580 = vadd.f32 0.0, %v3579
        %v3581 = vpop.f32.mrb[0].mxu0
        %v3582 = vpop.f32.mrb[0].mxu0
        %v3583 = vadd.f32 0.0, %v3582
        %v3584 = vpop.f32.mrb[0].mxu0
        %3585 = vmatprep.mubr.bf16.mxu0 0
        %3586 = vmatmul.mubr.bf16.gmra.mrb[0].mxu0 %v3482
        %v3587 = vpop.f32.mrb[0].mxu0
        %v3588 = vadd.f32 0.0, %v3587
        %v3589 = vpop.f32.mrb[0].mxu0
        %v3590 = vpop.f32.mrb[0].mxu0
        %v3591 = vadd.f32 0.0, %v3590
        %v3592 = vpop.f32.mrb[0].mxu0
        %3593 = vmatprep.mubr.bf16.mxu0 0
        %3594 = vmatmul.mubr.bf16.gmra.mrb[0].mxu0 %v3483
        %v3595 = vpop.f32.mrb[0].mxu0
        %v3596 = vadd.f32 0.0, %v3595
        %v3597 = vpop.f32.mrb[0].mxu0
        %v3598 = vpop.f32.mrb[0].mxu0
        %v3599 = vadd.f32 0.0, %v3598
        %v3600 = vpop.f32.mrb[0].mxu0
        %3601 = vmatprep.mubr.bf16.mxu0 0
        %3602 = vmatmul.mubr.bf16.gmra.mrb[0].mxu0 %v3484
        %v3603 = vpop.f32.mrb[0].mxu0
        %v3604 = vadd.f32 0.0, %v3603
        %v3605 = vpop.f32.mrb[0].mxu0
        %v3606 = vpop.f32.mrb[0].mxu0
        %v3607 = vadd.f32 0.0, %v3606
        %v3608 = vpop.f32.mrb[0].mxu0
        %3609 = vmatprep.mubr.bf16.mxu0 0
        %3610 = vmatmul.mubr.bf16.gmra.mrb[0].mxu0 %v3485
        %v3611 = vpop.f32.mrb[0].mxu0
        %v3612 = vadd.f32 0.0, %v3611
        %v3613 = vpop.f32.mrb[0].mxu0
        %v3614 = vpop.f32.mrb[0].mxu0
        %v3615 = vadd.f32 0.0, %v3614
        %v3616 = vpop.f32.mrb[0].mxu0
        %3617 = vmatprep.mubr.bf16.mxu0 0
        %3618 = vmatmul.mubr.bf16.gmra.mrb[0].mxu0 %v3486
        %v3619 = vpop.f32.mrb[0].mxu0
        %v3620 = vadd.f32 0.0, %v3619
        %v3621 = vpop.f32.mrb[0].mxu0
        %v3622 = vpop.f32.mrb[0].mxu0
        %v3623 = vadd.f32 0.0, %v3622
        %v3624 = vpop.f32.mrb[0].mxu0
        %3625 = vmatprep.mubr.bf16.mxu0 0
        %3626 = vmatmul.mubr.bf16.gmra.mrb[0].mxu0 %v3487
        %v3627 = vpop.f32.mrb[0].mxu0
        %v3628 = vadd.f32 0.0, %v3627
        %v3629 = vpop.f32.mrb[0].mxu0
        %v3630 = vpop.f32.mrb[0].mxu0
        %v3631 = vadd.f32 0.0, %v3630
        %v3632 = vpop.f32.mrb[0].mxu0
        %3633 = vmatprep.mubr.bf16.mxu0 0
        %3634 = vmatmul.mubr.bf16.gmra.mrb[0].mxu0 %v3488
        %v3635 = vpop.f32.mrb[0].mxu0
        %v3636 = vadd.f32 0.0, %v3635
        %v3637 = vpop.f32.mrb[0].mxu0
        %v3638 = vpop.f32.mrb[0].mxu0
        %v3639 = vadd.f32 0.0, %v3638
        %v3640 = vpop.f32.mrb[0].mxu0
        %3641 = vdwg.mxu0
        %v3642 = vadd.f32 %v3344, %v3580
        %v3643 = vadd.f32 %v3345, %v3583
        %v3644 = vadd.f32 %v3346, %v3588
        %v3645 = vadd.f32 %v3347, %v3591
        %v3646 = vadd.f32 %v3348, %v3596
        %v3647 = vadd.f32 %v3349, %v3599
        %v3648 = vadd.f32 %v3350, %v3604
        %v3649 = vadd.f32 %v3351, %v3607
        %v3650 = vadd.f32 %v3352, %v3612
        %v3651 = vadd.f32 %v3353, %v3615
        %v3652 = vadd.f32 %v3354, %v3620
        %v3653 = vadd.f32 %v3355, %v3623
        %v3654 = vadd.f32 %v3356, %v3628
        %v3655 = vadd.f32 %v3357, %v3631
        %v3656 = vadd.f32 %v3358, %v3636
        %v3657 = vadd.f32 %v3359, %v3639
        %v3658 = vadd.f32 %v3642, %v3643
        %v3659 = vadd.f32 %v3658, %v3644
        %v3660 = vadd.f32 %v3659, %v3645
        %v3661 = vadd.f32 %v3660, %v3646
        %v3662 = vadd.f32 %v3661, %v3647
        %v3663 = vadd.f32 %v3662, %v3648
        %v3664 = vadd.f32 %v3663, %v3649
        %v3665 = vadd.f32 %v3664, %v3650
        %v3666 = vadd.f32 %v3665, %v3651
        %v3667 = vadd.f32 %v3666, %v3652
        %v3668 = vadd.f32 %v3667, %v3653
        %v3669 = vadd.f32 %v3668, %v3654
        %v3670 = vadd.f32 %v3669, %v3655
        %v3671 = vadd.f32 %v3670, %v3656
        %v3672 = vadd.f32 %v3671, %v3657
        %v3673 = vrot.slane %v3672, 4
        %v3674 = vadd.f32 %v3672, %v3673
        %v3675 = vrot.slane %v3674, 2
        %v3676 = vadd.f32 %v3674, %v3675
        %v3677 = vrot.slane %v3676, 1
        %v3678 = vadd.f32 %v3676, %v3677
        %3679 = vst [vmem:[%s425] sm:$0x1] %v3678
        %v3680 = vmul.f32 %v3642, %v3642
        %v3681 = vmul.f32 %v3643, %v3643
        %v3682 = vmul.f32 %v3644, %v3644
        %v3683 = vmul.f32 %v3645, %v3645
        %v3684 = vmul.f32 %v3646, %v3646
        %v3685 = vmul.f32 %v3647, %v3647
        %v3686 = vmul.f32 %v3648, %v3648
        %v3687 = vmul.f32 %v3649, %v3649
        %v3688 = vmul.f32 %v3650, %v3650
        %v3689 = vmul.f32 %v3651, %v3651
        %v3690 = vmul.f32 %v3652, %v3652
        %v3691 = vmul.f32 %v3653, %v3653
        %v3692 = vmul.f32 %v3654, %v3654
        %v3693 = vmul.f32 %v3655, %v3655
        %v3694 = vmul.f32 %v3656, %v3656
        %v3695 = vmul.f32 %v3657, %v3657
        %v3696 = vadd.f32 %v3680, %v3681
        %v3697 = vadd.f32 %v3696, %v3682
        %v3698 = vadd.f32 %v3697, %v3683
        %v3699 = vadd.f32 %v3698, %v3684
        %v3700 = vadd.f32 %v3699, %v3685
        %v3701 = vadd.f32 %v3700, %v3686
        %v3702 = vadd.f32 %v3701, %v3687
        %v3703 = vadd.f32 %v3702, %v3688
        %v3704 = vadd.f32 %v3703, %v3689
        %v3705 = vadd.f32 %v3704, %v3690
        %v3706 = vadd.f32 %v3705, %v3691
        %v3707 = vadd.f32 %v3706, %v3692
        %v3708 = vadd.f32 %v3707, %v3693
        %v3709 = vadd.f32 %v3708, %v3694
        %v3710 = vadd.f32 %v3709, %v3695
        %v3711 = vrot.slane %v3710, 4
        %v3712 = vadd.f32 %v3710, %v3711
        %v3713 = vrot.slane %v3712, 2
        %v3714 = vadd.f32 %v3712, %v3713
        %v3715 = vrot.slane %v3714, 1
        %v3716 = vadd.f32 %v3714, %v3715
        %3717 = vst [vmem:[%s425 + $0x1] sm:$0x1] %v3716
        %v3718 = vld [vmem:[%s4] sm:$0x1]
        %v3720 = vlaneseq
        %v3721 = vshrl.u32 %v3720, 7
        %v3722 = vsub.s32 0, %v3721
        %v3723 = vrot.slane %v3718, %v3722
        %v3725 = vadd.f32 %v3642, %v3723
        %v3726 = vadd.f32 %v3643, %v3723
        %v3727 = vadd.f32 %v3644, %v3723
        %v3728 = vadd.f32 %v3645, %v3723
        %v3729 = vadd.f32 %v3646, %v3723
        %v3730 = vadd.f32 %v3647, %v3723
        %v3731 = vadd.f32 %v3648, %v3723
        %v3732 = vadd.f32 %v3649, %v3723
        %v3733 = vadd.f32 %v3650, %v3723
        %v3734 = vadd.f32 %v3651, %v3723
        %v3735 = vadd.f32 %v3652, %v3723
        %v3736 = vadd.f32 %v3653, %v3723
        %v3737 = vadd.f32 %v3654, %v3723
        %v3738 = vadd.f32 %v3655, %v3723
        %v3739 = vadd.f32 %v3656, %v3723
        %v3740 = vadd.f32 %v3657, %v3723
        %v3741 = vpack.c.bf16 %v3726, %v3725
        %v3742 = vpack.c.bf16 %v3728, %v3727
        %v3743 = vpack.c.bf16 %v3730, %v3729
        %v3744 = vpack.c.bf16 %v3732, %v3731
        %v3745 = vpack.c.bf16 %v3734, %v3733
        %v3746 = vpack.c.bf16 %v3736, %v3735
        %v3747 = vpack.c.bf16 %v3738, %v3737
        %v3748 = vpack.c.bf16 %v3740, %v3739
        %v3757 = vunpack.c.l.b16 %v3741
        %v3758 = vunpack.c.h.b16 %v3741
        %v3759 = vunpack.c.l.b16 %v3742
        %v3760 = vunpack.c.h.b16 %v3742
        %v3761 = vunpack.c.l.b16 %v3743
        %v3762 = vunpack.c.h.b16 %v3743
        %v3763 = vunpack.c.l.b16 %v3744
        %v3764 = vunpack.c.h.b16 %v3744
        %v3765 = vunpack.c.l.b16 %v3745
        %v3766 = vunpack.c.h.b16 %v3745
        %v3767 = vunpack.c.l.b16 %v3746
        %v3768 = vunpack.c.h.b16 %v3746
        %v3769 = vunpack.c.l.b16 %v3747
        %v3770 = vunpack.c.h.b16 %v3747
        %v3771 = vunpack.c.l.b16 %v3748
        %v3772 = vunpack.c.h.b16 %v3748
        %v3773 = vpack.c.b16 %v3757, %v3757
        %v3774 = vpack.c.b16 %v3758, %v3758
        %v3775 = vpack.c.b16 %v3759, %v3759
        %v3776 = vpack.c.b16 %v3760, %v3760
        %v3777 = vpack.c.b16 %v3761, %v3761
        %v3778 = vpack.c.b16 %v3762, %v3762
        %v3779 = vpack.c.b16 %v3763, %v3763
        %v3780 = vpack.c.b16 %v3764, %v3764
        %v3781 = vpack.c.b16 %v3765, %v3765
        %v3782 = vpack.c.b16 %v3766, %v3766
        %v3783 = vpack.c.b16 %v3767, %v3767
        %v3784 = vpack.c.b16 %v3768, %v3768
        %v3785 = vpack.c.b16 %v3769, %v3769
        %v3786 = vpack.c.b16 %v3770, %v3770
        %v3787 = vpack.c.b16 %v3771, %v3771
        %v3788 = vpack.c.b16 %v3772, %v3772
        %3805 = vst [vmem:[%s418] sm:$0xf] %v3773
        %3806 = vst [vmem:[%s418 + $0x4] sm:$0xf] %v3774
        %3807 = vst [vmem:[%s418 + $0x8] sm:$0xf] %v3775
        %3808 = vst [vmem:[%s418 + $0xc] sm:$0xf] %v3776
        %3809 = vst [vmem:[%s418 + $0x10] sm:$0xf] %v3777
        %3810 = vst [vmem:[%s418 + $0x14] sm:$0xf] %v3778
        %3811 = vst [vmem:[%s418 + $0x18] sm:$0xf] %v3779
        %3812 = vst [vmem:[%s418 + $0x1c] sm:$0xf] %v3780
        %3813 = vst [vmem:[%s418 + $0x20] sm:$0xf] %v3781
        %3814 = vst [vmem:[%s418 + $0x24] sm:$0xf] %v3782
        %3815 = vst [vmem:[%s418 + $0x28] sm:$0xf] %v3783
        %3816 = vst [vmem:[%s418 + $0x2c] sm:$0xf] %v3784
        %3817 = vst [vmem:[%s418 + $0x30] sm:$0xf] %v3785
        %3818 = vst [vmem:[%s418 + $0x34] sm:$0xf] %v3786
        %3819 = vst [vmem:[%s418 + $0x38] sm:$0xf] %v3787
        %3820 = vst [vmem:[%s418 + $0x3c] sm:$0xf] %v3788
        %s3821 = sand.u32 %s195, 1
        %s3822 = scalar_lea.sflag [#allocation5], %s3821
        %s3823 = sand.u32 %s195, 1
        %s3824 = smul.addr %s3823, 64
        %s3825 = scalar_lea.vmem [#allocation11], %s3824
        %s3826 = sand.u32 %s223, 1
        %s3827 = scalar_lea.sflag [#allocation13], %s3826
        %s3828 = sand.u32 %s223, 1
        %s3829 = smul.addr %s3828, 2
        %s3830 = scalar_lea.vmem [#allocation12], %s3829
        // Predicated region
        $region57: #{tpu_custom_call.1} parent=39 // pred_check
          %p3831 = pneg %p205
        $region58: #{tpu_custom_call.1} parent=39 // pred_check_branch
          %3833 = sbr.rel (%p3831) target = $region60
        $region59: #{tpu_custom_call.1} parent=39 // pred_region
          %s3834 = smul.u32 8, %s36
          %s3836 = ssub.s32 1024, 1024
          %3837 = vsyncadd %s3822, %s3836
          %s3838 = smul.addr %s3834, 2
          %s3839 = smul.addr %s35, 32
          %s3840 = sadd.s32 %s3838, %s3839
          %s3841 = smul.addr %s3840, 64
          %s3842 = scalar_lea.hbm %s5, %s3841
          %s3843 = sshll.u32 %s3825, 4
          %s3844 = int_to_ptr.vmem [resolvable:$true] %s3843
          %3849 = dma.vmem_to_hbm [thread:$0]  %s3844, 1024, %s3842, %s3822, 64, 64, 4
        $region60: #{tpu_custom_call.1} parent=39 // pred_fallthru
          _
        // Predicated region
        $region61: #{tpu_custom_call.1} parent=39 // pred_check
          %p3850 = pneg %p233
        $region62: #{tpu_custom_call.1} parent=39 // pred_check_branch
          %3852 = sbr.rel (%p3850) target = $region64
        $region63: #{tpu_custom_call.1} parent=39 // pred_region
          %s3854 = ssub.s32 32, 32
          %3855 = vsyncadd %s3827, %s3854
          %s3856 = smul.addr %s35, 2
          %s3857 = sadd.s32 %s36, %s3856
          %s3858 = smul.addr %s3857, 32
          %s3859 = scalar_lea.hbm %s6, %s3858
          %s3861 = sshll.u32 %s3830, 4
          %s3862 = int_to_ptr.vmem [resolvable:$true] %s3861
          %3864 = dma.vmem_to_hbm [thread:$0]  %s3862, 32, %s3859, %s3827
        $region64: #{tpu_custom_call.1} parent=39 // pred_fallthru
          _
      $region40: #{tpu_custom_call.1} parent=5 // pred_fallthru
        _
      %p3865 = scmp.le.s32.totalorder 2, %s26
      // Predicated region
      $region65: #{tpu_custom_call.1} parent=5 // pred_check
        %p3866 = pneg %p3865
      $region66: #{tpu_custom_call.1} parent=5 // pred_check_branch
        %3868 = sbr.rel (%p3866) target = $region68
      $region67: #{tpu_custom_call.1} parent=5 // pred_region
        %s3869 = ssub.s32 %s26, 2
        // Predicated region
        $region69: #{tpu_custom_call.1} parent=67 // pred_check
          %p3870 = pneg %p211
        $region70: #{tpu_custom_call.1} parent=67 // pred_check_branch
          %3872 = sbr.rel (%p3870) target = $region72
        $region71: #{tpu_custom_call.1} parent=67 // pred_region
          %s3873 = sand.u32 %s196, 1
          %s3874 = scalar_lea.sflag [#allocation5], %s3873
          %s3875 = sand.u32 %s196, 1
          %s3876 = smul.addr %s3875, 64
          %s3877 = scalar_lea.vmem [#allocation11], %s3876
          %3878 = dma.done %s3874, 1024
        $region72: #{tpu_custom_call.1} parent=67 // pred_fallthru
          _
        // Predicated region
        $region73: #{tpu_custom_call.1} parent=67 // pred_check
          %p3879 = pneg %p239
        $region74: #{tpu_custom_call.1} parent=67 // pred_check_branch
          %3881 = sbr.rel (%p3879) target = $region76
        $region75: #{tpu_custom_call.1} parent=67 // pred_region
          %s3882 = sand.u32 %s224, 1
          %s3883 = scalar_lea.sflag [#allocation13], %s3882
          %s3884 = sand.u32 %s224, 1
          %s3885 = smul.addr %s3884, 2
          %s3886 = scalar_lea.vmem [#allocation12], %s3885
          %3887 = dma.done %s3883, 32
        $region76: #{tpu_custom_call.1} parent=67 // pred_fallthru
          _
      $region68: #{tpu_custom_call.1} parent=5 // pred_fallthru
        _
    $region6: #{tpu_custom_call.1} parent=1 // loop_footer
      %s30 = sadd.s32 1, %s26
    $region7: #{tpu_custom_call.1} parent=1 // loop_footer_branch
      %25 = sbr.rel target = $region3
    $region8: #{tpu_custom_call.1} parent=1 // loop_exit
      _
    %3888 = vsyncpa [#allocation4], 1
    %s3889 = scalar_lea.sflag [#allocation4], 1
    %3890 = vsyncpa %s3889, 1
    %3891 = vsyncpa [#allocation7], 1
    %s3892 = scalar_lea.sflag [#allocation7], 1
    %3893 = vsyncpa %s3892, 1
    %3894 = vsyncpa [#allocation10], 1
    %3895 = vsyncpa [#allocation5], 1
    %s3896 = scalar_lea.sflag [#allocation5], 1
    %3897 = vsyncpa %s3896, 1
    %3898 = vsyncpa [#allocation13], 1
    %s3899 = scalar_lea.sflag [#allocation13], 1
    %3900 = vsyncpa %s3899, 1

</llo_original>
